<compile_context>
chip_gen: v6e
topology: v6e:2x2x1
jax: 0.10.0
libtpu: 0.0.40
codegen_flags: <defaults>
</compile_context>

<pallas_src>
import functools

import jax
import jax.numpy as jnp
from jax import lax
from jax.experimental import pallas as pl
from jax.experimental.pallas import tpu as pltpu


def _sigmoid(x):
    return 1.0 / (1.0 + jnp.exp(-x))


# --------------------------------------------------------------------------
# Fused JAM kernel.  grid = (N, HW // TQ).
#   qi == 0 prologue (per sample): channel attention -> x_ca scratch, spatial-attention map
#   scratch, fused phi/g projection + MaxPool2d(2) (rolls + one selection matmul) -> phi/g scratch.
#   per tile: theta = W_theta @ x_ca_tile, softmax(theta^T phi) g, folded (W,BN) conv, residual,
#   and sp_x = x_ca_tile * sigmoid(att)_tile.
# --------------------------------------------------------------------------
def _jam_kernel(x_ref, wca_ref, wsa_ref, wth_ref, bth_ref, wpg_ref, bpg_ref,
                sel_ref, wwf_ref, bwf_ref,
                nl_ref, sp_ref,
                xca_scr, satt_scr, phi_scr, g_scr, *, IC, H, W, TQ):
    C = x_ref.shape[1]
    HW = H * W
    qi = pl.program_id(1)

    @pl.when(qi == 0)
    def _():
        x = x_ref[0]                                              # (C, HW) lane-dense

        # ---- ChannelAttention: (mean+max over HW) -> conv1d(k=7, pad=3, no bias) -> sigmoid ----
        s = (jnp.mean(x, axis=1, keepdims=True)
             + jnp.max(x, axis=1, keepdims=True))                 # (C,1); conv(avg)+conv(max)=conv(avg+max)
        zpad3 = jnp.zeros((3, 1), jnp.float32)
        s_pad = jnp.concatenate([zpad3, s, zpad3], axis=0)        # (C+6, 1) zero padding
        pre = jnp.zeros((C, 1), jnp.float32)
        for k in range(7):                                        # 7 shifted adds, no CxC band matrix
            pre = pre + wca_ref[k] * s_pad[k:k + C, :]
        x_ca = x * _sigmoid(pre)                                  # x * ch_x
        xca_scr[...] = x_ca

        # ---- SpatialAttention map: sigmoid(3x3 conv([mean;max], pad=1, no bias)) -> (1, HW) ----
        m2 = jnp.concatenate(
            [jnp.mean(x_ca, axis=0, keepdims=True),
             jnp.max(x_ca, axis=0, keepdims=True)], axis=0)       # (2, HW): one roll serves both maps

        p_f = lax.broadcasted_iota(jnp.int32, (1, HW), 1).astype(jnp.float32)
        row_f = jnp.floor((p_f + 0.5) * (1.0 / float(W)))         # exact integer row index
        col_f = p_f - row_f * float(W)                            # exact integer column index
        row_ok = {dy: (row_f + dy >= 0.0) & (row_f + dy <= H - 1.0) for dy in (-1, 0, 1)}
        col_ok = {dx: (col_f + dx >= 0.0) & (col_f + dx <= W - 1.0) for dx in (-1, 0, 1)}

        att = jnp.zeros((1, HW), jnp.float32)
        for dy in (-1, 0, 1):
            for dx in (-1, 0, 1):
                tap = (dy + 1) * 3 + (dx + 1)
                sft = dy * W + dx
                shifted = m2 if sft == 0 else jnp.roll(m2, -sft, axis=1)  # shifted[:,p] = m2[:,p+sft]
                valid = (row_ok[dy] & col_ok[dx]).astype(jnp.float32)
                contrib = (wsa_ref[tap] * shifted[0:1, :]                 # mean-channel weight
                           + wsa_ref[9 + tap] * shifted[1:2, :])          # max-channel weight
                att = att + valid * contrib
        satt_scr[...] = _sigmoid(att)

        # ---- phi/g 1x1 convs (fused) + MaxPool2d(2): 3 rolls + one 0/1 selection matmul ----
        pg = (jnp.dot(wpg_ref[...], x_ca, preferred_element_type=jnp.float32)
              + bpg_ref[...])                                     # (2IC, HW) = [phi; g]
        pooled_full = jnp.maximum(
            jnp.maximum(pg, jnp.roll(pg, -1, axis=1)),
            jnp.maximum(jnp.roll(pg, -W, axis=1), jnp.roll(pg, -(W + 1), axis=1)))
        pooled = jnp.dot(pooled_full, sel_ref[...],
                         preferred_element_type=jnp.float32)      # (2IC, HW/4) even-row/even-col pick
        phi_scr[...] = pooled[:IC, :]
        g_scr[...] = pooled[IC:, :]

    # ---- per query tile ----
    qoff = pl.multiple_of(qi * TQ, TQ)
    xca_t = xca_scr[:, pl.ds(qoff, TQ)]                           # (C, TQ): theta input + residual

    theta_t = (jnp.dot(wth_ref[...], xca_t, preferred_element_type=jnp.float32)
               + bth_ref[...])                                    # (IC, TQ) recomputed per tile
    f = lax.dot_general(theta_t, phi_scr[...], (((0,), (0,)), ((), ())),
                        preferred_element_type=jnp.float32)       # (TQ, HW/4); no explicit transpose
    f = f - jnp.max(f, axis=-1, keepdims=True)
    pexp = jnp.exp(f)
    denom = jnp.sum(pexp, axis=-1, keepdims=True)                 # (TQ, 1)
    y = lax.dot_general(pexp, g_scr[...], (((1,), (1,)), ((), ())),
                        preferred_element_type=jnp.float32)       # (TQ, IC)
    y = y * pl.reciprocal(denom, approx=True)                     # deferred softmax normalization
    wy = lax.dot_general(wwf_ref[...], y, (((1,), (1,)), ((), ())),
                         preferred_element_type=jnp.float32)      # (C, TQ); BN folded into wwf/bwf
    nl_ref[0] = wy + bwf_ref[...] + xca_t
    sp_ref[0] = xca_t * satt_scr[:, pl.ds(qoff, TQ)]              # spatial_attn(x_ca) * x_ca


def _pick_tq(HW):
    for tq in (256, 128):                                         # 256 cap keeps f=(TQ,HW/4) v7x-safe
        if HW % tq == 0:
            return tq
    # TODO(synk): pad HW up to a multiple of 128 with masked contributions instead of this fallback.
    return HW


def jam_pallas_call(x_flat, p, *, H, W):
    N, C, HW = x_flat.shape
    IC = p["w_theta"].shape[0]
    HW4 = HW // 4
    TQ = _pick_tq(HW)
    kern = functools.partial(_jam_kernel, IC=IC, H=H, W=W, TQ=TQ)
    const = lambda n, q: (0, 0)
    return pl.pallas_call(
        kern,
        out_shape=(jax.ShapeDtypeStruct((N, C, HW), jnp.float32),
                   jax.ShapeDtypeStruct((N, C, HW), jnp.float32)),
        grid=(N, HW // TQ),
        in_specs=[pl.BlockSpec((1, C, HW), lambda n, q: (n, 0, 0)),
                  pl.BlockSpec(memory_space=pltpu.MemorySpace.SMEM),   # conv1d(7) weights
                  pl.BlockSpec(memory_space=pltpu.MemorySpace.SMEM),   # 3x3 spatial conv weights
                  pl.BlockSpec((IC, C), const),
                  pl.BlockSpec((IC, 1), const),
                  pl.BlockSpec((2 * IC, C), const),
                  pl.BlockSpec((2 * IC, 1), const),
                  pl.BlockSpec((HW, HW4), const),
                  pl.BlockSpec((C, IC), const),
                  pl.BlockSpec((C, 1), const)],
        out_specs=(pl.BlockSpec((1, C, TQ), lambda n, q: (n, 0, q)),
                   pl.BlockSpec((1, C, TQ), lambda n, q: (n, 0, q))),
        scratch_shapes=[pltpu.VMEM((C, HW), jnp.float32),    # x_ca
                        pltpu.VMEM((1, HW), jnp.float32),    # sigmoid(spatial att)
                        pltpu.VMEM((IC, HW4), jnp.float32),  # phi (pooled)
                        pltpu.VMEM((IC, HW4), jnp.float32)], # g (pooled)
        compiler_params=pltpu.CompilerParams(
            dimension_semantics=("parallel", "arbitrary"),
            vmem_limit_bytes=48 * 1024 * 1024),
    )(x_flat, p["w_ca"], p["w_sa_flat"], p["w_theta_k"], p["b_theta_k"],
      p["w_pg"], p["b_pg"], p["sel"], p["w_Wf"], p["bias_f"])


# --------------------------------------------------------------------------
# JAM forward (glue is only free trailing-dim reshapes).
# --------------------------------------------------------------------------
def jam_forward(x, params):
    N, C, H, W = x.shape
    assert H % 2 == 0 and W % 2 == 0, "NonLocalBlock's MaxPool2d(2) needs even H, W"
    x_flat = x.astype(jnp.float32).reshape(N, C, H * W)
    nl, sp = jam_pallas_call(x_flat, params, H=H, W=W)
    return nl.reshape(N, C, H, W), sp.reshape(N, C, H, W)
    # TODO(synk): for tiny C (MXU contraction K=C), batching several samples per grid step would
    #             raise MXU utilization further; not done here to keep the grid simple.


# --------------------------------------------------------------------------
# Deterministic parameter construction (shapes from the module __init__) + host-side folds.
# --------------------------------------------------------------------------
def make_params(key, C, H, W):
    IC = max(C // 2, 1)
    ks = jax.random.split(key, 12)
    s = 0.2
    w_ca = s * jax.random.normal(ks[0], (7,), jnp.float32)          # Conv1d(1,1,7).weight
    w_theta = s * jax.random.normal(ks[1], (IC, C), jnp.float32)
    b_theta = s * jax.random.normal(ks[2], (IC,), jnp.float32)
    w_phi = s * jax.random.normal(ks[3], (IC, C), jnp.float32)
    b_phi = s * jax.random.normal(ks[4], (IC,), jnp.float32)
    w_g = s * jax.random.normal(ks[5], (IC, C), jnp.float32)
    b_g = s * jax.random.normal(ks[6], (IC,), jnp.float32)
    w_W = s * jax.random.normal(ks[7], (C, IC), jnp.float32)
    b_W = s * jax.random.normal(ks[8], (C,), jnp.float32)
    w_sa = s * jax.random.normal(ks[9], (2, 3, 3), jnp.float32)     # Conv2d(2,1,3).weight[0]

    # BatchNorm2d (eval-mode affine with running stats).  PyTorch zero-inits weight/bias here;
    # we use non-zero gamma/beta so the non-local math path is actually verified by the test.
    gamma = s * jax.random.normal(ks[10], (C,), jnp.float32)
    beta = s * jax.random.normal(ks[11], (C,), jnp.float32)
    run_mean = jnp.zeros((C,), jnp.float32)
    run_var = jnp.ones((C,), jnp.float32)
    eps = 1e-5
    bn_scale = gamma / jnp.sqrt(run_var + eps)
    bn_shift = beta - run_mean * bn_scale

    # Host-side folds for the kernel.
    w_pg = jnp.concatenate([w_phi, w_g], axis=0)                    # (2IC, C) fused phi/g projection
    b_pg = jnp.concatenate([b_phi, b_g], axis=0).reshape(2 * IC, 1)
    w_Wf = bn_scale[:, None] * w_W                                  # BN folded into W conv
    bias_f = (bn_scale * b_W + bn_shift).reshape(C, 1)

    # 0/1 selector picking the even-row/even-col anchors: (HW, HW/4).
    HW, half, HW4 = H * W, W // 2, (H * W) // 4
    qidx = jnp.arange(HW4)
    src = 2 * (qidx // half) * W + 2 * (qidx % half)
    sel = (jnp.arange(HW)[:, None] == src[None, :]).astype(jnp.float32)

    return dict(
        # raw parameters (used by the pure-JAX reference)
        w_ca=w_ca, w_theta=w_theta, b_theta=b_theta, w_phi=w_phi, b_phi=b_phi,
        w_g=w_g, b_g=b_g, w_W=w_W, b_W=b_W, bn_scale=bn_scale, bn_shift=bn_shift, w_sa=w_sa,
        # kernel-ready (folded / fused / flattened) parameters
        w_sa_flat=w_sa.reshape(18),
        w_theta_k=w_theta, b_theta_k=b_theta.reshape(IC, 1),
        w_pg=w_pg, b_pg=b_pg, sel=sel, w_Wf=w_Wf, bias_f=bias_f,
    )
    # TODO(synk): JAM.__init__ also defines self.conv (1x1 Conv2d) which is never used in forward.


# --------------------------------------------------------------------------
# Pure-JAX reference for verification (uses the raw, unfolded parameters).
# --------------------------------------------------------------------------
def jam_reference(x, p):
    HI = lax.Precision.HIGHEST
    N, C, H, W = x.shape
    HW = H * W
    IC = p["w_theta"].shape[0]
    x = x.astype(jnp.float32)

    # channel attention
    s = x.mean(axis=(2, 3)) + x.max(axis=(2, 3))                    # (N, C)
    s_pad = jnp.pad(s, ((0, 0), (3, 3)))
    w = p["w_ca"]
    pre = sum(w[k] * s_pad[:, k:k + C] for k in range(7))
    x_ca = x * _sigmoid(pre)[:, :, None, None]

    # non-local block
    xt = x_ca.reshape(N, C, HW)
    theta = jnp.einsum("ic,nch->nih", p["w_theta"], xt, precision=HI) + p["b_theta"][None, :, None]
    phi_full = jnp.einsum("ic,nch->nih", p["w_phi"], xt, precision=HI) + p["b_phi"][None, :, None]
    g_full = jnp.einsum("ic,nch->nih", p["w_g"], xt, precision=HI) + p["b_g"][None, :, None]

    def pool(v):
        v = v.reshape(N, IC, H // 2, 2, W // 2, 2)
        return v.max(axis=(3, 5)).reshape(N, IC, (H // 2) * (W // 2))

    phi = pool(phi_full)
    g = pool(g_full)
    f = jnp.einsum("niq,nik->nqk", theta, phi, precision=HI)
    pa = jax.nn.softmax(f, axis=-1)
    y = jnp.einsum("nqk,nik->nqi", pa, g, precision=HI)
    wy = jnp.einsum("ci,nqi->ncq", p["w_W"], y, precision=HI) + p["b_W"][None, :, None]
    z = wy * p["bn_scale"][None, :, None] + p["bn_shift"][None, :, None] + xt
    nl_x = z.reshape(N, C, H, W)

    # spatial attention
    maps = jnp.concatenate([x_ca.mean(axis=1, keepdims=True),
                            x_ca.max(axis=1, keepdims=True)], axis=1)
    wsa = p["w_sa"].reshape(1, 2, 3, 3)
    conv = lax.conv_general_dilated(maps, wsa, (1, 1), [(1, 1), (1, 1)],
                                    dimension_numbers=("NCHW", "OIHW", "NCHW"),
                                    precision=HI)
    sp_x = _sigmoid(conv) * x_ca
    return nl_x, sp_x


if __name__ == "__main__":
    N, C, H, W = 2, 8, 16, 16
    key = jax.random.PRNGKey(0)
    kx, kp = jax.random.split(key)
    x = jax.random.normal(kx, (N, C, H, W), jnp.float32)
    params = make_params(kp, C, H, W)

    nl_x, sp_x = jax.jit(lambda xx: jam_forward(xx, params))(x)
    jax.block_until_ready((nl_x, sp_x))

    nl_ref, sp_ref = jam_reference(x, params)
    assert nl_x.shape == (N, C, H, W) and sp_x.shape == (N, C, H, W)
    assert jnp.allclose(nl_x, nl_ref, atol=2e-3, rtol=2e-3), "non-local output mismatch"
    assert jnp.allclose(sp_x, sp_ref, atol=2e-3, rtol=2e-3), "spatial output mismatch"
    print("KERNEL_OK")
</pallas_src>

<mosaic_0001>
module attributes {stable_mosaic.version = 11 : i64} {
  func.func @_jam_kernel(%arg0: i32, %arg1: i32, %arg2: memref<1x8x256xf32, #tpu.memory_space<vmem>>, %arg3: memref<7xf32, #tpu.memory_space<smem>>, %arg4: memref<18xf32, #tpu.memory_space<smem>>, %arg5: memref<4x8xf32, #tpu.memory_space<vmem>>, %arg6: memref<4x1xf32, #tpu.memory_space<vmem>>, %arg7: memref<8x8xf32, #tpu.memory_space<vmem>>, %arg8: memref<8x1xf32, #tpu.memory_space<vmem>>, %arg9: memref<256x64xf32, #tpu.memory_space<vmem>>, %arg10: memref<8x4xf32, #tpu.memory_space<vmem>>, %arg11: memref<8x1xf32, #tpu.memory_space<vmem>>, %arg12: memref<1x8x256xf32, #tpu.memory_space<vmem>>, %arg13: memref<1x8x256xf32, #tpu.memory_space<vmem>>, %arg14: memref<8x256xf32, #tpu.memory_space<vmem>>, %arg15: memref<1x256xf32, #tpu.memory_space<vmem>>, %arg16: memref<4x64xf32, #tpu.memory_space<vmem>>, %arg17: memref<4x64xf32, #tpu.memory_space<vmem>>) attributes {dimension_semantics = [#tpu.dimension_semantics<parallel>, #tpu.dimension_semantics<arbitrary>], iteration_bounds = array<i64: 2, 1>, scalar_prefetch = 0 : i64, scratch_operands = 4 : i64, tpu.core_type = #tpu.core_type<tc>, window_params = [{transform_indices = @transform_0, window_bounds = array<i64: 1, 8, 256>}, {transform_indices = @transform_1, window_bounds = array<i64: 7>}, {transform_indices = @transform_2, window_bounds = array<i64: 18>}, {pipeline_mode = #tpu.pipeline_mode<synchronous>, transform_indices = @transform_3, window_bounds = array<i64: 4, 8>}, {pipeline_mode = #tpu.pipeline_mode<synchronous>, transform_indices = @transform_4, window_bounds = array<i64: 4, 1>}, {pipeline_mode = #tpu.pipeline_mode<synchronous>, transform_indices = @transform_5, window_bounds = array<i64: 8, 8>}, {pipeline_mode = #tpu.pipeline_mode<synchronous>, transform_indices = @transform_6, window_bounds = array<i64: 8, 1>}, {pipeline_mode = #tpu.pipeline_mode<synchronous>, transform_indices = @transform_7, window_bounds = array<i64: 256, 64>}, {pipeline_mode = #tpu.pipeline_mode<synchronous>, transform_indices = @transform_8, window_bounds = array<i64: 8, 4>}, {pipeline_mode = #tpu.pipeline_mode<synchronous>, transform_indices = @transform_9, window_bounds = array<i64: 8, 1>}, {transform_indices = @transform_10, window_bounds = array<i64: 1, 8, 256>}, {transform_indices = @transform_11, window_bounds = array<i64: 1, 8, 256>}]} {
    %c0_i32 = arith.constant 0 : i32
    %0 = arith.cmpi eq, %arg1, %c0_i32 : i32
    %1 = arith.extui %0 : i1 to i32
    %c0_i32_0 = arith.constant 0 : i32
    %2 = arith.cmpi ne, %1, %c0_i32_0 : i32
    scf.if %2 {
      %c0_25 = arith.constant 0 : index
      %c0_26 = arith.constant 0 : index
      %c0_27 = arith.constant 0 : index
      %42 = vector.load %arg2[%c0_25, %c0_26, %c0_27] : memref<1x8x256xf32, #tpu.memory_space<vmem>>, vector<1x8x256xf32>
      %43 = vector.shape_cast %42 : vector<1x8x256xf32> to vector<8x256xf32>
      %cst_28 = arith.constant dense<0.000000e+00> : vector<8xf32>
      %44 = vector.multi_reduction <add>, %43, %cst_28 [1] : vector<8x256xf32> to vector<8xf32>
      %45 = vector.shape_cast %44 : vector<8xf32> to vector<8x1xf32>
      %cst_29 = arith.constant 2.560000e+02 : f32
      %46 = vector.broadcast %cst_29 : f32 to vector<8x1xf32>
      %47 = arith.divf %45, %46 : vector<8x1xf32>
      %cst_30 = arith.constant dense<0xFF800000> : vector<8xf32>
      %48 = vector.multi_reduction <maximumf>, %43, %cst_30 [1] : vector<8x256xf32> to vector<8xf32>
      %49 = vector.shape_cast %48 : vector<8xf32> to vector<8x1xf32>
      %50 = arith.addf %47, %49 : vector<8x1xf32>
      %cst_31 = arith.constant 0.000000e+00 : f32
      %51 = vector.broadcast %cst_31 : f32 to vector<3x1xf32>
      %52 = tpu.concatenate %51, %50, %51 in 0 : vector<3x1xf32>, vector<8x1xf32>, vector<3x1xf32> -> vector<14x1xf32>
      %cst_32 = arith.constant 0.000000e+00 : f32
      %53 = vector.broadcast %cst_32 : f32 to vector<8x1xf32>
      %c0_33 = arith.constant 0 : index
      %54 = memref.load %arg3[%c0_33] : memref<7xf32, #tpu.memory_space<smem>>
      %55 = vector.extract_strided_slice %52 {offsets = [0, 0], sizes = [8, 1], strides = [1, 1]} : vector<14x1xf32> to vector<8x1xf32>
      %56 = vector.broadcast %54 : f32 to vector<8x1xf32>
      %57 = arith.mulf %56, %55 : vector<8x1xf32>
      %58 = arith.addf %53, %57 : vector<8x1xf32>
      %c1 = arith.constant 1 : index
      %59 = memref.load %arg3[%c1] : memref<7xf32, #tpu.memory_space<smem>>
      %60 = vector.extract_strided_slice %52 {offsets = [1, 0], sizes = [8, 1], strides = [1, 1]} : vector<14x1xf32> to vector<8x1xf32>
      %61 = vector.broadcast %59 : f32 to vector<8x1xf32>
      %62 = arith.mulf %61, %60 : vector<8x1xf32>
      %63 = arith.addf %58, %62 : vector<8x1xf32>
      %c2 = arith.constant 2 : index
      %64 = memref.load %arg3[%c2] : memref<7xf32, #tpu.memory_space<smem>>
      %65 = vector.extract_strided_slice %52 {offsets = [2, 0], sizes = [8, 1], strides = [1, 1]} : vector<14x1xf32> to vector<8x1xf32>
      %66 = vector.broadcast %64 : f32 to vector<8x1xf32>
      %67 = arith.mulf %66, %65 : vector<8x1xf32>
      %68 = arith.addf %63, %67 : vector<8x1xf32>
      %c3 = arith.constant 3 : index
      %69 = memref.load %arg3[%c3] : memref<7xf32, #tpu.memory_space<smem>>
      %70 = vector.extract_strided_slice %52 {offsets = [3, 0], sizes = [8, 1], strides = [1, 1]} : vector<14x1xf32> to vector<8x1xf32>
      %71 = vector.broadcast %69 : f32 to vector<8x1xf32>
      %72 = arith.mulf %71, %70 : vector<8x1xf32>
      %73 = arith.addf %68, %72 : vector<8x1xf32>
      %c4 = arith.constant 4 : index
      %74 = memref.load %arg3[%c4] : memref<7xf32, #tpu.memory_space<smem>>
      %75 = vector.extract_strided_slice %52 {offsets = [4, 0], sizes = [8, 1], strides = [1, 1]} : vector<14x1xf32> to vector<8x1xf32>
      %76 = vector.broadcast %74 : f32 to vector<8x1xf32>
      %77 = arith.mulf %76, %75 : vector<8x1xf32>
      %78 = arith.addf %73, %77 : vector<8x1xf32>
      %c5 = arith.constant 5 : index
      %79 = memref.load %arg3[%c5] : memref<7xf32, #tpu.memory_space<smem>>
      %80 = vector.extract_strided_slice %52 {offsets = [5, 0], sizes = [8, 1], strides = [1, 1]} : vector<14x1xf32> to vector<8x1xf32>
      %81 = vector.broadcast %79 : f32 to vector<8x1xf32>
      %82 = arith.mulf %81, %80 : vector<8x1xf32>
      %83 = arith.addf %78, %82 : vector<8x1xf32>
      %c6 = arith.constant 6 : index
      %84 = memref.load %arg3[%c6] : memref<7xf32, #tpu.memory_space<smem>>
      %85 = vector.extract_strided_slice %52 {offsets = [6, 0], sizes = [8, 1], strides = [1, 1]} : vector<14x1xf32> to vector<8x1xf32>
      %86 = vector.broadcast %84 : f32 to vector<8x1xf32>
      %87 = arith.mulf %86, %85 : vector<8x1xf32>
      %88 = arith.addf %83, %87 : vector<8x1xf32>
      %cst_34 = arith.constant 0.000000e+00 : f32
      %89 = vector.broadcast %cst_34 : f32 to vector<8x1xf32>
      %90 = arith.subf %89, %88 : vector<8x1xf32>
      %91 = math.exp %90 : vector<8x1xf32>
      %cst_35 = arith.constant 1.000000e+00 : f32
      %92 = vector.broadcast %cst_35 : f32 to vector<8x1xf32>
      %93 = arith.addf %92, %91 : vector<8x1xf32>
      %cst_36 = arith.constant 1.000000e+00 : f32
      %94 = vector.broadcast %cst_36 : f32 to vector<8x1xf32>
      %95 = arith.divf %94, %93 : vector<8x1xf32>
      %96 = vector.broadcast %95 : vector<8x1xf32> to vector<8x256xf32>
      %97 = arith.mulf %43, %96 : vector<8x256xf32>
      %c0_37 = arith.constant 0 : index
      %c0_38 = arith.constant 0 : index
      %98 = vector.load %arg14[%c0_37, %c0_38] : memref<8x256xf32, #tpu.memory_space<vmem>>, vector<8x256xf32>
      tpu.vector_store %arg14[%c0_37, %c0_38], %97 {strides = array<i32>} : memref<8x256xf32, #tpu.memory_space<vmem>>, vector<8x256xf32>,
      %cst_39 = arith.constant dense<0.000000e+00> : vector<256xf32>
      %99 = vector.multi_reduction <add>, %97, %cst_39 [0] : vector<8x256xf32> to vector<256xf32>
      %100 = vector.shape_cast %99 : vector<256xf32> to vector<1x256xf32>
      %cst_40 = arith.constant 8.000000e+00 : f32
      %101 = vector.broadcast %cst_40 : f32 to vector<1x256xf32>
      %102 = arith.divf %100, %101 : vector<1x256xf32>
      %cst_41 = arith.constant dense<0xFF800000> : vector<256xf32>
      %103 = vector.multi_reduction <maximumf>, %97, %cst_41 [0] : vector<8x256xf32> to vector<256xf32>
      %104 = vector.shape_cast %103 : vector<256xf32> to vector<1x256xf32>
      %105 = tpu.concatenate %102, %104 in 0 : vector<1x256xf32>, vector<1x256xf32> -> vector<2x256xf32>
      %106 = tpu.iota {dimensions = array<i32: 1>} : vector<1x256xi32>
      %107 = arith.sitofp %106 : vector<1x256xi32> to vector<1x256xf32>
      %cst_42 = arith.constant 5.000000e-01 : f32
      %108 = vector.broadcast %cst_42 : f32 to vector<1x256xf32>
      %109 = arith.addf %107, %108 : vector<1x256xf32>
      %cst_43 = arith.constant 6.250000e-02 : f32
      %110 = vector.broadcast %cst_43 : f32 to vector<1x256xf32>
      %111 = arith.mulf %109, %110 : vector<1x256xf32>
      %112 = math.floor %111 : vector<1x256xf32>
      %cst_44 = arith.constant 1.600000e+01 : f32
      %113 = vector.broadcast %cst_44 : f32 to vector<1x256xf32>
      %114 = arith.mulf %112, %113 : vector<1x256xf32>
      %115 = arith.subf %107, %114 : vector<1x256xf32>
      %cst_45 = arith.constant -1.000000e+00 : f32
      %116 = vector.broadcast %cst_45 : f32 to vector<1x256xf32>
      %117 = arith.addf %112, %116 : vector<1x256xf32>
      %cst_46 = arith.constant 0.000000e+00 : f32
      %118 = vector.broadcast %cst_46 : f32 to vector<1x256xf32>
      %119 = arith.cmpf oge, %117, %118 : vector<1x256xf32>
      %cst_47 = arith.constant -1.000000e+00 : f32
      %120 = vector.broadcast %cst_47 : f32 to vector<1x256xf32>
      %121 = arith.addf %112, %120 : vector<1x256xf32>
      %cst_48 = arith.constant 1.500000e+01 : f32
      %122 = vector.broadcast %cst_48 : f32 to vector<1x256xf32>
      %123 = arith.cmpf ole, %121, %122 : vector<1x256xf32>
      %124 = arith.andi %119, %123 : vector<1x256xi1>
      %cst_49 = arith.constant 0.000000e+00 : f32
      %125 = vector.broadcast %cst_49 : f32 to vector<1x256xf32>
      %126 = arith.addf %112, %125 : vector<1x256xf32>
      %cst_50 = arith.constant 0.000000e+00 : f32
      %127 = vector.broadcast %cst_50 : f32 to vector<1x256xf32>
      %128 = arith.cmpf oge, %126, %127 : vector<1x256xf32>
      %cst_51 = arith.constant 0.000000e+00 : f32
      %129 = vector.broadcast %cst_51 : f32 to vector<1x256xf32>
      %130 = arith.addf %112, %129 : vector<1x256xf32>
      %cst_52 = arith.constant 1.500000e+01 : f32
      %131 = vector.broadcast %cst_52 : f32 to vector<1x256xf32>
      %132 = arith.cmpf ole, %130, %131 : vector<1x256xf32>
      %133 = arith.andi %128, %132 : vector<1x256xi1>
      %cst_53 = arith.constant 1.000000e+00 : f32
      %134 = vector.broadcast %cst_53 : f32 to vector<1x256xf32>
      %135 = arith.addf %112, %134 : vector<1x256xf32>
      %cst_54 = arith.constant 0.000000e+00 : f32
      %136 = vector.broadcast %cst_54 : f32 to vector<1x256xf32>
      %137 = arith.cmpf oge, %135, %136 : vector<1x256xf32>
      %cst_55 = arith.constant 1.000000e+00 : f32
      %138 = vector.broadcast %cst_55 : f32 to vector<1x256xf32>
      %139 = arith.addf %112, %138 : vector<1x256xf32>
      %cst_56 = arith.constant 1.500000e+01 : f32
      %140 = vector.broadcast %cst_56 : f32 to vector<1x256xf32>
      %141 = arith.cmpf ole, %139, %140 : vector<1x256xf32>
      %142 = arith.andi %137, %141 : vector<1x256xi1>
      %cst_57 = arith.constant -1.000000e+00 : f32
      %143 = vector.broadcast %cst_57 : f32 to vector<1x256xf32>
      %144 = arith.addf %115, %143 : vector<1x256xf32>
      %cst_58 = arith.constant 0.000000e+00 : f32
      %145 = vector.broadcast %cst_58 : f32 to vector<1x256xf32>
      %146 = arith.cmpf oge, %144, %145 : vector<1x256xf32>
      %cst_59 = arith.constant -1.000000e+00 : f32
      %147 = vector.broadcast %cst_59 : f32 to vector<1x256xf32>
      %148 = arith.addf %115, %147 : vector<1x256xf32>
      %cst_60 = arith.constant 1.500000e+01 : f32
      %149 = vector.broadcast %cst_60 : f32 to vector<1x256xf32>
      %150 = arith.cmpf ole, %148, %149 : vector<1x256xf32>
      %151 = arith.andi %146, %150 : vector<1x256xi1>
      %cst_61 = arith.constant 0.000000e+00 : f32
      %152 = vector.broadcast %cst_61 : f32 to vector<1x256xf32>
      %153 = arith.addf %115, %152 : vector<1x256xf32>
      %cst_62 = arith.constant 0.000000e+00 : f32
      %154 = vector.broadcast %cst_62 : f32 to vector<1x256xf32>
      %155 = arith.cmpf oge, %153, %154 : vector<1x256xf32>
      %cst_63 = arith.constant 0.000000e+00 : f32
      %156 = vector.broadcast %cst_63 : f32 to vector<1x256xf32>
      %157 = arith.addf %115, %156 : vector<1x256xf32>
      %cst_64 = arith.constant 1.500000e+01 : f32
      %158 = vector.broadcast %cst_64 : f32 to vector<1x256xf32>
      %159 = arith.cmpf ole, %157, %158 : vector<1x256xf32>
      %160 = arith.andi %155, %159 : vector<1x256xi1>
      %cst_65 = arith.constant 1.000000e+00 : f32
      %161 = vector.broadcast %cst_65 : f32 to vector<1x256xf32>
      %162 = arith.addf %115, %161 : vector<1x256xf32>
      %cst_66 = arith.constant 0.000000e+00 : f32
      %163 = vector.broadcast %cst_66 : f32 to vector<1x256xf32>
      %164 = arith.cmpf oge, %162, %163 : vector<1x256xf32>
      %cst_67 = arith.constant 1.000000e+00 : f32
      %165 = vector.broadcast %cst_67 : f32 to vector<1x256xf32>
      %166 = arith.addf %115, %165 : vector<1x256xf32>
      %cst_68 = arith.constant 1.500000e+01 : f32
      %167 = vector.broadcast %cst_68 : f32 to vector<1x256xf32>
      %168 = arith.cmpf ole, %166, %167 : vector<1x256xf32>
      %169 = arith.andi %164, %168 : vector<1x256xi1>
      %cst_69 = arith.constant 0.000000e+00 : f32
      %170 = vector.broadcast %cst_69 : f32 to vector<1x256xf32>
      %171 = vector.extract_strided_slice %105 {offsets = [0, 239], sizes = [2, 17], strides = [1, 1]} : vector<2x256xf32> to vector<2x17xf32>
      %172 = vector.extract_strided_slice %105 {offsets = [0, 0], sizes = [2, 239], strides = [1, 1]} : vector<2x256xf32> to vector<2x239xf32>
      %173 = tpu.concatenate %171, %172 in 1 : vector<2x17xf32>, vector<2x239xf32> -> vector<2x256xf32>
      %174 = arith.andi %124, %151 : vector<1x256xi1>
      %175 = arith.extui %174 : vector<1x256xi1> to vector<1x256xi32>
      %176 = arith.sitofp %175 : vector<1x256xi32> to vector<1x256xf32>
      %c0_70 = arith.constant 0 : index
      %177 = memref.load %arg4[%c0_70] : memref<18xf32, #tpu.memory_space<smem>>
      %178 = vector.extract_strided_slice %173 {offsets = [0, 0], sizes = [1, 256], strides = [1, 1]} : vector<2x256xf32> to vector<1x256xf32>
      %179 = vector.broadcast %177 : f32 to vector<1x256xf32>
      %180 = arith.mulf %179, %178 : vector<1x256xf32>
      %c9 = arith.constant 9 : index
      %181 = memref.load %arg4[%c9] : memref<18xf32, #tpu.memory_space<smem>>
      %182 = vector.extract_strided_slice %173 {offsets = [1, 0], sizes = [1, 256], strides = [1, 1]} : vector<2x256xf32> to vector<1x256xf32>
      %183 = vector.broadcast %181 : f32 to vector<1x256xf32>
      %184 = arith.mulf %183, %182 : vector<1x256xf32>
      %185 = arith.addf %180, %184 : vector<1x256xf32>
      %186 = arith.mulf %176, %185 : vector<1x256xf32>
      %187 = arith.addf %170, %186 : vector<1x256xf32>
      %188 = vector.extract_strided_slice %105 {offsets = [0, 240], sizes = [2, 16], strides = [1, 1]} : vector<2x256xf32> to vector<2x16xf32>
      %189 = vector.extract_strided_slice %105 {offsets = [0, 0], sizes = [2, 240], strides = [1, 1]} : vector<2x256xf32> to vector<2x240xf32>
      %190 = tpu.concatenate %188, %189 in 1 : vector<2x16xf32>, vector<2x240xf32> -> vector<2x256xf32>
      %191 = arith.andi %124, %160 : vector<1x256xi1>
      %192 = arith.extui %191 : vector<1x256xi1> to vector<1x256xi32>
      %193 = arith.sitofp %192 : vector<1x256xi32> to vector<1x256xf32>
      %c1_71 = arith.constant 1 : index
      %194 = memref.load %arg4[%c1_71] : memref<18xf32, #tpu.memory_space<smem>>
      %195 = vector.extract_strided_slice %190 {offsets = [0, 0], sizes = [1, 256], strides = [1, 1]} : vector<2x256xf32> to vector<1x256xf32>
      %196 = vector.broadcast %194 : f32 to vector<1x256xf32>
      %197 = arith.mulf %196, %195 : vector<1x256xf32>
      %c10 = arith.constant 10 : index
      %198 = memref.load %arg4[%c10] : memref<18xf32, #tpu.memory_space<smem>>
      %199 = vector.extract_strided_slice %190 {offsets = [1, 0], sizes = [1, 256], strides = [1, 1]} : vector<2x256xf32> to vector<1x256xf32>
      %200 = vector.broadcast %198 : f32 to vector<1x256xf32>
      %201 = arith.mulf %200, %199 : vector<1x256xf32>
      %202 = arith.addf %197, %201 : vector<1x256xf32>
      %203 = arith.mulf %193, %202 : vector<1x256xf32>
      %204 = arith.addf %187, %203 : vector<1x256xf32>
      %205 = vector.extract_strided_slice %105 {offsets = [0, 241], sizes = [2, 15], strides = [1, 1]} : vector<2x256xf32> to vector<2x15xf32>
      %206 = vector.extract_strided_slice %105 {offsets = [0, 0], sizes = [2, 241], strides = [1, 1]} : vector<2x256xf32> to vector<2x241xf32>
      %207 = tpu.concatenate %205, %206 in 1 : vector<2x15xf32>, vector<2x241xf32> -> vector<2x256xf32>
      %208 = arith.andi %124, %169 : vector<1x256xi1>
      %209 = arith.extui %208 : vector<1x256xi1> to vector<1x256xi32>
      %210 = arith.sitofp %209 : vector<1x256xi32> to vector<1x256xf32>
      %c2_72 = arith.constant 2 : index
      %211 = memref.load %arg4[%c2_72] : memref<18xf32, #tpu.memory_space<smem>>
      %212 = vector.extract_strided_slice %207 {offsets = [0, 0], sizes = [1, 256], strides = [1, 1]} : vector<2x256xf32> to vector<1x256xf32>
      %213 = vector.broadcast %211 : f32 to vector<1x256xf32>
      %214 = arith.mulf %213, %212 : vector<1x256xf32>
      %c11 = arith.constant 11 : index
      %215 = memref.load %arg4[%c11] : memref<18xf32, #tpu.memory_space<smem>>
      %216 = vector.extract_strided_slice %207 {offsets = [1, 0], sizes = [1, 256], strides = [1, 1]} : vector<2x256xf32> to vector<1x256xf32>
      %217 = vector.broadcast %215 : f32 to vector<1x256xf32>
      %218 = arith.mulf %217, %216 : vector<1x256xf32>
      %219 = arith.addf %214, %218 : vector<1x256xf32>
      %220 = arith.mulf %210, %219 : vector<1x256xf32>
      %221 = arith.addf %204, %220 : vector<1x256xf32>
      %222 = vector.extract_strided_slice %105 {offsets = [0, 255], sizes = [2, 1], strides = [1, 1]} : vector<2x256xf32> to vector<2x1xf32>
      %223 = vector.extract_strided_slice %105 {offsets = [0, 0], sizes = [2, 255], strides = [1, 1]} : vector<2x256xf32> to vector<2x255xf32>
      %224 = tpu.concatenate %222, %223 in 1 : vector<2x1xf32>, vector<2x255xf32> -> vector<2x256xf32>
      %225 = arith.andi %133, %151 : vector<1x256xi1>
      %226 = arith.extui %225 : vector<1x256xi1> to vector<1x256xi32>
      %227 = arith.sitofp %226 : vector<1x256xi32> to vector<1x256xf32>
      %c3_73 = arith.constant 3 : index
      %228 = memref.load %arg4[%c3_73] : memref<18xf32, #tpu.memory_space<smem>>
      %229 = vector.extract_strided_slice %224 {offsets = [0, 0], sizes = [1, 256], strides = [1, 1]} : vector<2x256xf32> to vector<1x256xf32>
      %230 = vector.broadcast %228 : f32 to vector<1x256xf32>
      %231 = arith.mulf %230, %229 : vector<1x256xf32>
      %c12 = arith.constant 12 : index
      %232 = memref.load %arg4[%c12] : memref<18xf32, #tpu.memory_space<smem>>
      %233 = vector.extract_strided_slice %224 {offsets = [1, 0], sizes = [1, 256], strides = [1, 1]} : vector<2x256xf32> to vector<1x256xf32>
      %234 = vector.broadcast %232 : f32 to vector<1x256xf32>
      %235 = arith.mulf %234, %233 : vector<1x256xf32>
      %236 = arith.addf %231, %235 : vector<1x256xf32>
      %237 = arith.mulf %227, %236 : vector<1x256xf32>
      %238 = arith.addf %221, %237 : vector<1x256xf32>
      %239 = arith.andi %133, %160 : vector<1x256xi1>
      %240 = arith.extui %239 : vector<1x256xi1> to vector<1x256xi32>
      %241 = arith.sitofp %240 : vector<1x256xi32> to vector<1x256xf32>
      %c4_74 = arith.constant 4 : index
      %242 = memref.load %arg4[%c4_74] : memref<18xf32, #tpu.memory_space<smem>>
      %243 = vector.extract_strided_slice %105 {offsets = [0, 0], sizes = [1, 256], strides = [1, 1]} : vector<2x256xf32> to vector<1x256xf32>
      %244 = vector.broadcast %242 : f32 to vector<1x256xf32>
      %245 = arith.mulf %244, %243 : vector<1x256xf32>
      %c13 = arith.constant 13 : index
      %246 = memref.load %arg4[%c13] : memref<18xf32, #tpu.memory_space<smem>>
      %247 = vector.extract_strided_slice %105 {offsets = [1, 0], sizes = [1, 256], strides = [1, 1]} : vector<2x256xf32> to vector<1x256xf32>
      %248 = vector.broadcast %246 : f32 to vector<1x256xf32>
      %249 = arith.mulf %248, %247 : vector<1x256xf32>
      %250 = arith.addf %245, %249 : vector<1x256xf32>
      %251 = arith.mulf %241, %250 : vector<1x256xf32>
      %252 = arith.addf %238, %251 : vector<1x256xf32>
      %253 = vector.extract_strided_slice %105 {offsets = [0, 1], sizes = [2, 255], strides = [1, 1]} : vector<2x256xf32> to vector<2x255xf32>
      %254 = vector.extract_strided_slice %105 {offsets = [0, 0], sizes = [2, 1], strides = [1, 1]} : vector<2x256xf32> to vector<2x1xf32>
      %255 = tpu.concatenate %253, %254 in 1 : vector<2x255xf32>, vector<2x1xf32> -> vector<2x256xf32>
      %256 = arith.andi %133, %169 : vector<1x256xi1>
      %257 = arith.extui %256 : vector<1x256xi1> to vector<1x256xi32>
      %258 = arith.sitofp %257 : vector<1x256xi32> to vector<1x256xf32>
      %c5_75 = arith.constant 5 : index
      %259 = memref.load %arg4[%c5_75] : memref<18xf32, #tpu.memory_space<smem>>
      %260 = vector.extract_strided_slice %255 {offsets = [0, 0], sizes = [1, 256], strides = [1, 1]} : vector<2x256xf32> to vector<1x256xf32>
      %261 = vector.broadcast %259 : f32 to vector<1x256xf32>
      %262 = arith.mulf %261, %260 : vector<1x256xf32>
      %c14 = arith.constant 14 : index
      %263 = memref.load %arg4[%c14] : memref<18xf32, #tpu.memory_space<smem>>
      %264 = vector.extract_strided_slice %255 {offsets = [1, 0], sizes = [1, 256], strides = [1, 1]} : vector<2x256xf32> to vector<1x256xf32>
      %265 = vector.broadcast %263 : f32 to vector<1x256xf32>
      %266 = arith.mulf %265, %264 : vector<1x256xf32>
      %267 = arith.addf %262, %266 : vector<1x256xf32>
      %268 = arith.mulf %258, %267 : vector<1x256xf32>
      %269 = arith.addf %252, %268 : vector<1x256xf32>
      %270 = vector.extract_strided_slice %105 {offsets = [0, 15], sizes = [2, 241], strides = [1, 1]} : vector<2x256xf32> to vector<2x241xf32>
      %271 = vector.extract_strided_slice %105 {offsets = [0, 0], sizes = [2, 15], strides = [1, 1]} : vector<2x256xf32> to vector<2x15xf32>
      %272 = tpu.concatenate %270, %271 in 1 : vector<2x241xf32>, vector<2x15xf32> -> vector<2x256xf32>
      %273 = arith.andi %142, %151 : vector<1x256xi1>
      %274 = arith.extui %273 : vector<1x256xi1> to vector<1x256xi32>
      %275 = arith.sitofp %274 : vector<1x256xi32> to vector<1x256xf32>
      %c6_76 = arith.constant 6 : index
      %276 = memref.load %arg4[%c6_76] : memref<18xf32, #tpu.memory_space<smem>>
      %277 = vector.extract_strided_slice %272 {offsets = [0, 0], sizes = [1, 256], strides = [1, 1]} : vector<2x256xf32> to vector<1x256xf32>
      %278 = vector.broadcast %276 : f32 to vector<1x256xf32>
      %279 = arith.mulf %278, %277 : vector<1x256xf32>
      %c15 = arith.constant 15 : index
      %280 = memref.load %arg4[%c15] : memref<18xf32, #tpu.memory_space<smem>>
      %281 = vector.extract_strided_slice %272 {offsets = [1, 0], sizes = [1, 256], strides = [1, 1]} : vector<2x256xf32> to vector<1x256xf32>
      %282 = vector.broadcast %280 : f32 to vector<1x256xf32>
      %283 = arith.mulf %282, %281 : vector<1x256xf32>
      %284 = arith.addf %279, %283 : vector<1x256xf32>
      %285 = arith.mulf %275, %284 : vector<1x256xf32>
      %286 = arith.addf %269, %285 : vector<1x256xf32>
      %287 = vector.extract_strided_slice %105 {offsets = [0, 16], sizes = [2, 240], strides = [1, 1]} : vector<2x256xf32> to vector<2x240xf32>
      %288 = vector.extract_strided_slice %105 {offsets = [0, 0], sizes = [2, 16], strides = [1, 1]} : vector<2x256xf32> to vector<2x16xf32>
      %289 = tpu.concatenate %287, %288 in 1 : vector<2x240xf32>, vector<2x16xf32> -> vector<2x256xf32>
      %290 = arith.andi %142, %160 : vector<1x256xi1>
      %291 = arith.extui %290 : vector<1x256xi1> to vector<1x256xi32>
      %292 = arith.sitofp %291 : vector<1x256xi32> to vector<1x256xf32>
      %c7 = arith.constant 7 : index
      %293 = memref.load %arg4[%c7] : memref<18xf32, #tpu.memory_space<smem>>
      %294 = vector.extract_strided_slice %289 {offsets = [0, 0], sizes = [1, 256], strides = [1, 1]} : vector<2x256xf32> to vector<1x256xf32>
      %295 = vector.broadcast %293 : f32 to vector<1x256xf32>
      %296 = arith.mulf %295, %294 : vector<1x256xf32>
      %c16 = arith.constant 16 : index
      %297 = memref.load %arg4[%c16] : memref<18xf32, #tpu.memory_space<smem>>
      %298 = vector.extract_strided_slice %289 {offsets = [1, 0], sizes = [1, 256], strides = [1, 1]} : vector<2x256xf32> to vector<1x256xf32>
      %299 = vector.broadcast %297 : f32 to vector<1x256xf32>
      %300 = arith.mulf %299, %298 : vector<1x256xf32>
      %301 = arith.addf %296, %300 : vector<1x256xf32>
      %302 = arith.mulf %292, %301 : vector<1x256xf32>
      %303 = arith.addf %286, %302 : vector<1x256xf32>
      %304 = vector.extract_strided_slice %105 {offsets = [0, 17], sizes = [2, 239], strides = [1, 1]} : vector<2x256xf32> to vector<2x239xf32>
      %305 = vector.extract_strided_slice %105 {offsets = [0, 0], sizes = [2, 17], strides = [1, 1]} : vector<2x256xf32> to vector<2x17xf32>
      %306 = tpu.concatenate %304, %305 in 1 : vector<2x239xf32>, vector<2x17xf32> -> vector<2x256xf32>
      %307 = arith.andi %142, %169 : vector<1x256xi1>
      %308 = arith.extui %307 : vector<1x256xi1> to vector<1x256xi32>
      %309 = arith.sitofp %308 : vector<1x256xi32> to vector<1x256xf32>
      %c8 = arith.constant 8 : index
      %310 = memref.load %arg4[%c8] : memref<18xf32, #tpu.memory_space<smem>>
      %311 = vector.extract_strided_slice %306 {offsets = [0, 0], sizes = [1, 256], strides = [1, 1]} : vector<2x256xf32> to vector<1x256xf32>
      %312 = vector.broadcast %310 : f32 to vector<1x256xf32>
      %313 = arith.mulf %312, %311 : vector<1x256xf32>
      %c17 = arith.constant 17 : index
      %314 = memref.load %arg4[%c17] : memref<18xf32, #tpu.memory_space<smem>>
      %315 = vector.extract_strided_slice %306 {offsets = [1, 0], sizes = [1, 256], strides = [1, 1]} : vector<2x256xf32> to vector<1x256xf32>
      %316 = vector.broadcast %314 : f32 to vector<1x256xf32>
      %317 = arith.mulf %316, %315 : vector<1x256xf32>
      %318 = arith.addf %313, %317 : vector<1x256xf32>
      %319 = arith.mulf %309, %318 : vector<1x256xf32>
      %320 = arith.addf %303, %319 : vector<1x256xf32>
      %cst_77 = arith.constant 0.000000e+00 : f32
      %321 = vector.broadcast %cst_77 : f32 to vector<1x256xf32>
      %322 = arith.subf %321, %320 : vector<1x256xf32>
      %323 = math.exp %322 : vector<1x256xf32>
      %cst_78 = arith.constant 1.000000e+00 : f32
      %324 = vector.broadcast %cst_78 : f32 to vector<1x256xf32>
      %325 = arith.addf %324, %323 : vector<1x256xf32>
      %cst_79 = arith.constant 1.000000e+00 : f32
      %326 = vector.broadcast %cst_79 : f32 to vector<1x256xf32>
      %327 = arith.divf %326, %325 : vector<1x256xf32>
      %c0_80 = arith.constant 0 : index
      %c0_81 = arith.constant 0 : index
      %328 = vector.load %arg15[%c0_80, %c0_81] : memref<1x256xf32, #tpu.memory_space<vmem>>, vector<1x256xf32>
      tpu.vector_store %arg15[%c0_80, %c0_81], %327 {strides = array<i32>} : memref<1x256xf32, #tpu.memory_space<vmem>>, vector<1x256xf32>,
      %c0_82 = arith.constant 0 : index
      %c0_83 = arith.constant 0 : index
      %329 = vector.load %arg7[%c0_82, %c0_83] : memref<8x8xf32, #tpu.memory_space<vmem>>, vector<8x8xf32>
      %cst_84 = arith.constant dense<0.000000e+00> : vector<8x256xf32>
      %330 = tpu.matmul %329, %97, %cst_84 {dimension_numbers = #tpu.dot_dimension_numbers<[1], [0], [0], [1], [0, 0, 1, 1], [], []>} : vector<8x8xf32>, vector<8x256xf32>, vector<8x256xf32> -> vector<8x256xf32>
      %c0_85 = arith.constant 0 : index
      %c0_86 = arith.constant 0 : index
      %331 = vector.load %arg8[%c0_85, %c0_86] : memref<8x1xf32, #tpu.memory_space<vmem>>, vector<8x1xf32>
      %332 = vector.broadcast %331 : vector<8x1xf32> to vector<8x256xf32>
      %333 = arith.addf %330, %332 : vector<8x256xf32>
      %334 = vector.extract_strided_slice %333 {offsets = [0, 1], sizes = [8, 255], strides = [1, 1]} : vector<8x256xf32> to vector<8x255xf32>
      %335 = vector.extract_strided_slice %333 {offsets = [0, 0], sizes = [8, 1], strides = [1, 1]} : vector<8x256xf32> to vector<8x1xf32>
      %336 = tpu.concatenate %334, %335 in 1 : vector<8x255xf32>, vector<8x1xf32> -> vector<8x256xf32>
      %337 = arith.maximumf %333, %336 : vector<8x256xf32>
      %338 = vector.extract_strided_slice %333 {offsets = [0, 16], sizes = [8, 240], strides = [1, 1]} : vector<8x256xf32> to vector<8x240xf32>
      %339 = vector.extract_strided_slice %333 {offsets = [0, 0], sizes = [8, 16], strides = [1, 1]} : vector<8x256xf32> to vector<8x16xf32>
      %340 = tpu.concatenate %338, %339 in 1 : vector<8x240xf32>, vector<8x16xf32> -> vector<8x256xf32>
      %341 = vector.extract_strided_slice %333 {offsets = [0, 17], sizes = [8, 239], strides = [1, 1]} : vector<8x256xf32> to vector<8x239xf32>
      %342 = vector.extract_strided_slice %333 {offsets = [0, 0], sizes = [8, 17], strides = [1, 1]} : vector<8x256xf32> to vector<8x17xf32>
      %343 = tpu.concatenate %341, %342 in 1 : vector<8x239xf32>, vector<8x17xf32> -> vector<8x256xf32>
      %344 = arith.maximumf %340, %343 : vector<8x256xf32>
      %345 = arith.maximumf %337, %344 : vector<8x256xf32>
      %c0_87 = arith.constant 0 : index
      %c0_88 = arith.constant 0 : index
      %346 = vector.load %arg9[%c0_87, %c0_88] : memref<256x64xf32, #tpu.memory_space<vmem>>, vector<256x64xf32>
      %cst_89 = arith.constant dense<0.000000e+00> : vector<8x64xf32>
      %347 = tpu.matmul %345, %346, %cst_89 {dimension_numbers = #tpu.dot_dimension_numbers<[1], [0], [0], [1], [0, 0, 1, 1], [], []>} : vector<8x256xf32>, vector<256x64xf32>, vector<8x64xf32> -> vector<8x64xf32>
      %348 = vector.extract_strided_slice %347 {offsets = [0, 0], sizes = [4, 64], strides = [1, 1]} : vector<8x64xf32> to vector<4x64xf32>
      %c0_90 = arith.constant 0 : index
      %c0_91 = arith.constant 0 : index
      %349 = vector.load %arg16[%c0_90, %c0_91] : memref<4x64xf32, #tpu.memory_space<vmem>>, vector<4x64xf32>
      tpu.vector_store %arg16[%c0_90, %c0_91], %348 {strides = array<i32>} : memref<4x64xf32, #tpu.memory_space<vmem>>, vector<4x64xf32>,
      %350 = vector.extract_strided_slice %347 {offsets = [4, 0], sizes = [4, 64], strides = [1, 1]} : vector<8x64xf32> to vector<4x64xf32>
      %c0_92 = arith.constant 0 : index
      %c0_93 = arith.constant 0 : index
      %351 = vector.load %arg17[%c0_92, %c0_93] : memref<4x64xf32, #tpu.memory_space<vmem>>, vector<4x64xf32>
      tpu.vector_store %arg17[%c0_92, %c0_93], %350 {strides = array<i32>} : memref<4x64xf32, #tpu.memory_space<vmem>>, vector<4x64xf32>,
    } else {
    }
    %c256_i32 = arith.constant 256 : i32
    %3 = arith.muli %arg1, %c256_i32 : i32
    %4 = tpu.assume_multiple %3, 256 : i32
    %c0 = arith.constant 0 : index
    %5 = arith.index_cast %4 : i32 to index
    %6 = vector.load %arg14[%c0, %5] : memref<8x256xf32, #tpu.memory_space<vmem>>, vector<8x256xf32>
    %c0_1 = arith.constant 0 : index
    %c0_2 = arith.constant 0 : index
    %7 = vector.load %arg5[%c0_1, %c0_2] : memref<4x8xf32, #tpu.memory_space<vmem>>, vector<4x8xf32>
    %cst = arith.constant dense<0.000000e+00> : vector<4x256xf32>
    %8 = tpu.matmul %7, %6, %cst {dimension_numbers = #tpu.dot_dimension_numbers<[1], [0], [0], [1], [0, 0, 1, 1], [], []>} : vector<4x8xf32>, vector<8x256xf32>, vector<4x256xf32> -> vector<4x256xf32>
    %c0_3 = arith.constant 0 : index
    %c0_4 = arith.constant 0 : index
    %9 = vector.load %arg6[%c0_3, %c0_4] : memref<4x1xf32, #tpu.memory_space<vmem>>, vector<4x1xf32>
    %10 = vector.broadcast %9 : vector<4x1xf32> to vector<4x256xf32>
    %11 = arith.addf %8, %10 : vector<4x256xf32>
    %c0_5 = arith.constant 0 : index
    %c0_6 = arith.constant 0 : index
    %12 = vector.load %arg16[%c0_5, %c0_6] : memref<4x64xf32, #tpu.memory_space<vmem>>, vector<4x64xf32>
    %cst_7 = arith.constant dense<0.000000e+00> : vector<256x64xf32>
    %13 = tpu.matmul %11, %12, %cst_7 {dimension_numbers = #tpu.dot_dimension_numbers<[0], [0], [1], [1], [0, 1, 1, 1], [], []>} : vector<4x256xf32>, vector<4x64xf32>, vector<256x64xf32> -> vector<256x64xf32>
    %cst_8 = arith.constant dense<0xFF800000> : vector<256xf32>
    %14 = vector.multi_reduction <maximumf>, %13, %cst_8 [1] : vector<256x64xf32> to vector<256xf32>
    %15 = vector.shape_cast %14 : vector<256xf32> to vector<256x1xf32>
    %16 = vector.broadcast %15 : vector<256x1xf32> to vector<256x64xf32>
    %17 = arith.subf %13, %16 : vector<256x64xf32>
    %18 = math.exp %17 : vector<256x64xf32>
    %cst_9 = arith.constant dense<0.000000e+00> : vector<256xf32>
    %19 = vector.multi_reduction <add>, %18, %cst_9 [1] : vector<256x64xf32> to vector<256xf32>
    %20 = vector.shape_cast %19 : vector<256xf32> to vector<256x1xf32>
    %c0_10 = arith.constant 0 : index
    %c0_11 = arith.constant 0 : index
    %21 = vector.load %arg17[%c0_10, %c0_11] : memref<4x64xf32, #tpu.memory_space<vmem>>, vector<4x64xf32>
    %cst_12 = arith.constant dense<0.000000e+00> : vector<256x4xf32>
    %22 = tpu.matmul %18, %21, %cst_12 {dimension_numbers = #tpu.dot_dimension_numbers<[1], [1], [0], [0], [0, 0, 1, 0], [], []>} : vector<256x64xf32>, vector<4x64xf32>, vector<256x4xf32> -> vector<256x4xf32>
    %23 = tpu.reciprocal %20 {approx = true} : vector<256x1xf32> -> vector<256x1xf32>
    %24 = vector.broadcast %23 : vector<256x1xf32> to vector<256x4xf32>
    %25 = arith.mulf %22, %24 : vector<256x4xf32>
    %c0_13 = arith.constant 0 : index
    %c0_14 = arith.constant 0 : index
    %26 = vector.load %arg10[%c0_13, %c0_14] : memref<8x4xf32, #tpu.memory_space<vmem>>, vector<8x4xf32>
    %cst_15 = arith.constant dense<0.000000e+00> : vector<8x256xf32>
    %27 = tpu.matmul %26, %25, %cst_15 {dimension_numbers = #tpu.dot_dimension_numbers<[1], [1], [0], [0], [0, 0, 1, 0], [], []>} : vector<8x4xf32>, vector<256x4xf32>, vector<8x256xf32> -> vector<8x256xf32>
    %c0_16 = arith.constant 0 : index
    %c0_17 = arith.constant 0 : index
    %28 = vector.load %arg11[%c0_16, %c0_17] : memref<8x1xf32, #tpu.memory_space<vmem>>, vector<8x1xf32>
    %29 = vector.broadcast %28 : vector<8x1xf32> to vector<8x256xf32>
    %30 = arith.addf %27, %29 : vector<8x256xf32>
    %31 = arith.addf %30, %6 : vector<8x256xf32>
    %c0_18 = arith.constant 0 : index
    %c0_19 = arith.constant 0 : index
    %c0_20 = arith.constant 0 : index
    %32 = vector.load %arg12[%c0_18, %c0_19, %c0_20] : memref<1x8x256xf32, #tpu.memory_space<vmem>>, vector<1x8x256xf32>
    %33 = vector.shape_cast %32 : vector<1x8x256xf32> to vector<8x256xf32>
    %34 = vector.shape_cast %31 : vector<8x256xf32> to vector<1x8x256xf32>
    tpu.vector_store %arg12[%c0_18, %c0_19, %c0_20], %34 {strides = array<i32>} : memref<1x8x256xf32, #tpu.memory_space<vmem>>, vector<1x8x256xf32>,
    %c0_21 = arith.constant 0 : index
    %35 = arith.index_cast %4 : i32 to index
    %36 = vector.load %arg15[%c0_21, %35] : memref<1x256xf32, #tpu.memory_space<vmem>>, vector<1x256xf32>
    %37 = vector.broadcast %36 : vector<1x256xf32> to vector<8x256xf32>
    %38 = arith.mulf %6, %37 : vector<8x256xf32>
    %c0_22 = arith.constant 0 : index
    %c0_23 = arith.constant 0 : index
    %c0_24 = arith.constant 0 : index
    %39 = vector.load %arg13[%c0_22, %c0_23, %c0_24] : memref<1x8x256xf32, #tpu.memory_space<vmem>>, vector<1x8x256xf32>
    %40 = vector.shape_cast %39 : vector<1x8x256xf32> to vector<8x256xf32>
    %41 = vector.shape_cast %38 : vector<8x256xf32> to vector<1x8x256xf32>
    tpu.vector_store %arg13[%c0_22, %c0_23, %c0_24], %41 {strides = array<i32>} : memref<1x8x256xf32, #tpu.memory_space<vmem>>, vector<1x8x256xf32>,
    return
  }
  func.func @transform_0(%arg0: i32, %arg1: i32) -> (i32, i32, i32) {
    %c0_i32 = arith.constant 0 : i32
    %c0_i32_0 = arith.constant 0 : i32
    %c0_i32_1 = arith.constant 0 : i32
    return %arg0, %c0_i32, %c0_i32_0 : i32, i32, i32
  }
  func.func @transform_1(%arg0: i32, %arg1: i32) -> i32 {
    %c0_i32 = arith.constant 0 : i32
    %c0_i32_0 = arith.constant 0 : i32
    return %c0_i32 : i32
  }
  func.func @transform_2(%arg0: i32, %arg1: i32) -> i32 {
    %c0_i32 = arith.constant 0 : i32
    %c0_i32_0 = arith.constant 0 : i32
    return %c0_i32 : i32
  }
  func.func @transform_3(%arg0: i32, %arg1: i32) -> (i32, i32) {
    %c0_i32 = arith.constant 0 : i32
    %c0_i32_0 = arith.constant 0 : i32
    %c0_i32_1 = arith.constant 0 : i32
    return %c0_i32, %c0_i32_0 : i32, i32
  }
  func.func @transform_4(%arg0: i32, %arg1: i32) -> (i32, i32) {
    %c0_i32 = arith.constant 0 : i32
    %c0_i32_0 = arith.constant 0 : i32
    %c0_i32_1 = arith.constant 0 : i32
    return %c0_i32, %c0_i32_0 : i32, i32
  }
  func.func @transform_5(%arg0: i32, %arg1: i32) -> (i32, i32) {
    %c0_i32 = arith.constant 0 : i32
    %c0_i32_0 = arith.constant 0 : i32
    %c0_i32_1 = arith.constant 0 : i32
    return %c0_i32, %c0_i32_0 : i32, i32
  }
  func.func @transform_6(%arg0: i32, %arg1: i32) -> (i32, i32) {
    %c0_i32 = arith.constant 0 : i32
    %c0_i32_0 = arith.constant 0 : i32
    %c0_i32_1 = arith.constant 0 : i32
    return %c0_i32, %c0_i32_0 : i32, i32
  }
  func.func @transform_7(%arg0: i32, %arg1: i32) -> (i32, i32) {
    %c0_i32 = arith.constant 0 : i32
    %c0_i32_0 = arith.constant 0 : i32
    %c0_i32_1 = arith.constant 0 : i32
    return %c0_i32, %c0_i32_0 : i32, i32
  }
  func.func @transform_8(%arg0: i32, %arg1: i32) -> (i32, i32) {
    %c0_i32 = arith.constant 0 : i32
    %c0_i32_0 = arith.constant 0 : i32
    %c0_i32_1 = arith.constant 0 : i32
    return %c0_i32, %c0_i32_0 : i32, i32
  }
  func.func @transform_9(%arg0: i32, %arg1: i32) -> (i32, i32) {
    %c0_i32 = arith.constant 0 : i32
    %c0_i32_0 = arith.constant 0 : i32
    %c0_i32_1 = arith.constant 0 : i32
    return %c0_i32, %c0_i32_0 : i32, i32
  }
  func.func @transform_10(%arg0: i32, %arg1: i32) -> (i32, i32, i32) {
    %c0_i32 = arith.constant 0 : i32
    %c0_i32_0 = arith.constant 0 : i32
    return %arg0, %c0_i32, %arg1 : i32, i32, i32
  }
  func.func @transform_11(%arg0: i32, %arg1: i32) -> (i32, i32, i32) {
    %c0_i32 = arith.constant 0 : i32
    %c0_i32_0 = arith.constant 0 : i32
    return %arg0, %c0_i32, %arg1 : i32, i32, i32
  }
}

</mosaic_0001>

<llo_original>
// kernel: _lambda_.1
$region0: #{_lambda_.1}
  #allocation0 [shape = 'u32[]', space=smem, size = 0x4, offset = 0x4, fixed_abs, tag = 'smem constant byte address 0x4 - core index']
  #allocation1 [shape = 'u32[144,128]{1,0:T(1,128)}', space=vmem, size = 0x12000, scoped, tag = 'internal scratch']
  #allocation2 [shape = 'f32[8,256]{1,0:T(8,128)}', space=vmem, size = 0x2000, scoped, tag = 'scratch operand']
  #allocation3 [shape = 'f32[1,256]{1,0:T(1,128)}', space=vmem, size = 0x400, scoped, tag = 'scratch operand']
  #allocation4 [shape = 'f32[4,64]{1,0:T(4,128)}', space=vmem, size = 0x800, scoped, tag = 'scratch operand']
  #allocation5 [shape = 'f32[4,64]{1,0:T(4,128)}', space=vmem, size = 0x800, scoped, tag = 'scratch operand']
  %s0 = inlined_call_operand.vmem [shape: f32[2,8,256], index: 0, kind: input, shape index: {}]
  %s1 = inlined_call_operand.vmem [shape: f32[7], index: 1, kind: input, shape index: {}]
  %s2 = inlined_call_operand.vmem [shape: f32[18], index: 2, kind: input, shape index: {}]
  %s3 = inlined_call_operand.vmem [shape: f32[4,8], index: 3, kind: input, shape index: {}]
  %s4 = inlined_call_operand.vmem [shape: f32[4,1], index: 4, kind: input, shape index: {}]
  %s5 = inlined_call_operand.vmem [shape: f32[8,8], index: 5, kind: input, shape index: {}]
  %s6 = inlined_call_operand.vmem [shape: f32[8,1], index: 6, kind: input, shape index: {}]
  %s7 = inlined_call_operand.vmem [shape: f32[256,64], index: 7, kind: input, shape index: {}]
  %s8 = inlined_call_operand.vmem [shape: f32[8,4], index: 8, kind: input, shape index: {}]
  %s9 = inlined_call_operand.vmem [shape: f32[8,1], index: 9, kind: input, shape index: {}]
  %s10 = inlined_call_operand.vmem [shape: f32[2,8,256], index: 10, kind: output, shape index: {0}]
  %s11 = inlined_call_operand.vmem [shape: f32[2,8,256], index: 11, kind: output, shape index: {1}]
  %12 = xla_tuple %s10, %s11
  %s13 = sld [smem:[#allocation0]]
  $region93: #{_lambda_.1} parent=0
    _
  %s15 = ssub.s32 1, %s13
  %s16 = scalar_select 0, %s15, %s13
  $region1: #{_lambda_.1} parent=0
    #allocation6 [shape = 'u8[512]{0}', space=smem, size = 0x200, scoped, tag = 'input window, operand 1, single buffered']
    #allocation7 [shape = 's32[2]{0}', space=sflag, size = 0x8, scoped, tag = 'scoped memory for _lambda_.1']
    #allocation8 [shape = 'u8[512]{0}', space=smem, size = 0x200, scoped, tag = 'input window, operand 2, single buffered']
    #allocation9 [shape = 's32[1]{0}', space=sflag, size = 0x4, scoped, tag = 'scoped memory for _lambda_.1']
    %17 = vsyncpa [#allocation7], 0
    %18 = vsyncpa [#allocation9], 0
    loop: start=0, step=1, limit=4
    $region2: #{_lambda_.1} parent=1 // loop_pre_header
      _
    $region3: #{_lambda_.1} parent=1 // loop_header
      %s20 = sphi 0, %s24
      %p21 = scmp.ge.s32.totalorder %s20, 4
      %s27 = sphi 0, %s39
      %s28 = sphi 0, %s35
      %s29 = sphi 0, %s27
      %s30 = sphi 0, %s28
      %s31 = sphi 0, %s29
      %s32 = sphi 0, %s30
      %s42 = sphi 0, %s44
      %s45 = sphi 0, %s42
      %s46 = sphi 0, %s45
      %s62 = sphi 0, %s46
      %s66 = sphi 0, %s66
      %s68 = sphi 0, %s66
      %s69 = sphi 0, %s68
      %s83 = sphi 0, %s69
      %s87 = sphi 0, %s87
      %s89 = sphi 0, %s87
      %s90 = sphi 0, %s89
      %s104 = sphi 0, %s90
      %s108 = sphi 0, %s108
      %s110 = sphi 0, %s108
      %s111 = sphi 0, %s110
      %s125 = sphi 0, %s111
      %s129 = sphi 0, %s129
      %s131 = sphi 0, %s129
      %s132 = sphi 0, %s131
      %s146 = sphi 0, %s132
      %s150 = sphi 0, %s150
      %s152 = sphi 0, %s150
      %s153 = sphi 0, %s152
      %s167 = sphi 0, %s153
      %s171 = sphi 0, %s171
      %s173 = sphi 0, %s171
      %s174 = sphi 0, %s173
      %s188 = sphi 0, %s174
      %s192 = sphi 0, %s192
      %s194 = sphi 0, %s192
      %s195 = sphi 0, %s194
      %s209 = sphi 0, %s195
      %s213 = sphi 0, %s213
      %s215 = sphi 0, %s213
      %s216 = sphi 0, %s215
      %s230 = sphi 0, %s216
      %s234 = sphi 0, %s234
      %s236 = sphi 0, %s234
      %s237 = sphi 0, %s236
      %s251 = sphi 0, %s237
      %s259 = sphi 0, %s261
      %s262 = sphi 0, %s259
      %s263 = sphi 0, %s262
      %s279 = sphi 0, %s263
      %s287 = sphi 0, %s289
      %s290 = sphi 0, %s287
      %s291 = sphi 0, %s290
      %s307 = sphi 0, %s291
    $region4: #{_lambda_.1} parent=1 // loop_header_branch
      %23 = sbr.rel (%p21) target = $region8
    $region5: #{_lambda_.1} parent=1 // loop_body
      %s25 = ssub.s32 %s20, 1
      %s26 = ssub.s32 %s20, 2
      %s33 = sadd.s32 1, %s28
      %p34 = scmp.ge.s32.totalorder %s33, 1
      %s35 = scalar_select %p34, 0, %s33
      %s36 = sadd.s32 1, %s27
      %s37 = scalar_select %p34, %s36, %s27
      %p38 = scmp.ge.s32.totalorder %s37, 2
      %s39 = scalar_select %p38, 0, %s37
      %s40 = ssub.s32 %s27, %s39
      %p41 = scmp.eq.s32.totalorder %s40, 0
      %s43 = sadd.s32 %s42, 1
      %s44 = scalar_select %p41, %s42, %s43
      %p47 = pneg %p41
      %p48 = scmp.eq.s32.totalorder %s20, 1
      %p49 = por %p47, %p48
      %p50 = scmp.ne.s32.totalorder %s42, %s45
      %p51 = scmp.eq.s32.totalorder %s20, 0
      %p52 = por %p50, %p51
      %p53 = scmp.ne.s32.totalorder %s42, %s45
      %p54 = scmp.eq.s32.totalorder %s25, 1
      %p55 = por %p53, %p54
      %p56 = scmp.ne.s32.totalorder %s45, %s46
      %p57 = scmp.eq.s32.totalorder %s25, 0
      %p58 = por %p56, %p57
      %p59 = scmp.ne.s32.totalorder %s45, %s46
      %p60 = scmp.eq.s32.totalorder %s26, 1
      %p61 = por %p59, %p60
      %p63 = scmp.ne.s32.totalorder %s46, %s62
      %p64 = scmp.eq.s32.totalorder %s26, 0
      %p65 = por %p63, %p64
      %s67 = sadd.s32 %s66, 1
      %p70 = scmp.eq.s32.totalorder %s20, 1
      %p71 = scmp.ne.s32.totalorder %s66, %s68
      %p72 = scmp.eq.s32.totalorder %s20, 0
      %p73 = por %p71, %p72
      %p74 = scmp.ne.s32.totalorder %s66, %s68
      %p75 = scmp.eq.s32.totalorder %s25, 1
      %p76 = por %p74, %p75
      %p77 = scmp.ne.s32.totalorder %s68, %s69
      %p78 = scmp.eq.s32.totalorder %s25, 0
      %p79 = por %p77, %p78
      %p80 = scmp.ne.s32.totalorder %s68, %s69
      %p81 = scmp.eq.s32.totalorder %s26, 1
      %p82 = por %p80, %p81
      %p84 = scmp.ne.s32.totalorder %s69, %s83
      %p85 = scmp.eq.s32.totalorder %s26, 0
      %p86 = por %p84, %p85
      %s88 = sadd.s32 %s87, 1
      %p91 = scmp.eq.s32.totalorder %s20, 1
      %p92 = scmp.ne.s32.totalorder %s87, %s89
      %p93 = scmp.eq.s32.totalorder %s20, 0
      %p94 = por %p92, %p93
      %p95 = scmp.ne.s32.totalorder %s87, %s89
      %p96 = scmp.eq.s32.totalorder %s25, 1
      %p97 = por %p95, %p96
      %p98 = scmp.ne.s32.totalorder %s89, %s90
      %p99 = scmp.eq.s32.totalorder %s25, 0
      %p100 = por %p98, %p99
      %p101 = scmp.ne.s32.totalorder %s89, %s90
      %p102 = scmp.eq.s32.totalorder %s26, 1
      %p103 = por %p101, %p102
      %p105 = scmp.ne.s32.totalorder %s90, %s104
      %p106 = scmp.eq.s32.totalorder %s26, 0
      %p107 = por %p105, %p106
      %s109 = sadd.s32 %s108, 1
      %p112 = scmp.eq.s32.totalorder %s20, 1
      %p113 = scmp.ne.s32.totalorder %s108, %s110
      %p114 = scmp.eq.s32.totalorder %s20, 0
      %p115 = por %p113, %p114
      %p116 = scmp.ne.s32.totalorder %s108, %s110
      %p117 = scmp.eq.s32.totalorder %s25, 1
      %p118 = por %p116, %p117
      %p119 = scmp.ne.s32.totalorder %s110, %s111
      %p120 = scmp.eq.s32.totalorder %s25, 0
      %p121 = por %p119, %p120
      %p122 = scmp.ne.s32.totalorder %s110, %s111
      %p123 = scmp.eq.s32.totalorder %s26, 1
      %p124 = por %p122, %p123
      %p126 = scmp.ne.s32.totalorder %s111, %s125
      %p127 = scmp.eq.s32.totalorder %s26, 0
      %p128 = por %p126, %p127
      %s130 = sadd.s32 %s129, 1
      %p133 = scmp.eq.s32.totalorder %s20, 1
      %p134 = scmp.ne.s32.totalorder %s129, %s131
      %p135 = scmp.eq.s32.totalorder %s20, 0
      %p136 = por %p134, %p135
      %p137 = scmp.ne.s32.totalorder %s129, %s131
      %p138 = scmp.eq.s32.totalorder %s25, 1
      %p139 = por %p137, %p138
      %p140 = scmp.ne.s32.totalorder %s131, %s132
      %p141 = scmp.eq.s32.totalorder %s25, 0
      %p142 = por %p140, %p141
      %p143 = scmp.ne.s32.totalorder %s131, %s132
      %p144 = scmp.eq.s32.totalorder %s26, 1
      %p145 = por %p143, %p144
      %p147 = scmp.ne.s32.totalorder %s132, %s146
      %p148 = scmp.eq.s32.totalorder %s26, 0
      %p149 = por %p147, %p148
      %s151 = sadd.s32 %s150, 1
      %p154 = scmp.eq.s32.totalorder %s20, 1
      %p155 = scmp.ne.s32.totalorder %s150, %s152
      %p156 = scmp.eq.s32.totalorder %s20, 0
      %p157 = por %p155, %p156
      %p158 = scmp.ne.s32.totalorder %s150, %s152
      %p159 = scmp.eq.s32.totalorder %s25, 1
      %p160 = por %p158, %p159
      %p161 = scmp.ne.s32.totalorder %s152, %s153
      %p162 = scmp.eq.s32.totalorder %s25, 0
      %p163 = por %p161, %p162
      %p164 = scmp.ne.s32.totalorder %s152, %s153
      %p165 = scmp.eq.s32.totalorder %s26, 1
      %p166 = por %p164, %p165
      %p168 = scmp.ne.s32.totalorder %s153, %s167
      %p169 = scmp.eq.s32.totalorder %s26, 0
      %p170 = por %p168, %p169
      %s172 = sadd.s32 %s171, 1
      %p175 = scmp.eq.s32.totalorder %s20, 1
      %p176 = scmp.ne.s32.totalorder %s171, %s173
      %p177 = scmp.eq.s32.totalorder %s20, 0
      %p178 = por %p176, %p177
      %p179 = scmp.ne.s32.totalorder %s171, %s173
      %p180 = scmp.eq.s32.totalorder %s25, 1
      %p181 = por %p179, %p180
      %p182 = scmp.ne.s32.totalorder %s173, %s174
      %p183 = scmp.eq.s32.totalorder %s25, 0
      %p184 = por %p182, %p183
      %p185 = scmp.ne.s32.totalorder %s173, %s174
      %p186 = scmp.eq.s32.totalorder %s26, 1
      %p187 = por %p185, %p186
      %p189 = scmp.ne.s32.totalorder %s174, %s188
      %p190 = scmp.eq.s32.totalorder %s26, 0
      %p191 = por %p189, %p190
      %s193 = sadd.s32 %s192, 1
      %p196 = scmp.eq.s32.totalorder %s20, 1
      %p197 = scmp.ne.s32.totalorder %s192, %s194
      %p198 = scmp.eq.s32.totalorder %s20, 0
      %p199 = por %p197, %p198
      %p200 = scmp.ne.s32.totalorder %s192, %s194
      %p201 = scmp.eq.s32.totalorder %s25, 1
      %p202 = por %p200, %p201
      %p203 = scmp.ne.s32.totalorder %s194, %s195
      %p204 = scmp.eq.s32.totalorder %s25, 0
      %p205 = por %p203, %p204
      %p206 = scmp.ne.s32.totalorder %s194, %s195
      %p207 = scmp.eq.s32.totalorder %s26, 1
      %p208 = por %p206, %p207
      %p210 = scmp.ne.s32.totalorder %s195, %s209
      %p211 = scmp.eq.s32.totalorder %s26, 0
      %p212 = por %p210, %p211
      %s214 = sadd.s32 %s213, 1
      %p217 = scmp.eq.s32.totalorder %s20, 1
      %p218 = scmp.ne.s32.totalorder %s213, %s215
      %p219 = scmp.eq.s32.totalorder %s20, 0
      %p220 = por %p218, %p219
      %p221 = scmp.ne.s32.totalorder %s213, %s215
      %p222 = scmp.eq.s32.totalorder %s25, 1
      %p223 = por %p221, %p222
      %p224 = scmp.ne.s32.totalorder %s215, %s216
      %p225 = scmp.eq.s32.totalorder %s25, 0
      %p226 = por %p224, %p225
      %p227 = scmp.ne.s32.totalorder %s215, %s216
      %p228 = scmp.eq.s32.totalorder %s26, 1
      %p229 = por %p227, %p228
      %p231 = scmp.ne.s32.totalorder %s216, %s230
      %p232 = scmp.eq.s32.totalorder %s26, 0
      %p233 = por %p231, %p232
      %s235 = sadd.s32 %s234, 1
      %p238 = scmp.eq.s32.totalorder %s20, 1
      %p239 = scmp.ne.s32.totalorder %s234, %s236
      %p240 = scmp.eq.s32.totalorder %s20, 0
      %p241 = por %p239, %p240
      %p242 = scmp.ne.s32.totalorder %s234, %s236
      %p243 = scmp.eq.s32.totalorder %s25, 1
      %p244 = por %p242, %p243
      %p245 = scmp.ne.s32.totalorder %s236, %s237
      %p246 = scmp.eq.s32.totalorder %s25, 0
      %p247 = por %p245, %p246
      %p248 = scmp.ne.s32.totalorder %s236, %s237
      %p249 = scmp.eq.s32.totalorder %s26, 1
      %p250 = por %p248, %p249
      %p252 = scmp.ne.s32.totalorder %s237, %s251
      %p253 = scmp.eq.s32.totalorder %s26, 0
      %p254 = por %p252, %p253
      %s255 = ssub.s32 %s27, %s39
      %s256 = ssub.s32 %s28, %s35
      %s257 = sor.u32 %s255, %s256
      %p258 = scmp.eq.s32.totalorder %s257, 0
      %s260 = sadd.s32 %s259, 1
      %s261 = scalar_select %p258, %s259, %s260
      %p264 = pneg %p258
      %p265 = scmp.eq.s32.totalorder %s20, 1
      %p266 = por %p264, %p265
      %p267 = scmp.ne.s32.totalorder %s259, %s262
      %p268 = scmp.eq.s32.totalorder %s20, 0
      %p269 = por %p267, %p268
      %p270 = scmp.ne.s32.totalorder %s259, %s262
      %p271 = scmp.eq.s32.totalorder %s25, 1
      %p272 = por %p270, %p271
      %p273 = scmp.ne.s32.totalorder %s262, %s263
      %p274 = scmp.eq.s32.totalorder %s25, 0
      %p275 = por %p273, %p274
      %p276 = scmp.ne.s32.totalorder %s262, %s263
      %p277 = scmp.eq.s32.totalorder %s26, 1
      %p278 = por %p276, %p277
      %p280 = scmp.ne.s32.totalorder %s263, %s279
      %p281 = scmp.eq.s32.totalorder %s26, 0
      %p282 = por %p280, %p281
      %s283 = ssub.s32 %s27, %s39
      %s284 = ssub.s32 %s28, %s35
      %s285 = sor.u32 %s283, %s284
      %p286 = scmp.eq.s32.totalorder %s285, 0
      %s288 = sadd.s32 %s287, 1
      %s289 = scalar_select %p286, %s287, %s288
      %p292 = pneg %p286
      %p293 = scmp.eq.s32.totalorder %s20, 1
      %p294 = por %p292, %p293
      %p295 = scmp.ne.s32.totalorder %s287, %s290
      %p296 = scmp.eq.s32.totalorder %s20, 0
      %p297 = por %p295, %p296
      %p298 = scmp.ne.s32.totalorder %s287, %s290
      %p299 = scmp.eq.s32.totalorder %s25, 1
      %p300 = por %p298, %p299
      %p301 = scmp.ne.s32.totalorder %s290, %s291
      %p302 = scmp.eq.s32.totalorder %s25, 0
      %p303 = por %p301, %p302
      %p304 = scmp.ne.s32.totalorder %s290, %s291
      %p305 = scmp.eq.s32.totalorder %s26, 1
      %p306 = por %p304, %p305
      %p308 = scmp.ne.s32.totalorder %s291, %s307
      %p309 = scmp.eq.s32.totalorder %s26, 0
      %p310 = por %p308, %p309
      %p311 = scmp.le.s32.totalorder 1, %s20
      %p312 = scmp.lt.s32.totalorder %s20, 3
      %p313 = pnand %p311, %p312
      %p314 = pneg %p313
      // Predicated region
      $region9: #{_lambda_.1} parent=5 // pred_check
        _
      $region10: #{_lambda_.1} parent=5 // pred_check_branch
        %316 = sbr.rel (%p313) target = $region12
      $region11: #{_lambda_.1} parent=5 // pred_region
        %s317 = ssub.s32 %s20, 1
        // Predicated region
        $region13: #{_lambda_.1} parent=11 // pred_check
          %p318 = pneg %p79
        $region14: #{_lambda_.1} parent=11 // pred_check_branch
          %320 = sbr.rel (%p318) target = $region16
        $region15: #{_lambda_.1} parent=11 // pred_region
          %s322 = ssub.s32 16, 16
          %323 = vsyncadd [#allocation7], %s322
          %s325 = sshll.u32 %s1, 4
          %s326 = int_to_ptr.vmem [resolvable:$true] %s325
          %328 = dma.vmem_to_smem %s326, 16, [#allocation6], [#allocation7]
        $region16: #{_lambda_.1} parent=11 // pred_fallthru
          _
        // Predicated region
        $region17: #{_lambda_.1} parent=11 // pred_check
          %p329 = pneg %p100
        $region18: #{_lambda_.1} parent=11 // pred_check_branch
          %331 = sbr.rel (%p329) target = $region20
        $region19: #{_lambda_.1} parent=11 // pred_region
          %s333 = ssub.s32 16, 16
          %334 = vsyncadd [#allocation9], %s333
          %s336 = sshll.u32 %s2, 4
          %s337 = int_to_ptr.vmem [resolvable:$true] %s336
          %339 = dma.vmem_to_smem %s337, 16, [#allocation8], [#allocation9]
        $region20: #{_lambda_.1} parent=11 // pred_fallthru
          _
        // Predicated region
        $region21: #{_lambda_.1} parent=11 // pred_check
          %p340 = pneg %p121
        $region22: #{_lambda_.1} parent=11 // pred_check_branch
          %342 = sbr.rel (%p340) target = $region24
        $region23: #{_lambda_.1} parent=11 // pred_region
          _
        $region24: #{_lambda_.1} parent=11 // pred_fallthru
          _
        // Predicated region
        $region25: #{_lambda_.1} parent=11 // pred_check
          %p343 = pneg %p142
        $region26: #{_lambda_.1} parent=11 // pred_check_branch
          %345 = sbr.rel (%p343) target = $region28
        $region27: #{_lambda_.1} parent=11 // pred_region
          _
        $region28: #{_lambda_.1} parent=11 // pred_fallthru
          _
        // Predicated region
        $region29: #{_lambda_.1} parent=11 // pred_check
          %p346 = pneg %p163
        $region30: #{_lambda_.1} parent=11 // pred_check_branch
          %348 = sbr.rel (%p346) target = $region32
        $region31: #{_lambda_.1} parent=11 // pred_region
          _
        $region32: #{_lambda_.1} parent=11 // pred_fallthru
          _
        // Predicated region
        $region33: #{_lambda_.1} parent=11 // pred_check
          %p349 = pneg %p184
        $region34: #{_lambda_.1} parent=11 // pred_check_branch
          %351 = sbr.rel (%p349) target = $region36
        $region35: #{_lambda_.1} parent=11 // pred_region
          _
        $region36: #{_lambda_.1} parent=11 // pred_fallthru
          _
        // Predicated region
        $region37: #{_lambda_.1} parent=11 // pred_check
          %p352 = pneg %p205
        $region38: #{_lambda_.1} parent=11 // pred_check_branch
          %354 = sbr.rel (%p352) target = $region40
        $region39: #{_lambda_.1} parent=11 // pred_region
          _
        $region40: #{_lambda_.1} parent=11 // pred_fallthru
          _
        // Predicated region
        $region41: #{_lambda_.1} parent=11 // pred_check
          %p355 = pneg %p226
        $region42: #{_lambda_.1} parent=11 // pred_check_branch
          %357 = sbr.rel (%p355) target = $region44
        $region43: #{_lambda_.1} parent=11 // pred_region
          _
        $region44: #{_lambda_.1} parent=11 // pred_fallthru
          _
        // Predicated region
        $region45: #{_lambda_.1} parent=11 // pred_check
          %p358 = pneg %p247
        $region46: #{_lambda_.1} parent=11 // pred_check_branch
          %360 = sbr.rel (%p358) target = $region48
        $region47: #{_lambda_.1} parent=11 // pred_region
          _
        $region48: #{_lambda_.1} parent=11 // pred_fallthru
          _
      $region12: #{_lambda_.1} parent=5 // pred_fallthru
        _
      %p361 = scmp.lt.s32.totalorder %s20, 2
      // Predicated region
      $region49: #{_lambda_.1} parent=5 // pred_check
        %p362 = pneg %p361
      $region50: #{_lambda_.1} parent=5 // pred_check_branch
        %364 = sbr.rel (%p362) target = $region52
      $region51: #{_lambda_.1} parent=5 // pred_region
        // Predicated region
        $region53: #{_lambda_.1} parent=51 // pred_check
          %p365 = pneg %p52
        $region54: #{_lambda_.1} parent=51 // pred_check_branch
          %367 = sbr.rel (%p365) target = $region56
        $region55: #{_lambda_.1} parent=51 // pred_region
          %p368 = scmp.lt.s32.totalorder %s27, 1
          %s369 = scalar_select %p368, %s27, 1
          %s370 = smul.addr %s369, 2
          %s371 = smul.addr %s370, 8
          %s372 = scalar_lea.vmem %s0, %s371
        $region56: #{_lambda_.1} parent=51 // pred_fallthru
          _
      $region52: #{_lambda_.1} parent=5 // pred_fallthru
        _
      %p373 = scmp.le.s32.totalorder 1, %s20
      %p374 = scmp.lt.s32.totalorder %s20, 3
      %p375 = pnand %p373, %p374
      %p376 = pneg %p375
      // Predicated region
      $region57: #{_lambda_.1} parent=5 // pred_check
        _
      $region58: #{_lambda_.1} parent=5 // pred_check_branch
        %378 = sbr.rel (%p375) target = $region60
      $region59: #{_lambda_.1} parent=5 // pred_region
        %s379 = ssub.s32 %s20, 1
        // Predicated region
        $region61: #{_lambda_.1} parent=59 // pred_check
          %p380 = pneg %p79
        $region62: #{_lambda_.1} parent=59 // pred_check_branch
          %382 = sbr.rel (%p380) target = $region64
        $region63: #{_lambda_.1} parent=59 // pred_region
          %383 = dma.done [#allocation7], 16
        $region64: #{_lambda_.1} parent=59 // pred_fallthru
          _
        // Predicated region
        $region65: #{_lambda_.1} parent=59 // pred_check
          %p384 = pneg %p100
        $region66: #{_lambda_.1} parent=59 // pred_check_branch
          %386 = sbr.rel (%p384) target = $region68
        $region67: #{_lambda_.1} parent=59 // pred_region
          %387 = dma.done [#allocation9], 16
        $region68: #{_lambda_.1} parent=59 // pred_fallthru
          _
        %388 = sfence
        %p389 = scmp.lt.s32.totalorder %s29, 1
        %s390 = scalar_select %p389, %s29, 1
        %s391 = smul.addr %s390, 2
        %s392 = smul.addr %s391, 8
        %s393 = scalar_lea.vmem %s0, %s392
        %p394 = pneg %p58
        %p395 = pneg %p55
        %p396 = pneg %p79
        %p397 = pneg %p76
        %p398 = pneg %p100
        %p399 = pneg %p97
        %p400 = pneg %p121
        %p401 = pneg %p118
        %p402 = pneg %p142
        %p403 = pneg %p139
        %p404 = pneg %p163
        %p405 = pneg %p160
        %p406 = pneg %p184
        %p407 = pneg %p181
        %p408 = pneg %p205
        %p409 = pneg %p202
        %p410 = pneg %p226
        %p411 = pneg %p223
        %p412 = pneg %p247
        %p413 = pneg %p244
        %p414 = pneg %p275
        %p415 = pneg %p272
        %s416 = smul.u32 2, %s30
        %p417 = scmp.lt.s32.totalorder %s29, 1
        %s418 = scalar_select %p417, %s29, 1
        %p419 = scmp.lt.s32.totalorder %s416, 1
        %s420 = scalar_select %p419, %s416, 1
        %s421 = smul.addr %s418, 2
        %s422 = sadd.s32 %s420, %s421
        %s423 = smul.addr %s422, 8
        %s424 = scalar_lea.vmem %s10, %s423
        %p425 = pneg %p303
        %p426 = pneg %p300
        %s427 = smul.u32 2, %s30
        %p428 = scmp.lt.s32.totalorder %s29, 1
        %s429 = scalar_select %p428, %s29, 1
        %p430 = scmp.lt.s32.totalorder %s427, 1
        %s431 = scalar_select %p430, %s427, 1
        %s432 = smul.addr %s429, 2
        %s433 = sadd.s32 %s431, %s432
        %s434 = smul.addr %s433, 8
        %s435 = scalar_lea.vmem %s11, %s434
        %p436 = scmp.lt.s32.totalorder %s29, 1
        %s437 = scalar_select %p436, %s29, 1
        %s438 = smul.addr %s437, 2
        %s439 = smul.addr %s438, 8
        %s440 = scalar_lea.vmem %s0, %s439
        %s441 = smul.u32 2, %s30
        %p442 = scmp.lt.s32.totalorder %s29, 1
        %s443 = scalar_select %p442, %s29, 1
        %p444 = scmp.lt.s32.totalorder %s441, 1
        %s445 = scalar_select %p444, %s441, 1
        %s446 = smul.addr %s443, 2
        %s447 = sadd.s32 %s445, %s446
        %s448 = smul.addr %s447, 8
        %s449 = scalar_lea.vmem %s10, %s448
        %s450 = smul.u32 2, %s30
        %s451 = smul.u32 2, %s30
        %p452 = scmp.lt.s32.totalorder %s29, 1
        %s453 = scalar_select %p452, %s29, 1
        %p454 = scmp.lt.s32.totalorder %s451, 1
        %s455 = scalar_select %p454, %s451, 1
        %s456 = smul.addr %s453, 2
        %s457 = sadd.s32 %s455, %s456
        %s458 = smul.addr %s457, 8
        %s459 = scalar_lea.vmem %s11, %s458
        %s460 = smul.u32 2, %s30
        %p461 = scmp.eq.s32.totalorder %s30, 0
        // Predicated region
        $region69: #{_lambda_.1} parent=59 // pred_check
          %p462 = pneg %p461
        $region70: #{_lambda_.1} parent=59 // pred_check_branch
          %464 = sbr.rel (%p462) target = $region72
        $region71: #{_lambda_.1} parent=59 // pred_region
          %v465 = vld [vmem:[%s440] sm:$0xff]
          %v466 = vld [vmem:[%s440 + $0x8] sm:$0xff]
          %v467 = vadd.f32 %v465, %v466
          %468 = vadd.xlane.f32.xlu0 %v467
          %v469 = vpop.xlane.xlu0 %468
          %v470 = vrcp.pop 256.0
          %v471 = vmul.f32 %v469, %v470
          %v472 = vmax.f32 %v465, %v466
          %473 = vmax.xlane.f32.xlu0 %v472
          %v474 = vpop.xlane.xlu0 %473
          %v475 = vadd.f32 %v471, %v474
          %v477 = vrot.slane %v475, 5
          %vm479 = vcmask 1042432
          %v480 = vsel %vm479, 0.0, %v477
          %v481 = vsel %vm479, %v477, 0.0
          %s482 = sld [smem:[#allocation6]]
          %v483 = vstv %s482
          %v484 = vmul.f32 %v483, %v480
          %v485 = vadd.f32 %v484, 0.0
          %s486 = sld [smem:[#allocation6 + $0x1]]
          %v487 = vstv %s486
          %v488 = vmul.f32 %v487, %v480
          %v489 = vmul.f32 %v487, %v481
          %vm492 = vcmask 1046528
          %v493 = vrot.slane %v488, 1
          %v494 = vrot.slane %v489, 1
          %v495 = vsel %vm492, %v493, %v494
          %v497 = vadd.f32 %v485, %v495
          %s498 = sld [smem:[#allocation6 + $0x2]]
          %v499 = vstv %s498
          %v500 = vmul.f32 %v499, %v480
          %v501 = vmul.f32 %v499, %v481
          %vm504 = vcmask 1045504
          %v505 = vrot.slane %v500, 2
          %v506 = vrot.slane %v501, 2
          %v507 = vsel %vm504, %v505, %v506
          %v509 = vadd.f32 %v497, %v507
          %s510 = sld [smem:[#allocation6 + $0x3]]
          %v511 = vstv %s510
          %v512 = vmul.f32 %v511, %v480
          %v513 = vmul.f32 %v511, %v481
          %vm516 = vcmask 1044480
          %v517 = vrot.slane %v512, 3
          %v518 = vrot.slane %v513, 3
          %v519 = vsel %vm516, %v517, %v518
          %v521 = vadd.f32 %v509, %v519
          %s522 = sld [smem:[#allocation6 + $0x4]]
          %v523 = vstv %s522
          %v524 = vmul.f32 %v523, %v480
          %v525 = vmul.f32 %v523, %v481
          %vm528 = vcmask 1043456
          %v529 = vrot.slane %v524, 4
          %v530 = vrot.slane %v525, 4
          %v531 = vsel %vm528, %v529, %v530
          %v533 = vadd.f32 %v521, %v531
          %s534 = sld [smem:[#allocation6 + $0x5]]
          %v535 = vstv %s534
          %v536 = vmul.f32 %v535, %v480
          %v537 = vmul.f32 %v535, %v481
          %v540 = vrot.slane %v536, 5
          %v541 = vrot.slane %v537, 5
          %v542 = vsel %vm479, %v540, %v541
          %v544 = vadd.f32 %v533, %v542
          %s545 = sld [smem:[#allocation6 + $0x6]]
          %v546 = vstv %s545
          %v547 = vmul.f32 %v546, %v480
          %v548 = vmul.f32 %v546, %v481
          %vm551 = vcmask 1041408
          %v552 = vrot.slane %v547, 6
          %v553 = vrot.slane %v548, 6
          %v554 = vsel %vm551, %v552, %v553
          %v556 = vadd.f32 %v544, %v554
          %v557 = vsub.f32 0.0, %v556
          %v558 = vmul.f32 %v557, 1.442695
          %v559 = vpow.pop %v558
          %v560 = vadd.f32 %v559, 1.0
          %v561 = vrcp.pop %v560
          %v562 = vmul.f32 1.0, %v561
          %564 = vset.pattern.permute.xlu0 0
          %565 = vperm.xlu0 %564, %v562
          %v566 = vpop.permute.xlu0 %565
          %v568 = vmul.f32 %v465, %v566
          %v569 = vmul.f32 %v466, %v566
          %570 = vst [vmem:[#allocation2] sm:$0xff] %v568
          %571 = vst [vmem:[#allocation2 + $0x8] sm:$0xff] %v569
          %v572 = vrot.slane %v568, 4
          %v573 = vadd.f32 %v568, %v572
          %v574 = vrot.slane %v573, 2
          %v575 = vadd.f32 %v573, %v574
          %v576 = vrot.slane %v575, 1
          %v577 = vadd.f32 %v575, %v576
          %v578 = vrot.slane %v569, 4
          %v579 = vadd.f32 %v569, %v578
          %v580 = vrot.slane %v579, 2
          %v581 = vadd.f32 %v579, %v580
          %v582 = vrot.slane %v581, 1
          %v583 = vadd.f32 %v581, %v582
          %v584 = vrcp.pop 8.0
          %v585 = vmul.f32 %v577, %v584
          %v586 = vmul.f32 %v583, %v584
          %v587 = vrot.slane %v568, 4
          %v588 = vmax.f32 %v568, %v587
          %v589 = vrot.slane %v588, 2
          %v590 = vmax.f32 %v588, %v589
          %v591 = vrot.slane %v590, 1
          %v592 = vmax.f32 %v590, %v591
          %v593 = vrot.slane %v569, 4
          %v594 = vmax.f32 %v569, %v593
          %v595 = vrot.slane %v594, 2
          %v596 = vmax.f32 %v594, %v595
          %v597 = vrot.slane %v596, 1
          %v598 = vmax.f32 %v596, %v597
          %vm599 = vcmask 1040384
          %v600 = vsel %vm599, %v585, %v592
          %v601 = vsel %vm599, %v586, %v598
          %v602 = vlaneseq
          %v603 = vand.u32 %v602, 127
          %v604 = vadd.s32 %v603, 128
          %v605 = vcvt.s32.f32 %v603
          %v606 = vcvt.s32.f32 %v604
          %v607 = vadd.f32 %v605, 0.5
          %v608 = vadd.f32 %v606, 0.5
          %v609 = vmul.f32 %v607, 0.0625
          %v610 = vmul.f32 %v608, 0.0625
          %v611 = vfloor.f32 %v609
          %v612 = vfloor.f32 %v610
          %v613 = vmul.f32 %v611, 16.0
          %v614 = vmul.f32 %v612, 16.0
          %v615 = vsub.f32 %v605, %v613
          %v616 = vsub.f32 %v606, %v614
          %v617 = vadd.f32 %v611, -1.0
          %v618 = vadd.f32 %v612, -1.0
          %vm619 = vcmp.ge.f32.partialorder %v617, 0.0
          %vm620 = vcmp.ge.f32.partialorder %v618, 0.0
          %vm621 = vcmp.le.f32.partialorder %v617, 15.0
          %vm622 = vcmp.le.f32.partialorder %v618, 15.0
          %vm623 = vmand %vm619, %vm621
          %vm624 = vmand %vm620, %vm622
          %v625 = vadd.f32 %v611, 0.0
          %v626 = vadd.f32 %v612, 0.0
          %vm627 = vcmp.ge.f32.partialorder %v625, 0.0
          %vm628 = vcmp.ge.f32.partialorder %v626, 0.0
          %vm629 = vcmp.le.f32.partialorder %v625, 15.0
          %vm630 = vcmp.le.f32.partialorder %v626, 15.0
          %vm631 = vmand %vm627, %vm629
          %vm632 = vmand %vm628, %vm630
          %v633 = vadd.f32 %v611, 1.0
          %v634 = vadd.f32 %v612, 1.0
          %vm635 = vcmp.ge.f32.partialorder %v633, 0.0
          %vm636 = vcmp.ge.f32.partialorder %v634, 0.0
          %vm637 = vcmp.le.f32.partialorder %v633, 15.0
          %vm638 = vcmp.le.f32.partialorder %v634, 15.0
          %vm639 = vmand %vm635, %vm637
          %vm640 = vmand %vm636, %vm638
          %v641 = vadd.f32 %v615, -1.0
          %v642 = vadd.f32 %v616, -1.0
          %vm643 = vcmp.ge.f32.partialorder %v641, 0.0
          %vm644 = vcmp.ge.f32.partialorder %v642, 0.0
          %vm645 = vcmp.le.f32.partialorder %v641, 15.0
          %vm646 = vcmp.le.f32.partialorder %v642, 15.0
          %vm647 = vmand %vm643, %vm645
          %vm648 = vmand %vm644, %vm646
          %v649 = vadd.f32 %v615, 0.0
          %v650 = vadd.f32 %v616, 0.0
          %vm651 = vcmp.ge.f32.partialorder %v649, 0.0
          %vm652 = vcmp.ge.f32.partialorder %v650, 0.0
          %vm653 = vcmp.le.f32.partialorder %v649, 15.0
          %vm654 = vcmp.le.f32.partialorder %v650, 15.0
          %vm655 = vmand %vm651, %vm653
          %vm656 = vmand %vm652, %vm654
          %v657 = vadd.f32 %v615, 1.0
          %v658 = vadd.f32 %v616, 1.0
          %vm659 = vcmp.ge.f32.partialorder %v657, 0.0
          %vm660 = vcmp.ge.f32.partialorder %v658, 0.0
          %vm661 = vcmp.le.f32.partialorder %v657, 15.0
          %vm662 = vcmp.le.f32.partialorder %v658, 15.0
          %vm663 = vmand %vm659, %vm661
          %vm664 = vmand %vm660, %vm662
          %666 = vrot.lane.b32.xlu0 %v601, 17
          %v667 = vpop.permute.xlu0 %666
          %670 = vrot.lane.b32.xlu0 %v600, 17
          %v671 = vpop.permute.xlu0 %670
          %vm672 = vcmask 138240
          %v673 = vsel %vm672, %v671, %v667
          %v676 = vsel %vm672, %v667, %v671
          %vm677 = vmand %vm623, %vm647
          %vm678 = vmand %vm624, %vm648
          %v679 = vsel %vm677, 1, 0
          %v680 = vsel %vm678, 1, 0
          %v681 = vcvt.s32.f32 %v679
          %v682 = vcvt.s32.f32 %v680
          %s683 = sld [smem:[#allocation8]]
          %v684 = vstv %s683
          %v685 = vmul.f32 %v684, %v676
          %v686 = vmul.f32 %v684, %v673
          %s687 = sld [smem:[#allocation8 + $0x9]]
          %v688 = vstv %s687
          %v689 = vmul.f32 %v688, %v676
          %v690 = vmul.f32 %v688, %v673
          %v693 = vrot.slane %v689, 1
          %v694 = vrot.slane %v690, 1
          %v697 = vadd.f32 %v685, %v693
          %v698 = vadd.f32 %v686, %v694
          %v699 = vmul.f32 %v681, %v697
          %v700 = vmul.f32 %v682, %v698
          %v701 = vadd.f32 %v699, 0.0
          %v702 = vadd.f32 %v700, 0.0
          %703 = vrot.lane.b32.xlu0 %v601, 16
          %v704 = vpop.permute.xlu0 %703
          %706 = vrot.lane.b32.xlu0 %v600, 16
          %v707 = vpop.permute.xlu0 %706
          %vm708 = vcmask 130048
          %v709 = vsel %vm708, %v707, %v704
          %v712 = vsel %vm708, %v704, %v707
          %vm713 = vmand %vm623, %vm655
          %vm714 = vmand %vm624, %vm656
          %v715 = vsel %vm713, 1, 0
          %v716 = vsel %vm714, 1, 0
          %v717 = vcvt.s32.f32 %v715
          %v718 = vcvt.s32.f32 %v716
          %s719 = sld [smem:[#allocation8 + $0x1]]
          %v720 = vstv %s719
          %v721 = vmul.f32 %v720, %v712
          %v722 = vmul.f32 %v720, %v709
          %s723 = sld [smem:[#allocation8 + $0xa]]
          %v724 = vstv %s723
          %v725 = vmul.f32 %v724, %v712
          %v726 = vmul.f32 %v724, %v709
          %v729 = vrot.slane %v725, 1
          %v730 = vrot.slane %v726, 1
          %v733 = vadd.f32 %v721, %v729
          %v734 = vadd.f32 %v722, %v730
          %v735 = vmul.f32 %v717, %v733
          %v736 = vmul.f32 %v718, %v734
          %v737 = vadd.f32 %v701, %v735
          %v738 = vadd.f32 %v702, %v736
          %739 = vrot.lane.b32.xlu0 %v601, 15
          %v740 = vpop.permute.xlu0 %739
          %742 = vrot.lane.b32.xlu0 %v600, 15
          %v743 = vpop.permute.xlu0 %742
          %vm744 = vcmask 121856
          %v745 = vsel %vm744, %v743, %v740
          %v748 = vsel %vm744, %v740, %v743
          %vm749 = vmand %vm623, %vm663
          %vm750 = vmand %vm624, %vm664
          %v751 = vsel %vm749, 1, 0
          %v752 = vsel %vm750, 1, 0
          %v753 = vcvt.s32.f32 %v751
          %v754 = vcvt.s32.f32 %v752
          %s755 = sld [smem:[#allocation8 + $0x2]]
          %v756 = vstv %s755
          %v757 = vmul.f32 %v756, %v748
          %v758 = vmul.f32 %v756, %v745
          %s759 = sld [smem:[#allocation8 + $0xb]]
          %v760 = vstv %s759
          %v761 = vmul.f32 %v760, %v748
          %v762 = vmul.f32 %v760, %v745
          %v765 = vrot.slane %v761, 1
          %v766 = vrot.slane %v762, 1
          %v769 = vadd.f32 %v757, %v765
          %v770 = vadd.f32 %v758, %v766
          %v771 = vmul.f32 %v753, %v769
          %v772 = vmul.f32 %v754, %v770
          %v773 = vadd.f32 %v737, %v771
          %v774 = vadd.f32 %v738, %v772
          %775 = vrot.lane.b32.xlu0 %v601, 1
          %v776 = vpop.permute.xlu0 %775
          %778 = vrot.lane.b32.xlu0 %v600, 1
          %v779 = vpop.permute.xlu0 %778
          %vm780 = vcmask 7168
          %v781 = vsel %vm780, %v779, %v776
          %v784 = vsel %vm780, %v776, %v779
          %vm785 = vmand %vm631, %vm647
          %vm786 = vmand %vm632, %vm648
          %v787 = vsel %vm785, 1, 0
          %v788 = vsel %vm786, 1, 0
          %v789 = vcvt.s32.f32 %v787
          %v790 = vcvt.s32.f32 %v788
          %s791 = sld [smem:[#allocation8 + $0x3]]
          %v792 = vstv %s791
          %v793 = vmul.f32 %v792, %v784
          %v794 = vmul.f32 %v792, %v781
          %s795 = sld [smem:[#allocation8 + $0xc]]
          %v796 = vstv %s795
          %v797 = vmul.f32 %v796, %v784
          %v798 = vmul.f32 %v796, %v781
          %v801 = vrot.slane %v797, 1
          %v802 = vrot.slane %v798, 1
          %v805 = vadd.f32 %v793, %v801
          %v806 = vadd.f32 %v794, %v802
          %v807 = vmul.f32 %v789, %v805
          %v808 = vmul.f32 %v790, %v806
          %v809 = vadd.f32 %v773, %v807
          %v810 = vadd.f32 %v774, %v808
          %vm811 = vmand %vm631, %vm655
          %vm812 = vmand %vm632, %vm656
          %v813 = vsel %vm811, 1, 0
          %v814 = vsel %vm812, 1, 0
          %v815 = vcvt.s32.f32 %v813
          %v816 = vcvt.s32.f32 %v814
          %s817 = sld [smem:[#allocation8 + $0x4]]
          %v818 = vstv %s817
          %v819 = vmul.f32 %v818, %v600
          %v820 = vmul.f32 %v818, %v601
          %s821 = sld [smem:[#allocation8 + $0xd]]
          %v822 = vstv %s821
          %v823 = vmul.f32 %v822, %v600
          %v824 = vmul.f32 %v822, %v601
          %v827 = vrot.slane %v823, 1
          %v828 = vrot.slane %v824, 1
          %v831 = vadd.f32 %v819, %v827
          %v832 = vadd.f32 %v820, %v828
          %v833 = vmul.f32 %v815, %v831
          %v834 = vmul.f32 %v816, %v832
          %v835 = vadd.f32 %v809, %v833
          %v836 = vadd.f32 %v810, %v834
          %837 = vrot.lane.b32.xlu0 %v600, 127
          %v838 = vpop.permute.xlu0 %837
          %839 = vrot.lane.b32.xlu0 %v601, 127
          %v840 = vpop.permute.xlu0 %839
          %vm841 = vcmask 1039360
          %v842 = vsel %vm841, %v838, %v840
          %v846 = vsel %vm841, %v840, %v838
          %vm847 = vmand %vm631, %vm663
          %vm848 = vmand %vm632, %vm664
          %v849 = vsel %vm847, 1, 0
          %v850 = vsel %vm848, 1, 0
          %v851 = vcvt.s32.f32 %v849
          %v852 = vcvt.s32.f32 %v850
          %s853 = sld [smem:[#allocation8 + $0x5]]
          %v854 = vstv %s853
          %v855 = vmul.f32 %v854, %v842
          %v856 = vmul.f32 %v854, %v846
          %s857 = sld [smem:[#allocation8 + $0xe]]
          %v858 = vstv %s857
          %v859 = vmul.f32 %v858, %v842
          %v860 = vmul.f32 %v858, %v846
          %v863 = vrot.slane %v859, 1
          %v864 = vrot.slane %v860, 1
          %v867 = vadd.f32 %v855, %v863
          %v868 = vadd.f32 %v856, %v864
          %v869 = vmul.f32 %v851, %v867
          %v870 = vmul.f32 %v852, %v868
          %v871 = vadd.f32 %v835, %v869
          %v872 = vadd.f32 %v836, %v870
          %873 = vrot.lane.b32.xlu0 %v600, 113
          %v874 = vpop.permute.xlu0 %873
          %875 = vrot.lane.b32.xlu0 %v601, 113
          %v876 = vpop.permute.xlu0 %875
          %vm877 = vcmask 924672
          %v878 = vsel %vm877, %v874, %v876
          %v882 = vsel %vm877, %v876, %v874
          %vm883 = vmand %vm639, %vm647
          %vm884 = vmand %vm640, %vm648
          %v885 = vsel %vm883, 1, 0
          %v886 = vsel %vm884, 1, 0
          %v887 = vcvt.s32.f32 %v885
          %v888 = vcvt.s32.f32 %v886
          %s889 = sld [smem:[#allocation8 + $0x6]]
          %v890 = vstv %s889
          %v891 = vmul.f32 %v890, %v878
          %v892 = vmul.f32 %v890, %v882
          %s893 = sld [smem:[#allocation8 + $0xf]]
          %v894 = vstv %s893
          %v895 = vmul.f32 %v894, %v878
          %v896 = vmul.f32 %v894, %v882
          %v899 = vrot.slane %v895, 1
          %v900 = vrot.slane %v896, 1
          %v903 = vadd.f32 %v891, %v899
          %v904 = vadd.f32 %v892, %v900
          %v905 = vmul.f32 %v887, %v903
          %v906 = vmul.f32 %v888, %v904
          %v907 = vadd.f32 %v871, %v905
          %v908 = vadd.f32 %v872, %v906
          %909 = vrot.lane.b32.xlu0 %v600, 112
          %v910 = vpop.permute.xlu0 %909
          %911 = vrot.lane.b32.xlu0 %v601, 112
          %v912 = vpop.permute.xlu0 %911
          %vm913 = vcmask 916480
          %v914 = vsel %vm913, %v910, %v912
          %v918 = vsel %vm913, %v912, %v910
          %vm919 = vmand %vm639, %vm655
          %vm920 = vmand %vm640, %vm656
          %v921 = vsel %vm919, 1, 0
          %v922 = vsel %vm920, 1, 0
          %v923 = vcvt.s32.f32 %v921
          %v924 = vcvt.s32.f32 %v922
          %s925 = sld [smem:[#allocation8 + $0x7]]
          %v926 = vstv %s925
          %v927 = vmul.f32 %v926, %v914
          %v928 = vmul.f32 %v926, %v918
          %s929 = sld [smem:[#allocation8 + $0x10]]
          %v930 = vstv %s929
          %v931 = vmul.f32 %v930, %v914
          %v932 = vmul.f32 %v930, %v918
          %v935 = vrot.slane %v931, 1
          %v936 = vrot.slane %v932, 1
          %v939 = vadd.f32 %v927, %v935
          %v940 = vadd.f32 %v928, %v936
          %v941 = vmul.f32 %v923, %v939
          %v942 = vmul.f32 %v924, %v940
          %v943 = vadd.f32 %v907, %v941
          %v944 = vadd.f32 %v908, %v942
          %945 = vrot.lane.b32.xlu0 %v600, 111
          %v946 = vpop.permute.xlu0 %945
          %947 = vrot.lane.b32.xlu0 %v601, 111
          %v948 = vpop.permute.xlu0 %947
          %vm949 = vcmask 908288
          %v950 = vsel %vm949, %v946, %v948
          %v954 = vsel %vm949, %v948, %v946
          %vm955 = vmand %vm639, %vm663
          %vm956 = vmand %vm640, %vm664
          %v957 = vsel %vm955, 1, 0
          %v958 = vsel %vm956, 1, 0
          %v959 = vcvt.s32.f32 %v957
          %v960 = vcvt.s32.f32 %v958
          %s961 = sld [smem:[#allocation8 + $0x8]]
          %v962 = vstv %s961
          %v963 = vmul.f32 %v962, %v950
          %v964 = vmul.f32 %v962, %v954
          %s965 = sld [smem:[#allocation8 + $0x11]]
          %v966 = vstv %s965
          %v967 = vmul.f32 %v966, %v950
          %v968 = vmul.f32 %v966, %v954
          %v971 = vrot.slane %v967, 1
          %v972 = vrot.slane %v968, 1
          %v975 = vadd.f32 %v963, %v971
          %v976 = vadd.f32 %v964, %v972
          %v977 = vmul.f32 %v959, %v975
          %v978 = vmul.f32 %v960, %v976
          %v979 = vadd.f32 %v943, %v977
          %v980 = vadd.f32 %v944, %v978
          %v981 = vsub.f32 0.0, %v979
          %v982 = vsub.f32 0.0, %v980
          %v983 = vmul.f32 %v981, 1.442695
          %v984 = vpow.pop %v983
          %v985 = vmul.f32 %v982, 1.442695
          %v986 = vpow.pop %v985
          %v987 = vadd.f32 %v984, 1.0
          %v988 = vadd.f32 %v986, 1.0
          %v989 = vrcp.pop %v987
          %v990 = vmul.f32 1.0, %v989
          %v991 = vrcp.pop %v988
          %v992 = vmul.f32 1.0, %v991
          %v995 = vcombine.low %v990, %v992
          %v997 = vunpack.c.l.s4 1966171168
          %v998 = vunpack.c.0.s8 %v997
          %v999 = vlaneseq
          %v1000 = vshrl.u32 %v999, 7
          %v1001 = vsub.s32 %v998, %v1000
          %v1002 = vrot.slane %v995, %v1001
          %v1004 = vunpack.c.l.s4 1966171168
          %v1005 = vunpack.c.0.s8 %v1004
          %v1006 = vlaneseq
          %v1007 = vshrl.u32 %v1006, 7
          %v1008 = vsub.s32 %v1005, %v1007
          %v1009 = vrot.slane %v1002, %v1008
          %v1011 = vlaneseq
          %vm1012 = vcmp.ge.s32.totalorder %v1011, 0
          %vm1013 = vcmp.lt.s32.totalorder %v1011, 256
          %vm1014 = vmand %vm1012, %vm1013
          %1015 = vst.msk [vmem:[#allocation3] sm:$0x3] %vm1014, %v1009
          %v1016 = vld [vmem:[%s5] sm:$0xff]
          %v1017 = vld [vmem:[%s6] sm:$0xff]
          %1019 = vset.pattern.permute.xlu0 0
          %1020 = vperm.xlu0 %1019, %v1017
          %v1021 = vpop.permute.xlu0 %1020
          %vm1023 = vcmask 64512
          %v1025 = vsel %vm1023, %v1016, 0
          %1027 = vmatprep.subr.mxu0 0.0
          %1028 = vmatpush1.msra.mxu0 0.0
          %1029 = vmatprep.subr.mxu0 0.0
          %1030 = vmatpush1.msra.mxu0 0.0
          %1031 = vmatprep.subr.mxu0 0.0
          %1032 = vmatpush1.msra.mxu0 0.0
          %1033 = vmatprep.subr.mxu0 0.0
          %1034 = vmatpush1.msra.mxu0 0.0
          %1035 = vmatprep.subr.mxu0 0.0
          %1036 = vmatpush1.msra.mxu0 0.0
          %1037 = vmatprep.subr.mxu0 0.0
          %1038 = vmatpush1.msra.mxu0 0.0
          %1039 = vmatprep.subr.mxu0 0.0
          %1040 = vmatpush1.msra.mxu0 0.0
          %1041 = vmatprep.subr.mxu0 0.0
          %1042 = vmatpush1.msra.mxu0 0.0
          %1043 = vmatprep.subr.mxu0 0.0
          %1044 = vmatpush1.msra.mxu0 0.0
          %1045 = vmatprep.subr.mxu0 0.0
          %1046 = vmatpush1.msra.mxu0 0.0
          %1047 = vmatprep.subr.mxu0 0.0
          %1048 = vmatpush1.msra.mxu0 0.0
          %1049 = vmatprep.subr.mxu0 0.0
          %1050 = vmatpush1.msra.mxu0 0.0
          %1051 = vmatprep.subr.mxu0 0.0
          %1052 = vmatpush1.msra.mxu0 0.0
          %1053 = vmatprep.subr.mxu0 0.0
          %1054 = vmatpush1.msra.mxu0 0.0
          %1055 = vmatprep.subr.mxu0 0.0
          %1056 = vmatpush1.msra.mxu0 0.0
          %1057 = vmatprep.subr.mxu0 %v569
          %1058 = vmatpush1.msra.mxu0 %v568
          %1059 = vmatprep.subr.mxu0 0.0
          %1060 = vmatpush2.msra.mxu0 0.0
          %1061 = vmatprep.subr.mxu0 0.0
          %1062 = vmatpush2.msra.mxu0 0.0
          %1063 = vmatprep.subr.mxu0 0.0
          %1064 = vmatpush2.msra.mxu0 0.0
          %1065 = vmatprep.subr.mxu0 0.0
          %1066 = vmatpush2.msra.mxu0 0.0
          %1067 = vmatprep.subr.mxu0 0.0
          %1068 = vmatpush2.msra.mxu0 0.0
          %1069 = vmatprep.subr.mxu0 0.0
          %1070 = vmatpush2.msra.mxu0 0.0
          %1071 = vmatprep.subr.mxu0 0.0
          %1072 = vmatpush2.msra.mxu0 0.0
          %1073 = vmatprep.subr.mxu0 0.0
          %1074 = vmatpush2.msra.mxu0 0.0
          %1075 = vmatprep.subr.mxu0 0.0
          %1076 = vmatpush2.msra.mxu0 0.0
          %1077 = vmatprep.subr.mxu0 0.0
          %1078 = vmatpush2.msra.mxu0 0.0
          %1079 = vmatprep.subr.mxu0 0.0
          %1080 = vmatpush2.msra.mxu0 0.0
          %1081 = vmatprep.subr.mxu0 0.0
          %1082 = vmatpush2.msra.mxu0 0.0
          %1083 = vmatprep.subr.mxu0 0.0
          %1084 = vmatpush2.msra.mxu0 0.0
          %1085 = vmatprep.subr.mxu0 0.0
          %1086 = vmatpush2.msra.mxu0 0.0
          %1087 = vmatprep.subr.mxu0 0.0
          %1088 = vmatpush2.msra.mxu0 0.0
          %1089 = vmatprep.subr.mxu0 0.0
          %1090 = vmatpush2.msra.mxu0 0.0
          %1091 = vmatprep.mubr.f32.mxu0 0.0
          %1092 = vmatmul.mubr.f32.gmra.mxu0 %v1025
          %v1093 = vpop.f32.mrf.mxu0
          %v1094 = vadd.f32 %v1021, %v1093
          %v1095 = vpop.f32.mrf.mxu0
          %v1096 = vadd.f32 %v1021, %v1095
          %1097 = vdwg.mxu0
          %1100 = vrot.lane.b32.xlu0 %v1094, 127
          %v1101 = vpop.permute.xlu0 %1100
          %1102 = vrot.lane.b32.xlu0 %v1096, 127
          %v1103 = vpop.permute.xlu0 %1102
          %v1104 = vsel %vm841, %v1101, %v1103
          %v1108 = vsel %vm841, %v1103, %v1101
          %v1109 = vmax.f32 %v1094, %v1104
          %v1110 = vmax.f32 %v1096, %v1108
          %1111 = vrot.lane.b32.xlu0 %v1094, 112
          %v1112 = vpop.permute.xlu0 %1111
          %1113 = vrot.lane.b32.xlu0 %v1096, 112
          %v1114 = vpop.permute.xlu0 %1113
          %v1115 = vsel %vm913, %v1112, %v1114
          %v1119 = vsel %vm913, %v1114, %v1112
          %1120 = vrot.lane.b32.xlu0 %v1094, 111
          %v1121 = vpop.permute.xlu0 %1120
          %1122 = vrot.lane.b32.xlu0 %v1096, 111
          %v1123 = vpop.permute.xlu0 %1122
          %v1124 = vsel %vm949, %v1121, %v1123
          %v1128 = vsel %vm949, %v1123, %v1121
          %v1129 = vmax.f32 %v1115, %v1124
          %v1130 = vmax.f32 %v1119, %v1128
          %v1131 = vmax.f32 %v1109, %v1129
          %v1132 = vmax.f32 %v1110, %v1130
          %v1133 = vld [vmem:[%s7] sm:$0xff]
          %v1134 = vld [vmem:[%s7 + $0x8] sm:$0xff]
          %v1135 = vld [vmem:[%s7 + $0x10] sm:$0xff]
          %v1136 = vld [vmem:[%s7 + $0x18] sm:$0xff]
          %v1137 = vld [vmem:[%s7 + $0x20] sm:$0xff]
          %v1138 = vld [vmem:[%s7 + $0x28] sm:$0xff]
          %v1139 = vld [vmem:[%s7 + $0x30] sm:$0xff]
          %v1140 = vld [vmem:[%s7 + $0x38] sm:$0xff]
          %v1141 = vld [vmem:[%s7 + $0x40] sm:$0xff]
          %v1142 = vld [vmem:[%s7 + $0x48] sm:$0xff]
          %v1143 = vld [vmem:[%s7 + $0x50] sm:$0xff]
          %v1144 = vld [vmem:[%s7 + $0x58] sm:$0xff]
          %v1145 = vld [vmem:[%s7 + $0x60] sm:$0xff]
          %v1146 = vld [vmem:[%s7 + $0x68] sm:$0xff]
          %v1147 = vld [vmem:[%s7 + $0x70] sm:$0xff]
          %v1148 = vld [vmem:[%s7 + $0x78] sm:$0xff]
          %v1149 = vld [vmem:[%s7 + $0x80] sm:$0xff]
          %v1150 = vld [vmem:[%s7 + $0x88] sm:$0xff]
          %v1151 = vld [vmem:[%s7 + $0x90] sm:$0xff]
          %v1152 = vld [vmem:[%s7 + $0x98] sm:$0xff]
          %v1153 = vld [vmem:[%s7 + $0xa0] sm:$0xff]
          %v1154 = vld [vmem:[%s7 + $0xa8] sm:$0xff]
          %v1155 = vld [vmem:[%s7 + $0xb0] sm:$0xff]
          %v1156 = vld [vmem:[%s7 + $0xb8] sm:$0xff]
          %v1157 = vld [vmem:[%s7 + $0xc0] sm:$0xff]
          %v1158 = vld [vmem:[%s7 + $0xc8] sm:$0xff]
          %v1159 = vld [vmem:[%s7 + $0xd0] sm:$0xff]
          %v1160 = vld [vmem:[%s7 + $0xd8] sm:$0xff]
          %v1161 = vld [vmem:[%s7 + $0xe0] sm:$0xff]
          %v1162 = vld [vmem:[%s7 + $0xe8] sm:$0xff]
          %v1163 = vld [vmem:[%s7 + $0xf0] sm:$0xff]
          %v1164 = vld [vmem:[%s7 + $0xf8] sm:$0xff]
          %1165 = vmatprep.subr.mxu0 0.0
          %1166 = vmatpush1.msra.mxu0 %v1148
          %1167 = vmatprep.subr.mxu0 0.0
          %1168 = vmatpush1.msra.mxu0 %v1147
          %1169 = vmatprep.subr.mxu0 0.0
          %1170 = vmatpush1.msra.mxu0 %v1146
          %1171 = vmatprep.subr.mxu0 0.0
          %1172 = vmatpush1.msra.mxu0 %v1145
          %1173 = vmatprep.subr.mxu0 0.0
          %1174 = vmatpush1.msra.mxu0 %v1144
          %1175 = vmatprep.subr.mxu0 0.0
          %1176 = vmatpush1.msra.mxu0 %v1143
          %1177 = vmatprep.subr.mxu0 0.0
          %1178 = vmatpush1.msra.mxu0 %v1142
          %1179 = vmatprep.subr.mxu0 0.0
          %1180 = vmatpush1.msra.mxu0 %v1141
          %1181 = vmatprep.subr.mxu0 0.0
          %1182 = vmatpush1.msra.mxu0 %v1140
          %1183 = vmatprep.subr.mxu0 0.0
          %1184 = vmatpush1.msra.mxu0 %v1139
          %1185 = vmatprep.subr.mxu0 0.0
          %1186 = vmatpush1.msra.mxu0 %v1138
          %1187 = vmatprep.subr.mxu0 0.0
          %1188 = vmatpush1.msra.mxu0 %v1137
          %1189 = vmatprep.subr.mxu0 0.0
          %1190 = vmatpush1.msra.mxu0 %v1136
          %1191 = vmatprep.subr.mxu0 0.0
          %1192 = vmatpush1.msra.mxu0 %v1135
          %1193 = vmatprep.subr.mxu0 0.0
          %1194 = vmatpush1.msra.mxu0 %v1134
          %1195 = vmatprep.subr.mxu0 0.0
          %1196 = vmatpush1.msra.mxu0 %v1133
          %1197 = vmatprep.subr.mxu0 0.0
          %1198 = vmatpush2.msra.mxu0 %v1164
          %1199 = vmatprep.subr.mxu0 0.0
          %1200 = vmatpush2.msra.mxu0 %v1163
          %1201 = vmatprep.subr.mxu0 0.0
          %1202 = vmatpush2.msra.mxu0 %v1162
          %1203 = vmatprep.subr.mxu0 0.0
          %1204 = vmatpush2.msra.mxu0 %v1161
          %1205 = vmatprep.subr.mxu0 0.0
          %1206 = vmatpush2.msra.mxu0 %v1160
          %1207 = vmatprep.subr.mxu0 0.0
          %1208 = vmatpush2.msra.mxu0 %v1159
          %1209 = vmatprep.subr.mxu0 0.0
          %1210 = vmatpush2.msra.mxu0 %v1158
          %1211 = vmatprep.subr.mxu0 0.0
          %1212 = vmatpush2.msra.mxu0 %v1157
          %1213 = vmatprep.subr.mxu0 0.0
          %1214 = vmatpush2.msra.mxu0 %v1156
          %1215 = vmatprep.subr.mxu0 0.0
          %1216 = vmatpush2.msra.mxu0 %v1155
          %1217 = vmatprep.subr.mxu0 0.0
          %1218 = vmatpush2.msra.mxu0 %v1154
          %1219 = vmatprep.subr.mxu0 0.0
          %1220 = vmatpush2.msra.mxu0 %v1153
          %1221 = vmatprep.subr.mxu0 0.0
          %1222 = vmatpush2.msra.mxu0 %v1152
          %1223 = vmatprep.subr.mxu0 0.0
          %1224 = vmatpush2.msra.mxu0 %v1151
          %1225 = vmatprep.subr.mxu0 0.0
          %1226 = vmatpush2.msra.mxu0 %v1150
          %1227 = vmatprep.subr.mxu0 0.0
          %1228 = vmatpush2.msra.mxu0 %v1149
          %1229 = vmatprep.mubr.f32.mxu0 %v1132
          %1230 = vmatmul.mubr.f32.gmra.mxu0 %v1131
          %v1231 = vpop.f32.mrf.mxu0
          %v1232 = vadd.f32 0.0, %v1231
          %v1233 = vpop.f32.mrf.mxu0
          %1234 = vdwg.mxu0
          %vm1235 = vcmask 519168
          %1236 = vst.msk [vmem:[#allocation4] sm:$0xf] %vm1235, %v1232
          %vm1237 = vcmask 523268
          %1238 = vst.msk [vmem:[#allocation5 - $0x4] sm:$0xf0] %vm1237, %v1232
        $region72: #{_lambda_.1} parent=59 // pred_fallthru
          _
        %s1239 = smul.u32 %s30, 256
        %s1240 = sshra.s32 %s1239, 7
        %s1241 = sand.u32 %s1239, 127
        %s1242 = smul.addr %s1240, 8
        %s1243 = scalar_lea.vmem [#allocation2], %s1242
        %v1244 = vld [vmem:[%s1243] sm:$0xff]
        %v1245 = vld [vmem:[%s1243 + $0x8] sm:$0xff]
        %v1246 = vld [vmem:[%s3] sm:$0xf]
        %v1247 = vld [vmem:[%s4] sm:$0xf]
        %1249 = vset.pattern.permute.xlu0 0
        %1250 = vperm.xlu0 %1249, %v1247
        %v1251 = vpop.permute.xlu0 %1250
        %vm1253 = vcmask 64512
        %v1255 = vsel %vm1253, %v1246, 0
        %1257 = vmatprep.subr.mxu0 0.0
        %1258 = vmatpush1.msra.mxu0 0.0
        %1259 = vmatprep.subr.mxu0 0.0
        %1260 = vmatpush1.msra.mxu0 0.0
        %1261 = vmatprep.subr.mxu0 0.0
        %1262 = vmatpush1.msra.mxu0 0.0
        %1263 = vmatprep.subr.mxu0 0.0
        %1264 = vmatpush1.msra.mxu0 0.0
        %1265 = vmatprep.subr.mxu0 0.0
        %1266 = vmatpush1.msra.mxu0 0.0
        %1267 = vmatprep.subr.mxu0 0.0
        %1268 = vmatpush1.msra.mxu0 0.0
        %1269 = vmatprep.subr.mxu0 0.0
        %1270 = vmatpush1.msra.mxu0 0.0
        %1271 = vmatprep.subr.mxu0 0.0
        %1272 = vmatpush1.msra.mxu0 0.0
        %1273 = vmatprep.subr.mxu0 0.0
        %1274 = vmatpush1.msra.mxu0 0.0
        %1275 = vmatprep.subr.mxu0 0.0
        %1276 = vmatpush1.msra.mxu0 0.0
        %1277 = vmatprep.subr.mxu0 0.0
        %1278 = vmatpush1.msra.mxu0 0.0
        %1279 = vmatprep.subr.mxu0 0.0
        %1280 = vmatpush1.msra.mxu0 0.0
        %1281 = vmatprep.subr.mxu0 0.0
        %1282 = vmatpush1.msra.mxu0 0.0
        %1283 = vmatprep.subr.mxu0 0.0
        %1284 = vmatpush1.msra.mxu0 0.0
        %1285 = vmatprep.subr.mxu0 0.0
        %1286 = vmatpush1.msra.mxu0 0.0
        %1287 = vmatprep.subr.mxu0 %v1245
        %1288 = vmatpush1.msra.mxu0 %v1244
        %1289 = vmatprep.subr.mxu0 0.0
        %1290 = vmatpush2.msra.mxu0 0.0
        %1291 = vmatprep.subr.mxu0 0.0
        %1292 = vmatpush2.msra.mxu0 0.0
        %1293 = vmatprep.subr.mxu0 0.0
        %1294 = vmatpush2.msra.mxu0 0.0
        %1295 = vmatprep.subr.mxu0 0.0
        %1296 = vmatpush2.msra.mxu0 0.0
        %1297 = vmatprep.subr.mxu0 0.0
        %1298 = vmatpush2.msra.mxu0 0.0
        %1299 = vmatprep.subr.mxu0 0.0
        %1300 = vmatpush2.msra.mxu0 0.0
        %1301 = vmatprep.subr.mxu0 0.0
        %1302 = vmatpush2.msra.mxu0 0.0
        %1303 = vmatprep.subr.mxu0 0.0
        %1304 = vmatpush2.msra.mxu0 0.0
        %1305 = vmatprep.subr.mxu0 0.0
        %1306 = vmatpush2.msra.mxu0 0.0
        %1307 = vmatprep.subr.mxu0 0.0
        %1308 = vmatpush2.msra.mxu0 0.0
        %1309 = vmatprep.subr.mxu0 0.0
        %1310 = vmatpush2.msra.mxu0 0.0
        %1311 = vmatprep.subr.mxu0 0.0
        %1312 = vmatpush2.msra.mxu0 0.0
        %1313 = vmatprep.subr.mxu0 0.0
        %1314 = vmatpush2.msra.mxu0 0.0
        %1315 = vmatprep.subr.mxu0 0.0
        %1316 = vmatpush2.msra.mxu0 0.0
        %1317 = vmatprep.subr.mxu0 0.0
        %1318 = vmatpush2.msra.mxu0 0.0
        %1319 = vmatprep.subr.mxu0 0.0
        %1320 = vmatpush2.msra.mxu0 0.0
        %1321 = vmatprep.mubr.f32.mxu0 0.0
        %1322 = vmatmul.mubr.f32.gmra.mxu0 %v1255
        %v1323 = vpop.f32.mrf.mxu0
        %v1324 = vadd.f32 %v1251, %v1323
        %v1325 = vpop.f32.mrf.mxu0
        %v1326 = vadd.f32 %v1251, %v1325
        %1327 = vdwg.mxu0
        %v1328 = vld [vmem:[#allocation4] sm:$0xf]
        %1329 = vxpose.xlu0.b32.start [1/16] %v1324, 128
        %1330 = vxpose.xlu0.b32.cont [2/16] 0.0, 128
        %1331 = vxpose.xlu0.b32.cont [3/16] 0.0, 128
        %1332 = vxpose.xlu0.b32.cont [4/16] 0.0, 128
        %1333 = vxpose.xlu0.b32.cont [5/16] 0.0, 128
        %1334 = vxpose.xlu0.b32.cont [6/16] 0.0, 128
        %1335 = vxpose.xlu0.b32.cont [7/16] 0.0, 128
        %1336 = vxpose.xlu0.b32.cont [8/16] 0.0, 128
        %1337 = vxpose.xlu0.b32.cont [9/16] 0.0, 128
        %1338 = vxpose.xlu0.b32.cont [10/16] 0.0, 128
        %1339 = vxpose.xlu0.b32.cont [11/16] 0.0, 128
        %1340 = vxpose.xlu0.b32.cont [12/16] 0.0, 128
        %1341 = vxpose.xlu0.b32.cont [13/16] 0.0, 128
        %1342 = vxpose.xlu0.b32.cont [14/16] 0.0, 128
        %1343 = vxpose.xlu0.b32.cont [15/16] 0.0, 128
        %1344 = vxpose.xlu0.b32.end [16/16] 0.0, 128
        %v1345 = vpop.trf.xlu0
        %v1346 = vpop.trf.xlu0
        %v1347 = vpop.trf.xlu0
        %v1348 = vpop.trf.xlu0
        %v1349 = vpop.trf.xlu0
        %v1350 = vpop.trf.xlu0
        %v1351 = vpop.trf.xlu0
        %v1352 = vpop.trf.xlu0
        %v1353 = vpop.trf.xlu0
        %v1354 = vpop.trf.xlu0
        %v1355 = vpop.trf.xlu0
        %v1356 = vpop.trf.xlu0
        %v1357 = vpop.trf.xlu0
        %v1358 = vpop.trf.xlu0
        %v1359 = vpop.trf.xlu0
        %v1360 = vpop.trf.xlu0
        %1361 = vxpose.xlu0.b32.start [1/16] %v1326, 128
        %1362 = vxpose.xlu0.b32.cont [2/16] 0.0, 128
        %1363 = vxpose.xlu0.b32.cont [3/16] 0.0, 128
        %1364 = vxpose.xlu0.b32.cont [4/16] 0.0, 128
        %1365 = vxpose.xlu0.b32.cont [5/16] 0.0, 128
        %1366 = vxpose.xlu0.b32.cont [6/16] 0.0, 128
        %1367 = vxpose.xlu0.b32.cont [7/16] 0.0, 128
        %1368 = vxpose.xlu0.b32.cont [8/16] 0.0, 128
        %1369 = vxpose.xlu0.b32.cont [9/16] 0.0, 128
        %1370 = vxpose.xlu0.b32.cont [10/16] 0.0, 128
        %1371 = vxpose.xlu0.b32.cont [11/16] 0.0, 128
        %1372 = vxpose.xlu0.b32.cont [12/16] 0.0, 128
        %1373 = vxpose.xlu0.b32.cont [13/16] 0.0, 128
        %1374 = vxpose.xlu0.b32.cont [14/16] 0.0, 128
        %1375 = vxpose.xlu0.b32.cont [15/16] 0.0, 128
        %1376 = vxpose.xlu0.b32.end [16/16] 0.0, 128
        %v1377 = vpop.trf.xlu0
        %v1378 = vpop.trf.xlu0
        %v1379 = vpop.trf.xlu0
        %v1380 = vpop.trf.xlu0
        %v1381 = vpop.trf.xlu0
        %v1382 = vpop.trf.xlu0
        %v1383 = vpop.trf.xlu0
        %v1384 = vpop.trf.xlu0
        %v1385 = vpop.trf.xlu0
        %v1386 = vpop.trf.xlu0
        %v1387 = vpop.trf.xlu0
        %v1388 = vpop.trf.xlu0
        %v1389 = vpop.trf.xlu0
        %v1390 = vpop.trf.xlu0
        %v1391 = vpop.trf.xlu0
        %v1392 = vpop.trf.xlu0
        %vm1393 = vcmask 31744
        %v1395 = vsel %vm1393, %v1345, 0
        %v1398 = vsel %vm1393, %v1346, 0
        %v1401 = vsel %vm1393, %v1347, 0
        %v1404 = vsel %vm1393, %v1348, 0
        %v1407 = vsel %vm1393, %v1349, 0
        %v1410 = vsel %vm1393, %v1350, 0
        %v1413 = vsel %vm1393, %v1351, 0
        %v1416 = vsel %vm1393, %v1352, 0
        %v1419 = vsel %vm1393, %v1353, 0
        %v1422 = vsel %vm1393, %v1354, 0
        %v1425 = vsel %vm1393, %v1355, 0
        %v1428 = vsel %vm1393, %v1356, 0
        %v1431 = vsel %vm1393, %v1357, 0
        %v1434 = vsel %vm1393, %v1358, 0
        %v1437 = vsel %vm1393, %v1359, 0
        %v1440 = vsel %vm1393, %v1360, 0
        %v1443 = vsel %vm1393, %v1377, 0
        %v1446 = vsel %vm1393, %v1378, 0
        %v1449 = vsel %vm1393, %v1379, 0
        %v1452 = vsel %vm1393, %v1380, 0
        %v1455 = vsel %vm1393, %v1381, 0
        %v1458 = vsel %vm1393, %v1382, 0
        %v1461 = vsel %vm1393, %v1383, 0
        %v1464 = vsel %vm1393, %v1384, 0
        %v1467 = vsel %vm1393, %v1385, 0
        %v1470 = vsel %vm1393, %v1386, 0
        %v1473 = vsel %vm1393, %v1387, 0
        %v1476 = vsel %vm1393, %v1388, 0
        %v1479 = vsel %vm1393, %v1389, 0
        %v1482 = vsel %vm1393, %v1390, 0
        %v1485 = vsel %vm1393, %v1391, 0
        %v1488 = vsel %vm1393, %v1392, 0
        %vm1490 = vcmask 1043456
        %v1492 = vsel %vm1490, %v1328, 0
        %1494 = vmatprep.subr.mxu0 0.0
        %1495 = vmatpush1.msra.mxu0 0.0
        %1496 = vmatprep.subr.mxu0 0.0
        %1497 = vmatpush1.msra.mxu0 0.0
        %1498 = vmatprep.subr.mxu0 0.0
        %1499 = vmatpush1.msra.mxu0 0.0
        %1500 = vmatprep.subr.mxu0 0.0
        %1501 = vmatpush1.msra.mxu0 0.0
        %1502 = vmatprep.subr.mxu0 0.0
        %1503 = vmatpush1.msra.mxu0 0.0
        %1504 = vmatprep.subr.mxu0 0.0
        %1505 = vmatpush1.msra.mxu0 0.0
        %1506 = vmatprep.subr.mxu0 0.0
        %1507 = vmatpush1.msra.mxu0 0.0
        %1508 = vmatprep.subr.mxu0 0.0
        %1509 = vmatpush1.msra.mxu0 0.0
        %1510 = vmatprep.subr.mxu0 0.0
        %1511 = vmatpush1.msra.mxu0 0.0
        %1512 = vmatprep.subr.mxu0 0.0
        %1513 = vmatpush1.msra.mxu0 0.0
        %1514 = vmatprep.subr.mxu0 0.0
        %1515 = vmatpush1.msra.mxu0 0.0
        %1516 = vmatprep.subr.mxu0 0.0
        %1517 = vmatpush1.msra.mxu0 0.0
        %1518 = vmatprep.subr.mxu0 0.0
        %1519 = vmatpush1.msra.mxu0 0.0
        %1520 = vmatprep.subr.mxu0 0.0
        %1521 = vmatpush1.msra.mxu0 0.0
        %1522 = vmatprep.subr.mxu0 0.0
        %1523 = vmatpush1.msra.mxu0 0.0
        %1524 = vmatprep.subr.mxu0 0.0
        %1525 = vmatpush1.msra.mxu0 %v1492
        %1526 = vmatprep.subr.mxu0 0.0
        %1527 = vmatpush2.msra.mxu0 0.0
        %1528 = vmatprep.subr.mxu0 0.0
        %1529 = vmatpush2.msra.mxu0 0.0
        %1530 = vmatprep.subr.mxu0 0.0
        %1531 = vmatpush2.msra.mxu0 0.0
        %1532 = vmatprep.subr.mxu0 0.0
        %1533 = vmatpush2.msra.mxu0 0.0
        %1534 = vmatprep.subr.mxu0 0.0
        %1535 = vmatpush2.msra.mxu0 0.0
        %1536 = vmatprep.subr.mxu0 0.0
        %1537 = vmatpush2.msra.mxu0 0.0
        %1538 = vmatprep.subr.mxu0 0.0
        %1539 = vmatpush2.msra.mxu0 0.0
        %1540 = vmatprep.subr.mxu0 0.0
        %1541 = vmatpush2.msra.mxu0 0.0
        %1542 = vmatprep.subr.mxu0 0.0
        %1543 = vmatpush2.msra.mxu0 0.0
        %1544 = vmatprep.subr.mxu0 0.0
        %1545 = vmatpush2.msra.mxu0 0.0
        %1546 = vmatprep.subr.mxu0 0.0
        %1547 = vmatpush2.msra.mxu0 0.0
        %1548 = vmatprep.subr.mxu0 0.0
        %1549 = vmatpush2.msra.mxu0 0.0
        %1550 = vmatprep.subr.mxu0 0.0
        %1551 = vmatpush2.msra.mxu0 0.0
        %1552 = vmatprep.subr.mxu0 0.0
        %1553 = vmatpush2.msra.mxu0 0.0
        %1554 = vmatprep.subr.mxu0 0.0
        %1555 = vmatpush2.msra.mxu0 0.0
        %1556 = vmatprep.subr.mxu0 0.0
        %1557 = vmatpush2.msra.mxu0 0.0
        %1558 = vmatprep.mubr.f32.mxu0 0.0
        %1559 = vmatmul.mubr.f32.gmra.mxu0 %v1395
        %v1560 = vpop.f32.mrf.mxu0
        %v1561 = vadd.f32 0.0, %v1560
        %v1562 = vpop.f32.mrf.mxu0
        %1563 = vmatprep.mubr.f32.mxu0 0.0
        %1564 = vmatmul.mubr.f32.gmra.mxu0 %v1398
        %v1565 = vpop.f32.mrf.mxu0
        %v1566 = vadd.f32 0.0, %v1565
        %v1567 = vpop.f32.mrf.mxu0
        %1568 = vmatprep.mubr.f32.mxu0 0.0
        %1569 = vmatmul.mubr.f32.gmra.mxu0 %v1401
        %v1570 = vpop.f32.mrf.mxu0
        %v1571 = vadd.f32 0.0, %v1570
        %v1572 = vpop.f32.mrf.mxu0
        %1573 = vmatprep.mubr.f32.mxu0 0.0
        %1574 = vmatmul.mubr.f32.gmra.mxu0 %v1404
        %v1575 = vpop.f32.mrf.mxu0
        %v1576 = vadd.f32 0.0, %v1575
        %v1577 = vpop.f32.mrf.mxu0
        %1578 = vmatprep.mubr.f32.mxu0 0.0
        %1579 = vmatmul.mubr.f32.gmra.mxu0 %v1407
        %v1580 = vpop.f32.mrf.mxu0
        %v1581 = vadd.f32 0.0, %v1580
        %v1582 = vpop.f32.mrf.mxu0
        %1583 = vmatprep.mubr.f32.mxu0 0.0
        %1584 = vmatmul.mubr.f32.gmra.mxu0 %v1410
        %v1585 = vpop.f32.mrf.mxu0
        %v1586 = vadd.f32 0.0, %v1585
        %v1587 = vpop.f32.mrf.mxu0
        %1588 = vmatprep.mubr.f32.mxu0 0.0
        %1589 = vmatmul.mubr.f32.gmra.mxu0 %v1413
        %v1590 = vpop.f32.mrf.mxu0
        %v1591 = vadd.f32 0.0, %v1590
        %v1592 = vpop.f32.mrf.mxu0
        %1593 = vmatprep.mubr.f32.mxu0 0.0
        %1594 = vmatmul.mubr.f32.gmra.mxu0 %v1416
        %v1595 = vpop.f32.mrf.mxu0
        %v1596 = vadd.f32 0.0, %v1595
        %v1597 = vpop.f32.mrf.mxu0
        %1598 = vmatprep.mubr.f32.mxu0 0.0
        %1599 = vmatmul.mubr.f32.gmra.mxu0 %v1419
        %v1600 = vpop.f32.mrf.mxu0
        %v1601 = vadd.f32 0.0, %v1600
        %v1602 = vpop.f32.mrf.mxu0
        %1603 = vmatprep.mubr.f32.mxu0 0.0
        %1604 = vmatmul.mubr.f32.gmra.mxu0 %v1422
        %v1605 = vpop.f32.mrf.mxu0
        %v1606 = vadd.f32 0.0, %v1605
        %v1607 = vpop.f32.mrf.mxu0
        %1608 = vmatprep.mubr.f32.mxu0 0.0
        %1609 = vmatmul.mubr.f32.gmra.mxu0 %v1425
        %v1610 = vpop.f32.mrf.mxu0
        %v1611 = vadd.f32 0.0, %v1610
        %v1612 = vpop.f32.mrf.mxu0
        %1613 = vmatprep.mubr.f32.mxu0 0.0
        %1614 = vmatmul.mubr.f32.gmra.mxu0 %v1428
        %v1615 = vpop.f32.mrf.mxu0
        %v1616 = vadd.f32 0.0, %v1615
        %v1617 = vpop.f32.mrf.mxu0
        %1618 = vmatprep.mubr.f32.mxu0 0.0
        %1619 = vmatmul.mubr.f32.gmra.mxu0 %v1431
        %v1620 = vpop.f32.mrf.mxu0
        %v1621 = vadd.f32 0.0, %v1620
        %v1622 = vpop.f32.mrf.mxu0
        %1623 = vmatprep.mubr.f32.mxu0 0.0
        %1624 = vmatmul.mubr.f32.gmra.mxu0 %v1434
        %v1625 = vpop.f32.mrf.mxu0
        %v1626 = vadd.f32 0.0, %v1625
        %v1627 = vpop.f32.mrf.mxu0
        %1628 = vmatprep.mubr.f32.mxu0 0.0
        %1629 = vmatmul.mubr.f32.gmra.mxu0 %v1437
        %v1630 = vpop.f32.mrf.mxu0
        %v1631 = vadd.f32 0.0, %v1630
        %v1632 = vpop.f32.mrf.mxu0
        %1633 = vmatprep.mubr.f32.mxu0 0.0
        %1634 = vmatmul.mubr.f32.gmra.mxu0 %v1440
        %v1635 = vpop.f32.mrf.mxu0
        %v1636 = vadd.f32 0.0, %v1635
        %v1637 = vpop.f32.mrf.mxu0
        %1638 = vmatprep.mubr.f32.mxu0 0.0
        %1639 = vmatmul.mubr.f32.gmra.mxu0 %v1443
        %v1640 = vpop.f32.mrf.mxu0
        %v1641 = vadd.f32 0.0, %v1640
        %v1642 = vpop.f32.mrf.mxu0
        %1643 = vmatprep.mubr.f32.mxu0 0.0
        %1644 = vmatmul.mubr.f32.gmra.mxu0 %v1446
        %v1645 = vpop.f32.mrf.mxu0
        %v1646 = vadd.f32 0.0, %v1645
        %v1647 = vpop.f32.mrf.mxu0
        %1648 = vmatprep.mubr.f32.mxu0 0.0
        %1649 = vmatmul.mubr.f32.gmra.mxu0 %v1449
        %v1650 = vpop.f32.mrf.mxu0
        %v1651 = vadd.f32 0.0, %v1650
        %v1652 = vpop.f32.mrf.mxu0
        %1653 = vmatprep.mubr.f32.mxu0 0.0
        %1654 = vmatmul.mubr.f32.gmra.mxu0 %v1452
        %v1655 = vpop.f32.mrf.mxu0
        %v1656 = vadd.f32 0.0, %v1655
        %v1657 = vpop.f32.mrf.mxu0
        %1658 = vmatprep.mubr.f32.mxu0 0.0
        %1659 = vmatmul.mubr.f32.gmra.mxu0 %v1455
        %v1660 = vpop.f32.mrf.mxu0
        %v1661 = vadd.f32 0.0, %v1660
        %v1662 = vpop.f32.mrf.mxu0
        %1663 = vmatprep.mubr.f32.mxu0 0.0
        %1664 = vmatmul.mubr.f32.gmra.mxu0 %v1458
        %v1665 = vpop.f32.mrf.mxu0
        %v1666 = vadd.f32 0.0, %v1665
        %v1667 = vpop.f32.mrf.mxu0
        %1668 = vmatprep.mubr.f32.mxu0 0.0
        %1669 = vmatmul.mubr.f32.gmra.mxu0 %v1461
        %v1670 = vpop.f32.mrf.mxu0
        %v1671 = vadd.f32 0.0, %v1670
        %v1672 = vpop.f32.mrf.mxu0
        %1673 = vmatprep.mubr.f32.mxu0 0.0
        %1674 = vmatmul.mubr.f32.gmra.mxu0 %v1464
        %v1675 = vpop.f32.mrf.mxu0
        %v1676 = vadd.f32 0.0, %v1675
        %v1677 = vpop.f32.mrf.mxu0
        %1678 = vmatprep.mubr.f32.mxu0 0.0
        %1679 = vmatmul.mubr.f32.gmra.mxu0 %v1467
        %v1680 = vpop.f32.mrf.mxu0
        %v1681 = vadd.f32 0.0, %v1680
        %v1682 = vpop.f32.mrf.mxu0
        %1683 = vmatprep.mubr.f32.mxu0 0.0
        %1684 = vmatmul.mubr.f32.gmra.mxu0 %v1470
        %v1685 = vpop.f32.mrf.mxu0
        %v1686 = vadd.f32 0.0, %v1685
        %v1687 = vpop.f32.mrf.mxu0
        %1688 = vmatprep.mubr.f32.mxu0 0.0
        %1689 = vmatmul.mubr.f32.gmra.mxu0 %v1473
        %v1690 = vpop.f32.mrf.mxu0
        %v1691 = vadd.f32 0.0, %v1690
        %v1692 = vpop.f32.mrf.mxu0
        %1693 = vmatprep.mubr.f32.mxu0 0.0
        %1694 = vmatmul.mubr.f32.gmra.mxu0 %v1476
        %v1695 = vpop.f32.mrf.mxu0
        %v1696 = vadd.f32 0.0, %v1695
        %v1697 = vpop.f32.mrf.mxu0
        %1698 = vmatprep.mubr.f32.mxu0 0.0
        %1699 = vmatmul.mubr.f32.gmra.mxu0 %v1479
        %v1700 = vpop.f32.mrf.mxu0
        %v1701 = vadd.f32 0.0, %v1700
        %v1702 = vpop.f32.mrf.mxu0
        %1703 = vmatprep.mubr.f32.mxu0 0.0
        %1704 = vmatmul.mubr.f32.gmra.mxu0 %v1482
        %v1705 = vpop.f32.mrf.mxu0
        %v1706 = vadd.f32 0.0, %v1705
        %v1707 = vpop.f32.mrf.mxu0
        %1708 = vmatprep.mubr.f32.mxu0 0.0
        %1709 = vmatmul.mubr.f32.gmra.mxu0 %v1485
        %v1710 = vpop.f32.mrf.mxu0
        %v1711 = vadd.f32 0.0, %v1710
        %v1712 = vpop.f32.mrf.mxu0
        %1713 = vmatprep.mubr.f32.mxu0 0.0
        %1714 = vmatmul.mubr.f32.gmra.mxu0 %v1488
        %v1715 = vpop.f32.mrf.mxu0
        %v1716 = vadd.f32 0.0, %v1715
        %v1717 = vpop.f32.mrf.mxu0
        %1718 = vdwg.mxu0
        %vm1719 = vcmask 523264
        %v1720 = vsel %vm1719, %v1561, -inf
        %1721 = vmax.xlane.f32.xlu0 %v1720
        %v1722 = vpop.xlane.xlu0 %1721
        %v1723 = vsel %vm1719, %v1566, -inf
        %1724 = vmax.xlane.f32.xlu0 %v1723
        %v1725 = vpop.xlane.xlu0 %1724
        %v1726 = vsel %vm1719, %v1571, -inf
        %1727 = vmax.xlane.f32.xlu0 %v1726
        %v1728 = vpop.xlane.xlu0 %1727
        %v1729 = vsel %vm1719, %v1576, -inf
        %1730 = vmax.xlane.f32.xlu0 %v1729
        %v1731 = vpop.xlane.xlu0 %1730
        %v1732 = vsel %vm1719, %v1581, -inf
        %1733 = vmax.xlane.f32.xlu0 %v1732
        %v1734 = vpop.xlane.xlu0 %1733
        %v1735 = vsel %vm1719, %v1586, -inf
        %1736 = vmax.xlane.f32.xlu0 %v1735
        %v1737 = vpop.xlane.xlu0 %1736
        %v1738 = vsel %vm1719, %v1591, -inf
        %1739 = vmax.xlane.f32.xlu0 %v1738
        %v1740 = vpop.xlane.xlu0 %1739
        %v1741 = vsel %vm1719, %v1596, -inf
        %1742 = vmax.xlane.f32.xlu0 %v1741
        %v1743 = vpop.xlane.xlu0 %1742
        %v1744 = vsel %vm1719, %v1601, -inf
        %1745 = vmax.xlane.f32.xlu0 %v1744
        %v1746 = vpop.xlane.xlu0 %1745
        %v1747 = vsel %vm1719, %v1606, -inf
        %1748 = vmax.xlane.f32.xlu0 %v1747
        %v1749 = vpop.xlane.xlu0 %1748
        %v1750 = vsel %vm1719, %v1611, -inf
        %1751 = vmax.xlane.f32.xlu0 %v1750
        %v1752 = vpop.xlane.xlu0 %1751
        %v1753 = vsel %vm1719, %v1616, -inf
        %1754 = vmax.xlane.f32.xlu0 %v1753
        %v1755 = vpop.xlane.xlu0 %1754
        %v1756 = vsel %vm1719, %v1621, -inf
        %1757 = vmax.xlane.f32.xlu0 %v1756
        %v1758 = vpop.xlane.xlu0 %1757
        %v1759 = vsel %vm1719, %v1626, -inf
        %1760 = vmax.xlane.f32.xlu0 %v1759
        %v1761 = vpop.xlane.xlu0 %1760
        %v1762 = vsel %vm1719, %v1631, -inf
        %1763 = vmax.xlane.f32.xlu0 %v1762
        %v1764 = vpop.xlane.xlu0 %1763
        %v1765 = vsel %vm1719, %v1636, -inf
        %1766 = vmax.xlane.f32.xlu0 %v1765
        %v1767 = vpop.xlane.xlu0 %1766
        %v1768 = vsel %vm1719, %v1641, -inf
        %1769 = vmax.xlane.f32.xlu0 %v1768
        %v1770 = vpop.xlane.xlu0 %1769
        %v1771 = vsel %vm1719, %v1646, -inf
        %1772 = vmax.xlane.f32.xlu0 %v1771
        %v1773 = vpop.xlane.xlu0 %1772
        %v1774 = vsel %vm1719, %v1651, -inf
        %1775 = vmax.xlane.f32.xlu0 %v1774
        %v1776 = vpop.xlane.xlu0 %1775
        %v1777 = vsel %vm1719, %v1656, -inf
        %1778 = vmax.xlane.f32.xlu0 %v1777
        %v1779 = vpop.xlane.xlu0 %1778
        %v1780 = vsel %vm1719, %v1661, -inf
        %1781 = vmax.xlane.f32.xlu0 %v1780
        %v1782 = vpop.xlane.xlu0 %1781
        %v1783 = vsel %vm1719, %v1666, -inf
        %1784 = vmax.xlane.f32.xlu0 %v1783
        %v1785 = vpop.xlane.xlu0 %1784
        %v1786 = vsel %vm1719, %v1671, -inf
        %1787 = vmax.xlane.f32.xlu0 %v1786
        %v1788 = vpop.xlane.xlu0 %1787
        %v1789 = vsel %vm1719, %v1676, -inf
        %1790 = vmax.xlane.f32.xlu0 %v1789
        %v1791 = vpop.xlane.xlu0 %1790
        %v1792 = vsel %vm1719, %v1681, -inf
        %1793 = vmax.xlane.f32.xlu0 %v1792
        %v1794 = vpop.xlane.xlu0 %1793
        %v1795 = vsel %vm1719, %v1686, -inf
        %1796 = vmax.xlane.f32.xlu0 %v1795
        %v1797 = vpop.xlane.xlu0 %1796
        %v1798 = vsel %vm1719, %v1691, -inf
        %1799 = vmax.xlane.f32.xlu0 %v1798
        %v1800 = vpop.xlane.xlu0 %1799
        %v1801 = vsel %vm1719, %v1696, -inf
        %1802 = vmax.xlane.f32.xlu0 %v1801
        %v1803 = vpop.xlane.xlu0 %1802
        %v1804 = vsel %vm1719, %v1701, -inf
        %1805 = vmax.xlane.f32.xlu0 %v1804
        %v1806 = vpop.xlane.xlu0 %1805
        %v1807 = vsel %vm1719, %v1706, -inf
        %1808 = vmax.xlane.f32.xlu0 %v1807
        %v1809 = vpop.xlane.xlu0 %1808
        %v1810 = vsel %vm1719, %v1711, -inf
        %1811 = vmax.xlane.f32.xlu0 %v1810
        %v1812 = vpop.xlane.xlu0 %1811
        %v1813 = vsel %vm1719, %v1716, -inf
        %1814 = vmax.xlane.f32.xlu0 %v1813
        %v1815 = vpop.xlane.xlu0 %1814
        %v1816 = vsub.f32 %v1561, %v1722
        %v1817 = vsub.f32 %v1566, %v1725
        %v1818 = vsub.f32 %v1571, %v1728
        %v1819 = vsub.f32 %v1576, %v1731
        %v1820 = vsub.f32 %v1581, %v1734
        %v1821 = vsub.f32 %v1586, %v1737
        %v1822 = vsub.f32 %v1591, %v1740
        %v1823 = vsub.f32 %v1596, %v1743
        %v1824 = vsub.f32 %v1601, %v1746
        %v1825 = vsub.f32 %v1606, %v1749
        %v1826 = vsub.f32 %v1611, %v1752
        %v1827 = vsub.f32 %v1616, %v1755
        %v1828 = vsub.f32 %v1621, %v1758
        %v1829 = vsub.f32 %v1626, %v1761
        %v1830 = vsub.f32 %v1631, %v1764
        %v1831 = vsub.f32 %v1636, %v1767
        %v1832 = vsub.f32 %v1641, %v1770
        %v1833 = vsub.f32 %v1646, %v1773
        %v1834 = vsub.f32 %v1651, %v1776
        %v1835 = vsub.f32 %v1656, %v1779
        %v1836 = vsub.f32 %v1661, %v1782
        %v1837 = vsub.f32 %v1666, %v1785
        %v1838 = vsub.f32 %v1671, %v1788
        %v1839 = vsub.f32 %v1676, %v1791
        %v1840 = vsub.f32 %v1681, %v1794
        %v1841 = vsub.f32 %v1686, %v1797
        %v1842 = vsub.f32 %v1691, %v1800
        %v1843 = vsub.f32 %v1696, %v1803
        %v1844 = vsub.f32 %v1701, %v1806
        %v1845 = vsub.f32 %v1706, %v1809
        %v1846 = vsub.f32 %v1711, %v1812
        %v1847 = vsub.f32 %v1716, %v1815
        %v1848 = vmul.f32 %v1816, 1.442695
        %v1849 = vpow.pop %v1848
        %v1850 = vmul.f32 %v1817, 1.442695
        %v1851 = vpow.pop %v1850
        %v1852 = vmul.f32 %v1818, 1.442695
        %v1853 = vpow.pop %v1852
        %v1854 = vmul.f32 %v1819, 1.442695
        %v1855 = vpow.pop %v1854
        %v1856 = vmul.f32 %v1820, 1.442695
        %v1857 = vpow.pop %v1856
        %v1858 = vmul.f32 %v1821, 1.442695
        %v1859 = vpow.pop %v1858
        %v1860 = vmul.f32 %v1822, 1.442695
        %v1861 = vpow.pop %v1860
        %v1862 = vmul.f32 %v1823, 1.442695
        %v1863 = vpow.pop %v1862
        %v1864 = vmul.f32 %v1824, 1.442695
        %v1865 = vpow.pop %v1864
        %v1866 = vmul.f32 %v1825, 1.442695
        %v1867 = vpow.pop %v1866
        %v1868 = vmul.f32 %v1826, 1.442695
        %v1869 = vpow.pop %v1868
        %v1870 = vmul.f32 %v1827, 1.442695
        %v1871 = vpow.pop %v1870
        %v1872 = vmul.f32 %v1828, 1.442695
        %v1873 = vpow.pop %v1872
        %v1874 = vmul.f32 %v1829, 1.442695
        %v1875 = vpow.pop %v1874
        %v1876 = vmul.f32 %v1830, 1.442695
        %v1877 = vpow.pop %v1876
        %v1878 = vmul.f32 %v1831, 1.442695
        %v1879 = vpow.pop %v1878
        %v1880 = vmul.f32 %v1832, 1.442695
        %v1881 = vpow.pop %v1880
        %v1882 = vmul.f32 %v1833, 1.442695
        %v1883 = vpow.pop %v1882
        %v1884 = vmul.f32 %v1834, 1.442695
        %v1885 = vpow.pop %v1884
        %v1886 = vmul.f32 %v1835, 1.442695
        %v1887 = vpow.pop %v1886
        %v1888 = vmul.f32 %v1836, 1.442695
        %v1889 = vpow.pop %v1888
        %v1890 = vmul.f32 %v1837, 1.442695
        %v1891 = vpow.pop %v1890
        %v1892 = vmul.f32 %v1838, 1.442695
        %v1893 = vpow.pop %v1892
        %v1894 = vmul.f32 %v1839, 1.442695
        %v1895 = vpow.pop %v1894
        %v1896 = vmul.f32 %v1840, 1.442695
        %v1897 = vpow.pop %v1896
        %v1898 = vmul.f32 %v1841, 1.442695
        %v1899 = vpow.pop %v1898
        %v1900 = vmul.f32 %v1842, 1.442695
        %v1901 = vpow.pop %v1900
        %v1902 = vmul.f32 %v1843, 1.442695
        %v1903 = vpow.pop %v1902
        %v1904 = vmul.f32 %v1844, 1.442695
        %v1905 = vpow.pop %v1904
        %v1906 = vmul.f32 %v1845, 1.442695
        %v1907 = vpow.pop %v1906
        %v1908 = vmul.f32 %v1846, 1.442695
        %v1909 = vpow.pop %v1908
        %v1910 = vmul.f32 %v1847, 1.442695
        %v1911 = vpow.pop %v1910
        %v1912 = vsel %vm1719, %v1849, 0.0
        %1913 = vadd.xlane.f32.xlu0 %v1912
        %v1914 = vpop.xlane.xlu0 %1913
        %v1915 = vsel %vm1719, %v1851, 0.0
        %1916 = vadd.xlane.f32.xlu0 %v1915
        %v1917 = vpop.xlane.xlu0 %1916
        %v1918 = vsel %vm1719, %v1853, 0.0
        %1919 = vadd.xlane.f32.xlu0 %v1918
        %v1920 = vpop.xlane.xlu0 %1919
        %v1921 = vsel %vm1719, %v1855, 0.0
        %1922 = vadd.xlane.f32.xlu0 %v1921
        %v1923 = vpop.xlane.xlu0 %1922
        %v1924 = vsel %vm1719, %v1857, 0.0
        %1925 = vadd.xlane.f32.xlu0 %v1924
        %v1926 = vpop.xlane.xlu0 %1925
        %v1927 = vsel %vm1719, %v1859, 0.0
        %1928 = vadd.xlane.f32.xlu0 %v1927
        %v1929 = vpop.xlane.xlu0 %1928
        %v1930 = vsel %vm1719, %v1861, 0.0
        %1931 = vadd.xlane.f32.xlu0 %v1930
        %v1932 = vpop.xlane.xlu0 %1931
        %v1933 = vsel %vm1719, %v1863, 0.0
        %1934 = vadd.xlane.f32.xlu0 %v1933
        %v1935 = vpop.xlane.xlu0 %1934
        %v1936 = vsel %vm1719, %v1865, 0.0
        %1937 = vadd.xlane.f32.xlu0 %v1936
        %v1938 = vpop.xlane.xlu0 %1937
        %v1939 = vsel %vm1719, %v1867, 0.0
        %1940 = vadd.xlane.f32.xlu0 %v1939
        %v1941 = vpop.xlane.xlu0 %1940
        %v1942 = vsel %vm1719, %v1869, 0.0
        %1943 = vadd.xlane.f32.xlu0 %v1942
        %v1944 = vpop.xlane.xlu0 %1943
        %v1945 = vsel %vm1719, %v1871, 0.0
        %1946 = vadd.xlane.f32.xlu0 %v1945
        %v1947 = vpop.xlane.xlu0 %1946
        %v1948 = vsel %vm1719, %v1873, 0.0
        %1949 = vadd.xlane.f32.xlu0 %v1948
        %v1950 = vpop.xlane.xlu0 %1949
        %v1951 = vsel %vm1719, %v1875, 0.0
        %1952 = vadd.xlane.f32.xlu0 %v1951
        %v1953 = vpop.xlane.xlu0 %1952
        %v1954 = vsel %vm1719, %v1877, 0.0
        %1955 = vadd.xlane.f32.xlu0 %v1954
        %v1956 = vpop.xlane.xlu0 %1955
        %v1957 = vsel %vm1719, %v1879, 0.0
        %1958 = vadd.xlane.f32.xlu0 %v1957
        %v1959 = vpop.xlane.xlu0 %1958
        %v1960 = vsel %vm1719, %v1881, 0.0
        %1961 = vadd.xlane.f32.xlu0 %v1960
        %v1962 = vpop.xlane.xlu0 %1961
        %v1963 = vsel %vm1719, %v1883, 0.0
        %1964 = vadd.xlane.f32.xlu0 %v1963
        %v1965 = vpop.xlane.xlu0 %1964
        %v1966 = vsel %vm1719, %v1885, 0.0
        %1967 = vadd.xlane.f32.xlu0 %v1966
        %v1968 = vpop.xlane.xlu0 %1967
        %v1969 = vsel %vm1719, %v1887, 0.0
        %1970 = vadd.xlane.f32.xlu0 %v1969
        %v1971 = vpop.xlane.xlu0 %1970
        %v1972 = vsel %vm1719, %v1889, 0.0
        %1973 = vadd.xlane.f32.xlu0 %v1972
        %v1974 = vpop.xlane.xlu0 %1973
        %v1975 = vsel %vm1719, %v1891, 0.0
        %1976 = vadd.xlane.f32.xlu0 %v1975
        %v1977 = vpop.xlane.xlu0 %1976
        %v1978 = vsel %vm1719, %v1893, 0.0
        %1979 = vadd.xlane.f32.xlu0 %v1978
        %v1980 = vpop.xlane.xlu0 %1979
        %v1981 = vsel %vm1719, %v1895, 0.0
        %1982 = vadd.xlane.f32.xlu0 %v1981
        %v1983 = vpop.xlane.xlu0 %1982
        %v1984 = vsel %vm1719, %v1897, 0.0
        %1985 = vadd.xlane.f32.xlu0 %v1984
        %v1986 = vpop.xlane.xlu0 %1985
        %v1987 = vsel %vm1719, %v1899, 0.0
        %1988 = vadd.xlane.f32.xlu0 %v1987
        %v1989 = vpop.xlane.xlu0 %1988
        %v1990 = vsel %vm1719, %v1901, 0.0
        %1991 = vadd.xlane.f32.xlu0 %v1990
        %v1992 = vpop.xlane.xlu0 %1991
        %v1993 = vsel %vm1719, %v1903, 0.0
        %1994 = vadd.xlane.f32.xlu0 %v1993
        %v1995 = vpop.xlane.xlu0 %1994
        %v1996 = vsel %vm1719, %v1905, 0.0
        %1997 = vadd.xlane.f32.xlu0 %v1996
        %v1998 = vpop.xlane.xlu0 %1997
        %v1999 = vsel %vm1719, %v1907, 0.0
        %2000 = vadd.xlane.f32.xlu0 %v1999
        %v2001 = vpop.xlane.xlu0 %2000
        %v2002 = vsel %vm1719, %v1909, 0.0
        %2003 = vadd.xlane.f32.xlu0 %v2002
        %v2004 = vpop.xlane.xlu0 %2003
        %v2005 = vsel %vm1719, %v1911, 0.0
        %2006 = vadd.xlane.f32.xlu0 %v2005
        %v2007 = vpop.xlane.xlu0 %2006
        %v2008 = vld [vmem:[#allocation5] sm:$0xf]
        %v2010 = vsel %vm1719, %v1849, 0
        %v2013 = vsel %vm1719, %v1851, 0
        %v2016 = vsel %vm1719, %v1853, 0
        %v2019 = vsel %vm1719, %v1855, 0
        %v2022 = vsel %vm1719, %v1857, 0
        %v2025 = vsel %vm1719, %v1859, 0
        %v2028 = vsel %vm1719, %v1861, 0
        %v2031 = vsel %vm1719, %v1863, 0
        %v2034 = vsel %vm1719, %v1865, 0
        %v2037 = vsel %vm1719, %v1867, 0
        %v2040 = vsel %vm1719, %v1869, 0
        %v2043 = vsel %vm1719, %v1871, 0
        %v2046 = vsel %vm1719, %v1873, 0
        %v2049 = vsel %vm1719, %v1875, 0
        %v2052 = vsel %vm1719, %v1877, 0
        %v2055 = vsel %vm1719, %v1879, 0
        %v2058 = vsel %vm1719, %v1881, 0
        %v2061 = vsel %vm1719, %v1883, 0
        %v2064 = vsel %vm1719, %v1885, 0
        %v2067 = vsel %vm1719, %v1887, 0
        %v2070 = vsel %vm1719, %v1889, 0
        %v2073 = vsel %vm1719, %v1891, 0
        %v2076 = vsel %vm1719, %v1893, 0
        %v2079 = vsel %vm1719, %v1895, 0
        %v2082 = vsel %vm1719, %v1897, 0
        %v2085 = vsel %vm1719, %v1899, 0
        %v2088 = vsel %vm1719, %v1901, 0
        %v2091 = vsel %vm1719, %v1903, 0
        %v2094 = vsel %vm1719, %v1905, 0
        %v2097 = vsel %vm1719, %v1907, 0
        %v2100 = vsel %vm1719, %v1909, 0
        %v2103 = vsel %vm1719, %v1911, 0
        %v2106 = vsel %vm1719, %v2008, 0
        %2108 = vmatprep.subr.mxu0 0.0
        %2109 = vmatpush1.xpose.msra.mxu0 0.0
        %2110 = vmatprep.subr.mxu0 0.0
        %2111 = vmatpush1.xpose.msra.mxu0 0.0
        %2112 = vmatprep.subr.mxu0 0.0
        %2113 = vmatpush1.xpose.msra.mxu0 0.0
        %2114 = vmatprep.subr.mxu0 0.0
        %2115 = vmatpush1.xpose.msra.mxu0 0.0
        %2116 = vmatprep.subr.mxu0 0.0
        %2117 = vmatpush1.xpose.msra.mxu0 0.0
        %2118 = vmatprep.subr.mxu0 0.0
        %2119 = vmatpush1.xpose.msra.mxu0 0.0
        %2120 = vmatprep.subr.mxu0 0.0
        %2121 = vmatpush1.xpose.msra.mxu0 0.0
        %2122 = vmatprep.subr.mxu0 0.0
        %2123 = vmatpush1.xpose.msra.mxu0 0.0
        %2124 = vmatprep.subr.mxu0 0.0
        %2125 = vmatpush1.xpose.msra.mxu0 0.0
        %2126 = vmatprep.subr.mxu0 0.0
        %2127 = vmatpush1.xpose.msra.mxu0 0.0
        %2128 = vmatprep.subr.mxu0 0.0
        %2129 = vmatpush1.xpose.msra.mxu0 0.0
        %2130 = vmatprep.subr.mxu0 0.0
        %2131 = vmatpush1.xpose.msra.mxu0 0.0
        %2132 = vmatprep.subr.mxu0 0.0
        %2133 = vmatpush1.xpose.msra.mxu0 0.0
        %2134 = vmatprep.subr.mxu0 0.0
        %2135 = vmatpush1.xpose.msra.mxu0 0.0
        %2136 = vmatprep.subr.mxu0 0.0
        %2137 = vmatpush1.xpose.msra.mxu0 0.0
        %2138 = vmatprep.subr.mxu0 0.0
        %2139 = vmatpush1.xpose.msra.mxu0 %v2106
        %2140 = vmatprep.subr.mxu0 0.0
        %2141 = vmatpush2.xpose.msra.mxu0 0.0
        %2142 = vmatprep.subr.mxu0 0.0
        %2143 = vmatpush2.xpose.msra.mxu0 0.0
        %2144 = vmatprep.subr.mxu0 0.0
        %2145 = vmatpush2.xpose.msra.mxu0 0.0
        %2146 = vmatprep.subr.mxu0 0.0
        %2147 = vmatpush2.xpose.msra.mxu0 0.0
        %2148 = vmatprep.subr.mxu0 0.0
        %2149 = vmatpush2.xpose.msra.mxu0 0.0
        %2150 = vmatprep.subr.mxu0 0.0
        %2151 = vmatpush2.xpose.msra.mxu0 0.0
        %2152 = vmatprep.subr.mxu0 0.0
        %2153 = vmatpush2.xpose.msra.mxu0 0.0
        %2154 = vmatprep.subr.mxu0 0.0
        %2155 = vmatpush2.xpose.msra.mxu0 0.0
        %2156 = vmatprep.subr.mxu0 0.0
        %2157 = vmatpush2.xpose.msra.mxu0 0.0
        %2158 = vmatprep.subr.mxu0 0.0
        %2159 = vmatpush2.xpose.msra.mxu0 0.0
        %2160 = vmatprep.subr.mxu0 0.0
        %2161 = vmatpush2.xpose.msra.mxu0 0.0
        %2162 = vmatprep.subr.mxu0 0.0
        %2163 = vmatpush2.xpose.msra.mxu0 0.0
        %2164 = vmatprep.subr.mxu0 0.0
        %2165 = vmatpush2.xpose.msra.mxu0 0.0
        %2166 = vmatprep.subr.mxu0 0.0
        %2167 = vmatpush2.xpose.msra.mxu0 0.0
        %2168 = vmatprep.subr.mxu0 0.0
        %2169 = vmatpush2.xpose.msra.mxu0 0.0
        %2170 = vmatprep.subr.mxu0 0.0
        %2171 = vmatpush2.xpose.msra.mxu0 0.0
        %2172 = vmatprep.mubr.f32.mxu0 0.0
        %2173 = vmatmul.mubr.f32.gmra.mxu0 %v2010
        %v2174 = vpop.f32.mrf.mxu0
        %v2175 = vadd.f32 0.0, %v2174
        %v2176 = vpop.f32.mrf.mxu0
        %2177 = vmatprep.mubr.f32.mxu0 0.0
        %2178 = vmatmul.mubr.f32.gmra.mxu0 %v2013
        %v2179 = vpop.f32.mrf.mxu0
        %v2180 = vadd.f32 0.0, %v2179
        %v2181 = vpop.f32.mrf.mxu0
        %2182 = vmatprep.mubr.f32.mxu0 0.0
        %2183 = vmatmul.mubr.f32.gmra.mxu0 %v2016
        %v2184 = vpop.f32.mrf.mxu0
        %v2185 = vadd.f32 0.0, %v2184
        %v2186 = vpop.f32.mrf.mxu0
        %2187 = vmatprep.mubr.f32.mxu0 0.0
        %2188 = vmatmul.mubr.f32.gmra.mxu0 %v2019
        %v2189 = vpop.f32.mrf.mxu0
        %v2190 = vadd.f32 0.0, %v2189
        %v2191 = vpop.f32.mrf.mxu0
        %2192 = vmatprep.mubr.f32.mxu0 0.0
        %2193 = vmatmul.mubr.f32.gmra.mxu0 %v2022
        %v2194 = vpop.f32.mrf.mxu0
        %v2195 = vadd.f32 0.0, %v2194
        %v2196 = vpop.f32.mrf.mxu0
        %2197 = vmatprep.mubr.f32.mxu0 0.0
        %2198 = vmatmul.mubr.f32.gmra.mxu0 %v2025
        %v2199 = vpop.f32.mrf.mxu0
        %v2200 = vadd.f32 0.0, %v2199
        %v2201 = vpop.f32.mrf.mxu0
        %2202 = vmatprep.mubr.f32.mxu0 0.0
        %2203 = vmatmul.mubr.f32.gmra.mxu0 %v2028
        %v2204 = vpop.f32.mrf.mxu0
        %v2205 = vadd.f32 0.0, %v2204
        %v2206 = vpop.f32.mrf.mxu0
        %2207 = vmatprep.mubr.f32.mxu0 0.0
        %2208 = vmatmul.mubr.f32.gmra.mxu0 %v2031
        %v2209 = vpop.f32.mrf.mxu0
        %v2210 = vadd.f32 0.0, %v2209
        %v2211 = vpop.f32.mrf.mxu0
        %2212 = vmatprep.mubr.f32.mxu0 0.0
        %2213 = vmatmul.mubr.f32.gmra.mxu0 %v2034
        %v2214 = vpop.f32.mrf.mxu0
        %v2215 = vadd.f32 0.0, %v2214
        %v2216 = vpop.f32.mrf.mxu0
        %2217 = vmatprep.mubr.f32.mxu0 0.0
        %2218 = vmatmul.mubr.f32.gmra.mxu0 %v2037
        %v2219 = vpop.f32.mrf.mxu0
        %v2220 = vadd.f32 0.0, %v2219
        %v2221 = vpop.f32.mrf.mxu0
        %2222 = vmatprep.mubr.f32.mxu0 0.0
        %2223 = vmatmul.mubr.f32.gmra.mxu0 %v2040
        %v2224 = vpop.f32.mrf.mxu0
        %v2225 = vadd.f32 0.0, %v2224
        %v2226 = vpop.f32.mrf.mxu0
        %2227 = vmatprep.mubr.f32.mxu0 0.0
        %2228 = vmatmul.mubr.f32.gmra.mxu0 %v2043
        %v2229 = vpop.f32.mrf.mxu0
        %v2230 = vadd.f32 0.0, %v2229
        %v2231 = vpop.f32.mrf.mxu0
        %2232 = vmatprep.mubr.f32.mxu0 0.0
        %2233 = vmatmul.mubr.f32.gmra.mxu0 %v2046
        %v2234 = vpop.f32.mrf.mxu0
        %v2235 = vadd.f32 0.0, %v2234
        %v2236 = vpop.f32.mrf.mxu0
        %2237 = vmatprep.mubr.f32.mxu0 0.0
        %2238 = vmatmul.mubr.f32.gmra.mxu0 %v2049
        %v2239 = vpop.f32.mrf.mxu0
        %v2240 = vadd.f32 0.0, %v2239
        %v2241 = vpop.f32.mrf.mxu0
        %2242 = vmatprep.mubr.f32.mxu0 0.0
        %2243 = vmatmul.mubr.f32.gmra.mxu0 %v2052
        %v2244 = vpop.f32.mrf.mxu0
        %v2245 = vadd.f32 0.0, %v2244
        %v2246 = vpop.f32.mrf.mxu0
        %2247 = vmatprep.mubr.f32.mxu0 0.0
        %2248 = vmatmul.mubr.f32.gmra.mxu0 %v2055
        %v2249 = vpop.f32.mrf.mxu0
        %v2250 = vadd.f32 0.0, %v2249
        %v2251 = vpop.f32.mrf.mxu0
        %2252 = vmatprep.mubr.f32.mxu0 0.0
        %2253 = vmatmul.mubr.f32.gmra.mxu0 %v2058
        %v2254 = vpop.f32.mrf.mxu0
        %v2255 = vadd.f32 0.0, %v2254
        %v2256 = vpop.f32.mrf.mxu0
        %2257 = vmatprep.mubr.f32.mxu0 0.0
        %2258 = vmatmul.mubr.f32.gmra.mxu0 %v2061
        %v2259 = vpop.f32.mrf.mxu0
        %v2260 = vadd.f32 0.0, %v2259
        %v2261 = vpop.f32.mrf.mxu0
        %2262 = vmatprep.mubr.f32.mxu0 0.0
        %2263 = vmatmul.mubr.f32.gmra.mxu0 %v2064
        %v2264 = vpop.f32.mrf.mxu0
        %v2265 = vadd.f32 0.0, %v2264
        %v2266 = vpop.f32.mrf.mxu0
        %2267 = vmatprep.mubr.f32.mxu0 0.0
        %2268 = vmatmul.mubr.f32.gmra.mxu0 %v2067
        %v2269 = vpop.f32.mrf.mxu0
        %v2270 = vadd.f32 0.0, %v2269
        %v2271 = vpop.f32.mrf.mxu0
        %2272 = vmatprep.mubr.f32.mxu0 0.0
        %2273 = vmatmul.mubr.f32.gmra.mxu0 %v2070
        %v2274 = vpop.f32.mrf.mxu0
        %v2275 = vadd.f32 0.0, %v2274
        %v2276 = vpop.f32.mrf.mxu0
        %2277 = vmatprep.mubr.f32.mxu0 0.0
        %2278 = vmatmul.mubr.f32.gmra.mxu0 %v2073
        %v2279 = vpop.f32.mrf.mxu0
        %v2280 = vadd.f32 0.0, %v2279
        %v2281 = vpop.f32.mrf.mxu0
        %2282 = vmatprep.mubr.f32.mxu0 0.0
        %2283 = vmatmul.mubr.f32.gmra.mxu0 %v2076
        %v2284 = vpop.f32.mrf.mxu0
        %v2285 = vadd.f32 0.0, %v2284
        %v2286 = vpop.f32.mrf.mxu0
        %2287 = vmatprep.mubr.f32.mxu0 0.0
        %2288 = vmatmul.mubr.f32.gmra.mxu0 %v2079
        %v2289 = vpop.f32.mrf.mxu0
        %v2290 = vadd.f32 0.0, %v2289
        %v2291 = vpop.f32.mrf.mxu0
        %2292 = vmatprep.mubr.f32.mxu0 0.0
        %2293 = vmatmul.mubr.f32.gmra.mxu0 %v2082
        %v2294 = vpop.f32.mrf.mxu0
        %v2295 = vadd.f32 0.0, %v2294
        %v2296 = vpop.f32.mrf.mxu0
        %2297 = vmatprep.mubr.f32.mxu0 0.0
        %2298 = vmatmul.mubr.f32.gmra.mxu0 %v2085
        %v2299 = vpop.f32.mrf.mxu0
        %v2300 = vadd.f32 0.0, %v2299
        %v2301 = vpop.f32.mrf.mxu0
        %2302 = vmatprep.mubr.f32.mxu0 0.0
        %2303 = vmatmul.mubr.f32.gmra.mxu0 %v2088
        %v2304 = vpop.f32.mrf.mxu0
        %v2305 = vadd.f32 0.0, %v2304
        %v2306 = vpop.f32.mrf.mxu0
        %2307 = vmatprep.mubr.f32.mxu0 0.0
        %2308 = vmatmul.mubr.f32.gmra.mxu0 %v2091
        %v2309 = vpop.f32.mrf.mxu0
        %v2310 = vadd.f32 0.0, %v2309
        %v2311 = vpop.f32.mrf.mxu0
        %2312 = vmatprep.mubr.f32.mxu0 0.0
        %2313 = vmatmul.mubr.f32.gmra.mxu0 %v2094
        %v2314 = vpop.f32.mrf.mxu0
        %v2315 = vadd.f32 0.0, %v2314
        %v2316 = vpop.f32.mrf.mxu0
        %2317 = vmatprep.mubr.f32.mxu0 0.0
        %2318 = vmatmul.mubr.f32.gmra.mxu0 %v2097
        %v2319 = vpop.f32.mrf.mxu0
        %v2320 = vadd.f32 0.0, %v2319
        %v2321 = vpop.f32.mrf.mxu0
        %2322 = vmatprep.mubr.f32.mxu0 0.0
        %2323 = vmatmul.mubr.f32.gmra.mxu0 %v2100
        %v2324 = vpop.f32.mrf.mxu0
        %v2325 = vadd.f32 0.0, %v2324
        %v2326 = vpop.f32.mrf.mxu0
        %2327 = vmatprep.mubr.f32.mxu0 0.0
        %2328 = vmatmul.mubr.f32.gmra.mxu0 %v2103
        %v2329 = vpop.f32.mrf.mxu0
        %v2330 = vadd.f32 0.0, %v2329
        %v2331 = vpop.f32.mrf.mxu0
        %2332 = vdwg.mxu0
        %v2333 = vrcp.pop %v1914
        %v2334 = vrcp.pop %v1917
        %v2335 = vrcp.pop %v1920
        %v2336 = vrcp.pop %v1923
        %v2337 = vrcp.pop %v1926
        %v2338 = vrcp.pop %v1929
        %v2339 = vrcp.pop %v1932
        %v2340 = vrcp.pop %v1935
        %v2341 = vrcp.pop %v1938
        %v2342 = vrcp.pop %v1941
        %v2343 = vrcp.pop %v1944
        %v2344 = vrcp.pop %v1947
        %v2345 = vrcp.pop %v1950
        %v2346 = vrcp.pop %v1953
        %v2347 = vrcp.pop %v1956
        %v2348 = vrcp.pop %v1959
        %v2349 = vrcp.pop %v1962
        %v2350 = vrcp.pop %v1965
        %v2351 = vrcp.pop %v1968
        %v2352 = vrcp.pop %v1971
        %v2353 = vrcp.pop %v1974
        %v2354 = vrcp.pop %v1977
        %v2355 = vrcp.pop %v1980
        %v2356 = vrcp.pop %v1983
        %v2357 = vrcp.pop %v1986
        %v2358 = vrcp.pop %v1989
        %v2359 = vrcp.pop %v1992
        %v2360 = vrcp.pop %v1995
        %v2361 = vrcp.pop %v1998
        %v2362 = vrcp.pop %v2001
        %v2363 = vrcp.pop %v2004
        %v2364 = vrcp.pop %v2007
        %v2365 = vmul.f32 %v2175, %v2333
        %v2366 = vmul.f32 %v2180, %v2334
        %v2367 = vmul.f32 %v2185, %v2335
        %v2368 = vmul.f32 %v2190, %v2336
        %v2369 = vmul.f32 %v2195, %v2337
        %v2370 = vmul.f32 %v2200, %v2338
        %v2371 = vmul.f32 %v2205, %v2339
        %v2372 = vmul.f32 %v2210, %v2340
        %v2373 = vmul.f32 %v2215, %v2341
        %v2374 = vmul.f32 %v2220, %v2342
        %v2375 = vmul.f32 %v2225, %v2343
        %v2376 = vmul.f32 %v2230, %v2344
        %v2377 = vmul.f32 %v2235, %v2345
        %v2378 = vmul.f32 %v2240, %v2346
        %v2379 = vmul.f32 %v2245, %v2347
        %v2380 = vmul.f32 %v2250, %v2348
        %v2381 = vmul.f32 %v2255, %v2349
        %v2382 = vmul.f32 %v2260, %v2350
        %v2383 = vmul.f32 %v2265, %v2351
        %v2384 = vmul.f32 %v2270, %v2352
        %v2385 = vmul.f32 %v2275, %v2353
        %v2386 = vmul.f32 %v2280, %v2354
        %v2387 = vmul.f32 %v2285, %v2355
        %v2388 = vmul.f32 %v2290, %v2356
        %v2389 = vmul.f32 %v2295, %v2357
        %v2390 = vmul.f32 %v2300, %v2358
        %v2391 = vmul.f32 %v2305, %v2359
        %v2392 = vmul.f32 %v2310, %v2360
        %v2393 = vmul.f32 %v2315, %v2361
        %v2394 = vmul.f32 %v2320, %v2362
        %v2395 = vmul.f32 %v2325, %v2363
        %v2396 = vmul.f32 %v2330, %v2364
        %v2397 = vld [vmem:[%s8] sm:$0xff]
        %v2398 = vld [vmem:[%s9] sm:$0xff]
        %2400 = vset.pattern.permute.xlu0 0
        %2401 = vperm.xlu0 %2400, %v2398
        %v2402 = vpop.permute.xlu0 %2401
        %v2405 = vsel %vm1393, %v2397, 0
        %v2408 = vsel %vm1393, %v2365, 0
        %v2411 = vsel %vm1393, %v2366, 0
        %v2414 = vsel %vm1393, %v2367, 0
        %v2417 = vsel %vm1393, %v2368, 0
        %v2420 = vsel %vm1393, %v2369, 0
        %v2423 = vsel %vm1393, %v2370, 0
        %v2426 = vsel %vm1393, %v2371, 0
        %v2429 = vsel %vm1393, %v2372, 0
        %v2432 = vsel %vm1393, %v2373, 0
        %v2435 = vsel %vm1393, %v2374, 0
        %v2438 = vsel %vm1393, %v2375, 0
        %v2441 = vsel %vm1393, %v2376, 0
        %v2444 = vsel %vm1393, %v2377, 0
        %v2447 = vsel %vm1393, %v2378, 0
        %v2450 = vsel %vm1393, %v2379, 0
        %v2453 = vsel %vm1393, %v2380, 0
        %v2456 = vsel %vm1393, %v2381, 0
        %v2459 = vsel %vm1393, %v2382, 0
        %v2462 = vsel %vm1393, %v2383, 0
        %v2465 = vsel %vm1393, %v2384, 0
        %v2468 = vsel %vm1393, %v2385, 0
        %v2471 = vsel %vm1393, %v2386, 0
        %v2474 = vsel %vm1393, %v2387, 0
        %v2477 = vsel %vm1393, %v2388, 0
        %v2480 = vsel %vm1393, %v2389, 0
        %v2483 = vsel %vm1393, %v2390, 0
        %v2486 = vsel %vm1393, %v2391, 0
        %v2489 = vsel %vm1393, %v2392, 0
        %v2492 = vsel %vm1393, %v2393, 0
        %v2495 = vsel %vm1393, %v2394, 0
        %v2498 = vsel %vm1393, %v2395, 0
        %v2501 = vsel %vm1393, %v2396, 0
        %2503 = vmatprep.subr.mxu0 0.0
        %2504 = vmatpush1.xpose.msra.mxu0 %v2453
        %2505 = vmatprep.subr.mxu0 0.0
        %2506 = vmatpush1.xpose.msra.mxu0 %v2450
        %2507 = vmatprep.subr.mxu0 0.0
        %2508 = vmatpush1.xpose.msra.mxu0 %v2447
        %2509 = vmatprep.subr.mxu0 0.0
        %2510 = vmatpush1.xpose.msra.mxu0 %v2444
        %2511 = vmatprep.subr.mxu0 0.0
        %2512 = vmatpush1.xpose.msra.mxu0 %v2441
        %2513 = vmatprep.subr.mxu0 0.0
        %2514 = vmatpush1.xpose.msra.mxu0 %v2438
        %2515 = vmatprep.subr.mxu0 0.0
        %2516 = vmatpush1.xpose.msra.mxu0 %v2435
        %2517 = vmatprep.subr.mxu0 0.0
        %2518 = vmatpush1.xpose.msra.mxu0 %v2432
        %2519 = vmatprep.subr.mxu0 0.0
        %2520 = vmatpush1.xpose.msra.mxu0 %v2429
        %2521 = vmatprep.subr.mxu0 0.0
        %2522 = vmatpush1.xpose.msra.mxu0 %v2426
        %2523 = vmatprep.subr.mxu0 0.0
        %2524 = vmatpush1.xpose.msra.mxu0 %v2423
        %2525 = vmatprep.subr.mxu0 0.0
        %2526 = vmatpush1.xpose.msra.mxu0 %v2420
        %2527 = vmatprep.subr.mxu0 0.0
        %2528 = vmatpush1.xpose.msra.mxu0 %v2417
        %2529 = vmatprep.subr.mxu0 0.0
        %2530 = vmatpush1.xpose.msra.mxu0 %v2414
        %2531 = vmatprep.subr.mxu0 0.0
        %2532 = vmatpush1.xpose.msra.mxu0 %v2411
        %2533 = vmatprep.subr.mxu0 0.0
        %2534 = vmatpush1.xpose.msra.mxu0 %v2408
        %2535 = vmatprep.subr.mxu0 0.0
        %2536 = vmatpush2.xpose.msra.mxu0 %v2501
        %2537 = vmatprep.subr.mxu0 0.0
        %2538 = vmatpush2.xpose.msra.mxu0 %v2498
        %2539 = vmatprep.subr.mxu0 0.0
        %2540 = vmatpush2.xpose.msra.mxu0 %v2495
        %2541 = vmatprep.subr.mxu0 0.0
        %2542 = vmatpush2.xpose.msra.mxu0 %v2492
        %2543 = vmatprep.subr.mxu0 0.0
        %2544 = vmatpush2.xpose.msra.mxu0 %v2489
        %2545 = vmatprep.subr.mxu0 0.0
        %2546 = vmatpush2.xpose.msra.mxu0 %v2486
        %2547 = vmatprep.subr.mxu0 0.0
        %2548 = vmatpush2.xpose.msra.mxu0 %v2483
        %2549 = vmatprep.subr.mxu0 0.0
        %2550 = vmatpush2.xpose.msra.mxu0 %v2480
        %2551 = vmatprep.subr.mxu0 0.0
        %2552 = vmatpush2.xpose.msra.mxu0 %v2477
        %2553 = vmatprep.subr.mxu0 0.0
        %2554 = vmatpush2.xpose.msra.mxu0 %v2474
        %2555 = vmatprep.subr.mxu0 0.0
        %2556 = vmatpush2.xpose.msra.mxu0 %v2471
        %2557 = vmatprep.subr.mxu0 0.0
        %2558 = vmatpush2.xpose.msra.mxu0 %v2468
        %2559 = vmatprep.subr.mxu0 0.0
        %2560 = vmatpush2.xpose.msra.mxu0 %v2465
        %2561 = vmatprep.subr.mxu0 0.0
        %2562 = vmatpush2.xpose.msra.mxu0 %v2462
        %2563 = vmatprep.subr.mxu0 0.0
        %2564 = vmatpush2.xpose.msra.mxu0 %v2459
        %2565 = vmatprep.subr.mxu0 0.0
        %2566 = vmatpush2.xpose.msra.mxu0 %v2456
        %2567 = vmatprep.mubr.f32.mxu0 0.0
        %2568 = vmatmul.mubr.f32.gmra.mxu0 %v2405
        %v2569 = vpop.f32.mrf.mxu0
        %v2570 = vadd.f32 %v2402, %v2569
        %v2571 = vpop.f32.mrf.mxu0
        %v2572 = vadd.f32 %v2402, %v2571
        %2573 = vdwg.mxu0
        %v2574 = vadd.f32 %v2570, %v1244
        %v2575 = vadd.f32 %v2572, %v1245
        %2576 = vst [vmem:[%s449] sm:$0xff] %v2574
        %2577 = vst [vmem:[%s449 + $0x8] sm:$0xff] %v2575
        %s2578 = scalar_lea.vmem [#allocation3], %s1240
        %v2579 = vld [vmem:[%s2578] sm:$0x3]
        %v2581 = vlaneseq
        %v2582 = vshrl.u32 %v2581, 7
        %v2583 = vsub.s32 0, %v2582
        %v2584 = vrot.slane %v2579, %v2583
        %v2585 = vlaneseq
        %v2586 = vshrl.u32 %v2585, 7
        %v2587 = vsub.s32 1, %v2586
        %v2588 = vrot.slane %v2579, %v2587
        %v2591 = vmul.f32 %v1244, %v2584
        %v2592 = vmul.f32 %v1245, %v2588
        %2593 = vst [vmem:[%s459] sm:$0xff] %v2591
        %2594 = vst [vmem:[%s459 + $0x8] sm:$0xff] %v2592
        %s2595 = smul.u32 2, %s30
        %p2596 = scmp.lt.s32.totalorder %s29, 1
        %s2597 = scalar_select %p2596, %s29, 1
        %p2598 = scmp.lt.s32.totalorder %s2595, 1
        %s2599 = scalar_select %p2598, %s2595, 1
        %s2600 = smul.addr %s2597, 2
        %s2601 = sadd.s32 %s2599, %s2600
        %s2602 = smul.addr %s2601, 8
        %s2603 = scalar_lea.vmem %s10, %s2602
        %s2604 = smul.u32 2, %s30
        %p2605 = scmp.lt.s32.totalorder %s29, 1
        %s2606 = scalar_select %p2605, %s29, 1
        %p2607 = scmp.lt.s32.totalorder %s2604, 1
        %s2608 = scalar_select %p2607, %s2604, 1
        %s2609 = smul.addr %s2606, 2
        %s2610 = sadd.s32 %s2608, %s2609
        %s2611 = smul.addr %s2610, 8
        %s2612 = scalar_lea.vmem %s11, %s2611
        // Predicated region
        $region73: #{_lambda_.1} parent=59 // pred_check
          %p2613 = pneg %p272
        $region74: #{_lambda_.1} parent=59 // pred_check_branch
          %2615 = sbr.rel (%p2613) target = $region76
        $region75: #{_lambda_.1} parent=59 // pred_region
          %s2616 = smul.u32 2, %s30
        $region76: #{_lambda_.1} parent=59 // pred_fallthru
          _
        // Predicated region
        $region77: #{_lambda_.1} parent=59 // pred_check
          %p2617 = pneg %p300
        $region78: #{_lambda_.1} parent=59 // pred_check_branch
          %2619 = sbr.rel (%p2617) target = $region80
        $region79: #{_lambda_.1} parent=59 // pred_region
          %s2620 = smul.u32 2, %s30
        $region80: #{_lambda_.1} parent=59 // pred_fallthru
          _
      $region60: #{_lambda_.1} parent=5 // pred_fallthru
        _
      %p2621 = scmp.le.s32.totalorder 2, %s20
      // Predicated region
      $region81: #{_lambda_.1} parent=5 // pred_check
        %p2622 = pneg %p2621
      $region82: #{_lambda_.1} parent=5 // pred_check_branch
        %2624 = sbr.rel (%p2622) target = $region84
      $region83: #{_lambda_.1} parent=5 // pred_region
        %s2625 = ssub.s32 %s20, 2
        // Predicated region
        $region85: #{_lambda_.1} parent=83 // pred_check
          %p2626 = pneg %p278
        $region86: #{_lambda_.1} parent=83 // pred_check_branch
          %2628 = sbr.rel (%p2626) target = $region88
        $region87: #{_lambda_.1} parent=83 // pred_region
          %s2629 = smul.u32 2, %s32
          %p2630 = scmp.lt.s32.totalorder %s31, 1
          %s2631 = scalar_select %p2630, %s31, 1
          %p2632 = scmp.lt.s32.totalorder %s2629, 1
          %s2633 = scalar_select %p2632, %s2629, 1
          %s2634 = smul.addr %s2631, 2
          %s2635 = sadd.s32 %s2633, %s2634
          %s2636 = smul.addr %s2635, 8
          %s2637 = scalar_lea.vmem %s10, %s2636
        $region88: #{_lambda_.1} parent=83 // pred_fallthru
          _
        // Predicated region
        $region89: #{_lambda_.1} parent=83 // pred_check
          %p2638 = pneg %p306
        $region90: #{_lambda_.1} parent=83 // pred_check_branch
          %2640 = sbr.rel (%p2638) target = $region92
        $region91: #{_lambda_.1} parent=83 // pred_region
          %s2641 = smul.u32 2, %s32
          %p2642 = scmp.lt.s32.totalorder %s31, 1
          %s2643 = scalar_select %p2642, %s31, 1
          %p2644 = scmp.lt.s32.totalorder %s2641, 1
          %s2645 = scalar_select %p2644, %s2641, 1
          %s2646 = smul.addr %s2643, 2
          %s2647 = sadd.s32 %s2645, %s2646
          %s2648 = smul.addr %s2647, 8
          %s2649 = scalar_lea.vmem %s11, %s2648
        $region92: #{_lambda_.1} parent=83 // pred_fallthru
          _
      $region84: #{_lambda_.1} parent=5 // pred_fallthru
        _
    $region6: #{_lambda_.1} parent=1 // loop_footer
      %s24 = sadd.s32 1, %s20
    $region7: #{_lambda_.1} parent=1 // loop_footer_branch
      %19 = sbr.rel target = $region3
    $region8: #{_lambda_.1} parent=1 // loop_exit
      _
    %2650 = vsyncpa [#allocation7], 1
    %s2651 = scalar_lea.sflag [#allocation7], 1
    %2652 = vsyncpa %s2651, 1
    %2653 = vsyncpa [#allocation9], 1

</llo_original>
